<compile_context>
chip_gen: v7x
topology: tpu7x:2x2x1
jax: 0.10.0
libtpu: 0.0.40
codegen_flags: <defaults>
</compile_context>

<pallas_src>
import math

import jax
import jax.numpy as jnp
from jax.experimental import pallas as pl
from jax.experimental.pallas import tpu as pltpu

ENCODER_LAYERS = [64, 80, 32]
NUM_QUAN_BITS = 3
ROW_ALIGN = 16  # bf16 sublane packing -> keep row tiles in multiples of 16


# ----------------------------------------------------------------------------
# Static shape arithmetic — exact replica of SplitLayers.__init__ logic.
# ----------------------------------------------------------------------------
def split_layer_dims(inchannel, outchannel, num=4):
    ratio = [num - i for i in range(num)]
    ratio = [v / sum(ratio) for v in ratio]
    out_list = [int(outchannel * v) for v in ratio]
    out_list[-1] = outchannel - sum(out_list[:-1])
    standart_len = max(inchannel, outchannel)
    dims = []  # (temp_in, temp_out) per layer
    last_layer = inchannel
    for i in range(num):
        temp_in = last_layer
        temp_out = out_list[i] + int(standart_len * sum(ratio[i + 1:]))
        last_layer = int(standart_len * sum(ratio[i + 1:]))
        dims.append((temp_in, temp_out))
    return dims, out_list


def min_encoder_plan(feedback_bits, channel=2):
    widths = [32] + [l * feedback_bits for l in ENCODER_LAYERS]
    blocks = []
    for i in range(3):
        dims, out_list = split_layer_dims(widths[i], widths[i + 1], num=4)
        blocks.append({"dims": dims, "out_list": out_list,
                       "in": widths[i], "out": widths[i + 1]})
    return {"blocks": blocks, "channel": channel,
            "feedback_bits": feedback_bits, "final_in": widths[-1]}


# ----------------------------------------------------------------------------
# Deterministic synthetic parameters (nn.Linear-style init, BN eval params).
# ----------------------------------------------------------------------------
def init_params(key, plan, dtype=jnp.float32):
    def linear(k, fan_in, fan_out):
        kw, kb = jax.random.split(k)
        bound = 1.0 / math.sqrt(fan_in)
        w = jax.random.uniform(kw, (fan_in, fan_out), dtype, -bound, bound)
        b = jax.random.uniform(kb, (1, fan_out), dtype, -bound, bound)
        return w, b

    C = plan["channel"]
    params = {"blocks": [], "bn": []}
    for blk in plan["blocks"]:
        layers = []
        for (fi, fo) in blk["dims"]:
            key, sub = jax.random.split(key)
            layers.append(linear(sub, fi, fo))
        params["blocks"].append(layers)
        key, k1, k2, k3, k4 = jax.random.split(key, 5)
        # TODO(synk): BatchNorm1d is implemented in eval/inference mode (running
        # stats); training-mode batch statistics need a whole-batch reduction.
        params["bn"].append({
            "gamma": jax.random.uniform(k1, (C,), dtype, 0.5, 1.5),
            "beta": jax.random.normal(k2, (C,), dtype) * 0.1,
            "mean": jax.random.normal(k3, (C,), dtype) * 0.1,
            "var": jax.random.uniform(k4, (C,), dtype, 0.5, 1.5),
            "eps": 1e-5,
        })
    key, sub = jax.random.split(key)
    params["final"] = linear(sub, plan["final_in"], plan["feedback_bits"])
    return params


# ----------------------------------------------------------------------------
# Activation helpers
# ----------------------------------------------------------------------------
def _mish_fast(x):
    """mish(x) = x*tanh(softplus(x)) = x*u(u+2)/(u(u+2)+2) with u=exp(x).

    Single EUP exp + one approx EUP reciprocal (instead of exp + log + tanh);
    large-x guard keeps the result exact where the rational form saturates.
    f32 only (pl.reciprocal's TPU lowering requires f32).
    """
    u = jnp.exp(jnp.minimum(x, 20.0))
    n = u * (u + 2.0)
    t = n * pl.reciprocal(n + 2.0, approx=True)
    return jnp.where(x > 20.0, x, x * t)


def _mish_exact(x):
    # reference-only: numerically-stable softplus, then x*tanh(softplus(x))
    sp = jnp.maximum(x, 0.0) + jnp.log1p(jnp.exp(-jnp.abs(x)))
    return x * jnp.tanh(sp)


# ----------------------------------------------------------------------------
# Pallas kernel: full fc chain + sigmoid for one row tile.
# ----------------------------------------------------------------------------
def make_min_encoder_kernel(plan):
    n_blocks = len(plan["blocks"])

    def kernel(*refs):
        out_ref = refs[-1]
        it = iter(refs[:-1])
        nxt = lambda: next(it)

        x_ref = nxt()                                   # bf16 (tile, 32)
        bn_refs = [(nxt(), nxt()) for _ in range(n_blocks)]

        def linear_from_pieces(pieces):
            # consumes len(pieces) weight refs + 1 bias ref; bf16 x bf16 -> f32 MXU acc
            w_refs = [nxt() for _ in pieces]
            b_ref = nxt()
            acc = None
            for p, w_ref in zip(pieces, w_refs):
                d = jnp.dot(p, w_ref[...], preferred_element_type=jnp.float32)
                acc = d if acc is None else acc + d
            return acc + b_ref[...]                     # bias is f32 (1, fo)

        pieces = [x_ref[...]]                           # network input, bf16
        for b, blk in enumerate(plan["blocks"]):
            prefixes = []
            h = None
            for li, k in enumerate(blk["out_list"]):
                if li == 0:
                    pre = linear_from_pieces(pieces)    # row-split weights
                else:
                    pre = linear_from_pieces([h])       # zero-row-padded weight
                m = _mish_fast(pre)                     # in-block Mish (f32)
                prefixes.append(m[:, :k])               # prefix piece (f32)
                h = m.astype(jnp.bfloat16)              # next in-block layer LHS
            # outer Mish + eval-mode BatchNorm folded to a per-row affine,
            # applied only on the prefix pieces that feed the next Linear.
            scale = bn_refs[b][0][...]                  # (tile, 1) f32
            shift = bn_refs[b][1][...]                  # (tile, 1) f32
            pieces = [(scale * _mish_fast(p) + shift).astype(jnp.bfloat16)
                      for p in prefixes]

        pre = linear_from_pieces(pieces)                # final Linear (f32)
        # sigmoid = 1/(1+exp(-x)): one EUP exp + one approx EUP reciprocal
        z = jnp.exp(jnp.minimum(-pre, 30.0))
        out_ref[...] = pl.reciprocal(1.0 + z, approx=True).astype(out_ref.dtype)

        leftover = list(it)                             # trace-time sanity check
        assert not leftover, f"unused refs: {len(leftover)}"

    return kernel


# ----------------------------------------------------------------------------
# Parameter packing: zero-row padding, row-splitting, bf16 cast, BlockSpecs.
# All parameters use constant index maps -> fetched once, not per grid step.
# ----------------------------------------------------------------------------
def pack_kernel_inputs(params, plan, tile, w_dtype=jnp.bfloat16):
    C = plan["channel"]
    assert tile % C == 0  # guarantees the per-tile channel pattern is identical
    ch = jnp.arange(tile) % C

    flat, specs = [], []
    weight_elems = 0

    def add_const(arr):
        flat.append(arr)
        specs.append(pl.BlockSpec(arr.shape, lambda i: (0, 0)))

    # eval-mode BatchNorm1d(channel) folded to a per-row affine, built once per
    # tile (constant block) instead of streamed over rows_padded every step.
    for bn in params["bn"]:
        sc = bn["gamma"] / jnp.sqrt(bn["var"] + bn["eps"])
        sh = bn["beta"] - bn["mean"] * sc
        add_const(sc[ch][:, None].astype(jnp.float32))
        add_const(sh[ch][:, None].astype(jnp.float32))

    # NOTE: weight out-dims are left un-padded to 128 lanes (volumes are small);
    # padding them is a possible micro-opt but not worth the extra zeros here.
    prev_split = None  # out_list of the previous block (row-split of incoming weight)
    for blk_params, blk in zip(params["blocks"], plan["blocks"]):
        for li, (w, b) in enumerate(blk_params):
            if li == 0:
                if prev_split is None:
                    add_const(w.astype(w_dtype))
                    weight_elems += int(w.size)
                else:
                    off = 0
                    for k in prev_split:
                        add_const(w[off:off + k, :].astype(w_dtype))
                        weight_elems += k * int(w.shape[1])
                        off += k
            else:
                # fold the SplitLayers suffix slice into the weight: prepend
                # out_list[li-1] zero rows so the kernel feeds the full h.
                k_prev = blk["out_list"][li - 1]
                wpad = jnp.concatenate(
                    [jnp.zeros((k_prev, w.shape[1]), w.dtype), w], axis=0)
                add_const(wpad.astype(w_dtype))
                weight_elems += int(wpad.size)
            add_const(b.astype(jnp.float32))
        prev_split = blk["out_list"]

    wf, bf = params["final"]
    off = 0
    for k in prev_split:
        add_const(wf[off:off + k, :].astype(w_dtype))
        weight_elems += k * int(wf.shape[1])
        off += k
    add_const(bf.astype(jnp.float32))
    return flat, specs, weight_elems


def _round_up(a, m):
    return ((a + m - 1) // m) * m


def _lcm(a, b):
    return a * b // math.gcd(a, b)


def _vmem_budget():
    """(smallest per-generation default scoped limit, usable physical budget)."""
    cap = None
    try:
        cap = int(pltpu.get_tpu_info().vmem_capacity_bytes)
    except Exception:
        cap = None
    if not cap or cap <= 0:
        cap = 64 * 1024 * 1024            # conservative: v7x per-TensorCore VMEM
    default_scoped = 16 * 1024 * 1024     # v5e default (v6e/v7x default is 32 MiB)
    usable = max(cap - 12 * 1024 * 1024, cap // 2)  # headroom for Mosaic scratch
    return default_scoped, usable


# ----------------------------------------------------------------------------
# Wrapper: MinEncoder.forward(x, quant=True)
# ----------------------------------------------------------------------------
def min_encoder_forward(x, params, plan, *, quant=True, batch_tile=512):
    C = plan["channel"]
    fb = plan["feedback_bits"]
    B = x.shape[0]
    # Every matmul consumes the LHS in bf16, so stream x as bf16 (halves its DMA).
    x2d = x.reshape(-1, C, 32).reshape(-1, 32).astype(jnp.bfloat16)   # (B*C, 32)
    rows = x2d.shape[0]

    # Row alignment keeps bf16 sublane packing (16) AND tile % C == 0 so the
    # BN scale/shift pattern is identical in every tile (constant block).
    align = _lcm(ROW_ALIGN, C)
    batch_tile = _round_up(max(batch_tile, align), align)
    rows_a = _round_up(rows, align)

    # Tile selection: one step for small batches; otherwise >= 4 even, balanced
    # steps (both v7x TensorCores get >= 2 pipelined steps; no pad-to-2*tile).
    if rows_a <= batch_tile:
        tile = rows_a
    else:
        n_steps = max(4, pl.cdiv(rows_a, batch_tile))
        if n_steps % 2:
            n_steps += 1
        tile = _round_up(pl.cdiv(rows_a, n_steps), align)

    default_scoped, usable = _vmem_budget()
    max_width = max(to for blk in plan["blocks"] for (_, to) in blk["dims"])

    def vmem_estimate(t, p_bytes):
        return (2 * (t * 32 * 2 + t * fb * 4)   # x (bf16) / out (f32) double buffers
                + 2 * p_bytes                   # parameter buffers
                + 8 * t * max_width * 4)        # live f32/bf16 intermediates

    # Shrink the tile if the estimate blows the physical budget (bigger fb).
    while True:
        flat, p_specs, weight_elems = pack_kernel_inputs(params, plan, tile)
        param_bytes = sum(int(a.size) * a.dtype.itemsize for a in flat)
        vmem_est = vmem_estimate(tile, param_bytes)
        if vmem_est <= usable or tile <= align:
            break
        tile = max(align, _round_up(tile // 2, align))
    # TODO(synk): for very large feedback_bits the resident weights alone exceed
    # the VMEM budget; that regime needs K/N-tiled weights (reduction grid axis
    # + f32 VMEM accumulator) instead of whole-weight constant blocks.

    rows_padded = _round_up(rows_a, tile)
    x_pad = jnp.pad(x2d, ((0, rows_padded - rows), (0, 0)))

    in_specs = [pl.BlockSpec((tile, 32), lambda i: (i, 0))] + p_specs
    out_spec = pl.BlockSpec((tile, fb), lambda i: (i, 0))
    grid = (rows_padded // tile,)

    # --- cost estimate (advisory): helps XLA schedule around the custom call ---
    act_elems = sum(to for blk in plan["blocks"] for (_, to) in blk["dims"])
    piece_elems = sum(k for blk in plan["blocks"] for k in blk["out_list"])
    cost = pl.CostEstimate(
        flops=int(2 * rows_padded * weight_elems),
        transcendentals=int(rows_padded * (2 * (act_elems + piece_elems) + 2 * fb)),
        bytes_accessed=int(x_pad.size * x_pad.dtype.itemsize
                           + rows_padded * fb * 4 + param_bytes),
    )

    cp_kwargs = {"dimension_semantics": ("parallel",)}
    if vmem_est > default_scoped:
        # raise the scoped limit (with margin for estimate error, and never below
        # the largest per-generation default), but stay clear of the physical cap.
        cp_kwargs["vmem_limit_bytes"] = int(
            min(usable, max(2 * vmem_est, 32 * 1024 * 1024)))

    sig = pl.pallas_call(
        make_min_encoder_kernel(plan),
        out_shape=jax.ShapeDtypeStruct((rows_padded, fb), jnp.float32),
        grid=grid,
        in_specs=in_specs,
        out_specs=out_spec,
        compiler_params=pltpu.CompilerParams(**cp_kwargs),
        cost_estimate=cost,
    )(x_pad, *flat)

    sig = sig[:rows].reshape(B, C * fb)      # == self.sig(out).view(B, -1)
    if not quant:
        return sig

    # QuantizationLayer(3): q = round(sig*8 - 0.5); Num2Bit keeps the low 3 bits
    # of the uint8 code, MSB first.  The `% 2` below reproduces that exactly
    # (including the sig==1.0 -> q=8 -> bits 000 wrap of the original module).
    # TODO(synk): the per-value bit interleave of Num2Bit has no clean
    # lane-level Pallas equivalent; done with plain jnp in the wrapper.
    step = 2 ** NUM_QUAN_BITS
    q = jnp.round(sig * step - 0.5).astype(jnp.int32)
    pow2 = 2 ** jnp.arange(NUM_QUAN_BITS - 1, -1, -1, dtype=jnp.int32)
    bits = (q[:, :, None] // pow2) % 2
    return bits.reshape(B, -1).astype(jnp.float32)


# ----------------------------------------------------------------------------
# Pure-JAX reference (mirror of the PyTorch forward, pre-quantization), using
# exact Mish/sigmoid in f32 and the same bf16-operand matmul convention.
# ----------------------------------------------------------------------------
def reference_forward(x, params, plan):
    C = plan["channel"]
    B = x.shape[0]
    h = x.reshape(-1, C, 32).reshape(-1, 32).astype(jnp.float32)
    ch = jnp.arange(h.shape[0]) % C

    def dot(a, w):
        return jnp.dot(a.astype(jnp.bfloat16), w.astype(jnp.bfloat16),
                       preferred_element_type=jnp.float32)

    for blk_params, blk, bn in zip(params["blocks"], plan["blocks"], params["bn"]):
        outs = []
        t = h
        for (w, b), k in zip(blk_params, blk["out_list"]):
            t = _mish_exact(dot(t, w) + b)
            outs.append(t[:, :k])
            t = t[:, k:]
        h = _mish_exact(jnp.concatenate(outs, axis=-1))
        sc = (bn["gamma"] / jnp.sqrt(bn["var"] + bn["eps"]))[ch][:, None]
        sh = (bn["beta"] - bn["mean"] * bn["gamma"]
              / jnp.sqrt(bn["var"] + bn["eps"]))[ch][:, None]
        h = sc * h + sh
    wf, bf = params["final"]
    h = dot(h, wf) + bf
    return (1.0 / (1.0 + jnp.exp(-h))).reshape(B, -1)


if __name__ == "__main__":
    feedback_bits = 4
    channel = 2
    batch = 4

    plan = min_encoder_plan(feedback_bits, channel)
    key = jax.random.PRNGKey(0)
    key, kx = jax.random.split(key)
    x = jax.random.normal(kx, (batch, channel * 32), jnp.float32)
    params = init_params(key, plan)

    sig = min_encoder_forward(x, params, plan, quant=False)
    bits = min_encoder_forward(x, params, plan, quant=True)
    sig, bits = jax.block_until_ready((sig, bits))

    ref_sig = reference_forward(x, params, plan)

    assert sig.shape == (batch, channel * feedback_bits), sig.shape
    assert bits.shape == (batch, channel * feedback_bits * NUM_QUAN_BITS), bits.shape
    assert bool(jnp.all((bits == 0.0) | (bits == 1.0)))
    assert bool(jnp.allclose(sig, ref_sig, atol=5e-2, rtol=5e-2)), \
        float(jnp.max(jnp.abs(sig - ref_sig)))

    print("KERNEL_OK")
</pallas_src>

<mosaic_0001>
module attributes {stable_mosaic.version = 11 : i64} {
  func.func @kernel(%arg0: i32, %arg1: memref<16x32xbf16, #tpu.memory_space<vmem>>, %arg2: memref<16x1xf32, #tpu.memory_space<vmem>>, %arg3: memref<16x1xf32, #tpu.memory_space<vmem>>, %arg4: memref<16x1xf32, #tpu.memory_space<vmem>>, %arg5: memref<16x1xf32, #tpu.memory_space<vmem>>, %arg6: memref<16x1xf32, #tpu.memory_space<vmem>>, %arg7: memref<16x1xf32, #tpu.memory_space<vmem>>, %arg8: memref<32x255xbf16, #tpu.memory_space<vmem>>, %arg9: memref<1x255xf32, #tpu.memory_space<vmem>>, %arg10: memref<255x152xbf16, #tpu.memory_space<vmem>>, %arg11: memref<1x152xf32, #tpu.memory_space<vmem>>, %arg12: memref<152x76xbf16, #tpu.memory_space<vmem>>, %arg13: memref<1x76xf32, #tpu.memory_space<vmem>>, %arg14: memref<76x27xbf16, #tpu.memory_space<vmem>>, %arg15: memref<1x27xf32, #tpu.memory_space<vmem>>, %arg16: memref<102x320xbf16, #tpu.memory_space<vmem>>, %arg17: memref<76x320xbf16, #tpu.memory_space<vmem>>, %arg18: memref<51x320xbf16, #tpu.memory_space<vmem>>, %arg19: memref<27x320xbf16, #tpu.memory_space<vmem>>, %arg20: memref<1x320xf32, #tpu.memory_space<vmem>>, %arg21: memref<320x192xbf16, #tpu.memory_space<vmem>>, %arg22: memref<1x192xf32, #tpu.memory_space<vmem>>, %arg23: memref<192x96xbf16, #tpu.memory_space<vmem>>, %arg24: memref<1x96xf32, #tpu.memory_space<vmem>>, %arg25: memref<96x32xbf16, #tpu.memory_space<vmem>>, %arg26: memref<1x32xf32, #tpu.memory_space<vmem>>, %arg27: memref<128x243xbf16, #tpu.memory_space<vmem>>, %arg28: memref<96x243xbf16, #tpu.memory_space<vmem>>, %arg29: memref<64x243xbf16, #tpu.memory_space<vmem>>, %arg30: memref<32x243xbf16, #tpu.memory_space<vmem>>, %arg31: memref<1x243xf32, #tpu.memory_space<vmem>>, %arg32: memref<243x134xbf16, #tpu.memory_space<vmem>>, %arg33: memref<1x134xf32, #tpu.memory_space<vmem>>, %arg34: memref<134x57xbf16, #tpu.memory_space<vmem>>, %arg35: memref<1x57xf32, #tpu.memory_space<vmem>>, %arg36: memref<57x14xbf16, #tpu.memory_space<vmem>>, %arg37: memref<1x14xf32, #tpu.memory_space<vmem>>, %arg38: memref<51x4xbf16, #tpu.memory_space<vmem>>, %arg39: memref<38x4xbf16, #tpu.memory_space<vmem>>, %arg40: memref<25x4xbf16, #tpu.memory_space<vmem>>, %arg41: memref<14x4xbf16, #tpu.memory_space<vmem>>, %arg42: memref<1x4xf32, #tpu.memory_space<vmem>>, %arg43: memref<16x4xf32, #tpu.memory_space<vmem>>) attributes {dimension_semantics = [#tpu.dimension_semantics<parallel>], iteration_bounds = array<i64: 1>, scalar_prefetch = 0 : i64, scratch_operands = 0 : i64, tpu.core_type = #tpu.core_type<tc>, window_params = [{transform_indices = @transform_0, window_bounds = array<i64: 16, 32>}, {pipeline_mode = #tpu.pipeline_mode<synchronous>, transform_indices = @transform_1, window_bounds = array<i64: 16, 1>}, {pipeline_mode = #tpu.pipeline_mode<synchronous>, transform_indices = @transform_2, window_bounds = array<i64: 16, 1>}, {pipeline_mode = #tpu.pipeline_mode<synchronous>, transform_indices = @transform_3, window_bounds = array<i64: 16, 1>}, {pipeline_mode = #tpu.pipeline_mode<synchronous>, transform_indices = @transform_4, window_bounds = array<i64: 16, 1>}, {pipeline_mode = #tpu.pipeline_mode<synchronous>, transform_indices = @transform_5, window_bounds = array<i64: 16, 1>}, {pipeline_mode = #tpu.pipeline_mode<synchronous>, transform_indices = @transform_6, window_bounds = array<i64: 16, 1>}, {pipeline_mode = #tpu.pipeline_mode<synchronous>, transform_indices = @transform_7, window_bounds = array<i64: 32, 255>}, {pipeline_mode = #tpu.pipeline_mode<synchronous>, transform_indices = @transform_8, window_bounds = array<i64: 1, 255>}, {pipeline_mode = #tpu.pipeline_mode<synchronous>, transform_indices = @transform_9, window_bounds = array<i64: 255, 152>}, {pipeline_mode = #tpu.pipeline_mode<synchronous>, transform_indices = @transform_10, window_bounds = array<i64: 1, 152>}, {pipeline_mode = #tpu.pipeline_mode<synchronous>, transform_indices = @transform_11, window_bounds = array<i64: 152, 76>}, {pipeline_mode = #tpu.pipeline_mode<synchronous>, transform_indices = @transform_12, window_bounds = array<i64: 1, 76>}, {pipeline_mode = #tpu.pipeline_mode<synchronous>, transform_indices = @transform_13, window_bounds = array<i64: 76, 27>}, {pipeline_mode = #tpu.pipeline_mode<synchronous>, transform_indices = @transform_14, window_bounds = array<i64: 1, 27>}, {pipeline_mode = #tpu.pipeline_mode<synchronous>, transform_indices = @transform_15, window_bounds = array<i64: 102, 320>}, {pipeline_mode = #tpu.pipeline_mode<synchronous>, transform_indices = @transform_16, window_bounds = array<i64: 76, 320>}, {pipeline_mode = #tpu.pipeline_mode<synchronous>, transform_indices = @transform_17, window_bounds = array<i64: 51, 320>}, {pipeline_mode = #tpu.pipeline_mode<synchronous>, transform_indices = @transform_18, window_bounds = array<i64: 27, 320>}, {pipeline_mode = #tpu.pipeline_mode<synchronous>, transform_indices = @transform_19, window_bounds = array<i64: 1, 320>}, {pipeline_mode = #tpu.pipeline_mode<synchronous>, transform_indices = @transform_20, window_bounds = array<i64: 320, 192>}, {pipeline_mode = #tpu.pipeline_mode<synchronous>, transform_indices = @transform_21, window_bounds = array<i64: 1, 192>}, {pipeline_mode = #tpu.pipeline_mode<synchronous>, transform_indices = @transform_22, window_bounds = array<i64: 192, 96>}, {pipeline_mode = #tpu.pipeline_mode<synchronous>, transform_indices = @transform_23, window_bounds = array<i64: 1, 96>}, {pipeline_mode = #tpu.pipeline_mode<synchronous>, transform_indices = @transform_24, window_bounds = array<i64: 96, 32>}, {pipeline_mode = #tpu.pipeline_mode<synchronous>, transform_indices = @transform_25, window_bounds = array<i64: 1, 32>}, {pipeline_mode = #tpu.pipeline_mode<synchronous>, transform_indices = @transform_26, window_bounds = array<i64: 128, 243>}, {pipeline_mode = #tpu.pipeline_mode<synchronous>, transform_indices = @transform_27, window_bounds = array<i64: 96, 243>}, {pipeline_mode = #tpu.pipeline_mode<synchronous>, transform_indices = @transform_28, window_bounds = array<i64: 64, 243>}, {pipeline_mode = #tpu.pipeline_mode<synchronous>, transform_indices = @transform_29, window_bounds = array<i64: 32, 243>}, {pipeline_mode = #tpu.pipeline_mode<synchronous>, transform_indices = @transform_30, window_bounds = array<i64: 1, 243>}, {pipeline_mode = #tpu.pipeline_mode<synchronous>, transform_indices = @transform_31, window_bounds = array<i64: 243, 134>}, {pipeline_mode = #tpu.pipeline_mode<synchronous>, transform_indices = @transform_32, window_bounds = array<i64: 1, 134>}, {pipeline_mode = #tpu.pipeline_mode<synchronous>, transform_indices = @transform_33, window_bounds = array<i64: 134, 57>}, {pipeline_mode = #tpu.pipeline_mode<synchronous>, transform_indices = @transform_34, window_bounds = array<i64: 1, 57>}, {pipeline_mode = #tpu.pipeline_mode<synchronous>, transform_indices = @transform_35, window_bounds = array<i64: 57, 14>}, {pipeline_mode = #tpu.pipeline_mode<synchronous>, transform_indices = @transform_36, window_bounds = array<i64: 1, 14>}, {pipeline_mode = #tpu.pipeline_mode<synchronous>, transform_indices = @transform_37, window_bounds = array<i64: 51, 4>}, {pipeline_mode = #tpu.pipeline_mode<synchronous>, transform_indices = @transform_38, window_bounds = array<i64: 38, 4>}, {pipeline_mode = #tpu.pipeline_mode<synchronous>, transform_indices = @transform_39, window_bounds = array<i64: 25, 4>}, {pipeline_mode = #tpu.pipeline_mode<synchronous>, transform_indices = @transform_40, window_bounds = array<i64: 14, 4>}, {pipeline_mode = #tpu.pipeline_mode<synchronous>, transform_indices = @transform_41, window_bounds = array<i64: 1, 4>}, {transform_indices = @transform_42, window_bounds = array<i64: 16, 4>}]} {
    %c0 = arith.constant 0 : index
    %c0_0 = arith.constant 0 : index
    %0 = vector.load %arg1[%c0, %c0_0] : memref<16x32xbf16, #tpu.memory_space<vmem>>, vector<16x32xbf16>
    %c0_1 = arith.constant 0 : index
    %c0_2 = arith.constant 0 : index
    %1 = vector.load %arg8[%c0_1, %c0_2] : memref<32x255xbf16, #tpu.memory_space<vmem>>, vector<32x255xbf16>
    %cst = arith.constant dense<0.000000e+00> : vector<16x255xf32>
    %2 = tpu.matmul %0, %1, %cst {dimension_numbers = #tpu.dot_dimension_numbers<[1], [0], [0], [1], [0, 0, 1, 1], [], []>} : vector<16x32xbf16>, vector<32x255xbf16>, vector<16x255xf32> -> vector<16x255xf32>
    %c0_3 = arith.constant 0 : index
    %c0_4 = arith.constant 0 : index
    %3 = vector.load %arg9[%c0_3, %c0_4] : memref<1x255xf32, #tpu.memory_space<vmem>>, vector<1x255xf32>
    %4 = vector.broadcast %3 : vector<1x255xf32> to vector<16x255xf32>
    %5 = arith.addf %2, %4 : vector<16x255xf32>
    %cst_5 = arith.constant 2.000000e+01 : f32
    %6 = vector.broadcast %cst_5 : f32 to vector<16x255xf32>
    %7 = arith.minimumf %5, %6 : vector<16x255xf32>
    %8 = math.exp %7 : vector<16x255xf32>
    %cst_6 = arith.constant 2.000000e+00 : f32
    %9 = vector.broadcast %cst_6 : f32 to vector<16x255xf32>
    %10 = arith.addf %8, %9 : vector<16x255xf32>
    %11 = arith.mulf %8, %10 : vector<16x255xf32>
    %cst_7 = arith.constant 2.000000e+00 : f32
    %12 = vector.broadcast %cst_7 : f32 to vector<16x255xf32>
    %13 = arith.addf %11, %12 : vector<16x255xf32>
    %14 = tpu.reciprocal %13 {approx = true} : vector<16x255xf32> -> vector<16x255xf32>
    %15 = arith.mulf %11, %14 : vector<16x255xf32>
    %cst_8 = arith.constant 2.000000e+01 : f32
    %16 = vector.broadcast %cst_8 : f32 to vector<16x255xf32>
    %17 = arith.cmpf ogt, %5, %16 : vector<16x255xf32>
    %18 = arith.mulf %5, %15 : vector<16x255xf32>
    %19 = arith.select %17, %5, %18 : vector<16x255xi1>, vector<16x255xf32>
    %20 = vector.extract_strided_slice %19 {offsets = [0, 0], sizes = [16, 102], strides = [1, 1]} : vector<16x255xf32> to vector<16x102xf32>
    %21 = arith.truncf %19 : vector<16x255xf32> to vector<16x255xbf16>
    %c0_9 = arith.constant 0 : index
    %c0_10 = arith.constant 0 : index
    %22 = vector.load %arg10[%c0_9, %c0_10] : memref<255x152xbf16, #tpu.memory_space<vmem>>, vector<255x152xbf16>
    %cst_11 = arith.constant dense<0.000000e+00> : vector<16x152xf32>
    %23 = tpu.matmul %21, %22, %cst_11 {dimension_numbers = #tpu.dot_dimension_numbers<[1], [0], [0], [1], [0, 0, 1, 1], [], []>} : vector<16x255xbf16>, vector<255x152xbf16>, vector<16x152xf32> -> vector<16x152xf32>
    %c0_12 = arith.constant 0 : index
    %c0_13 = arith.constant 0 : index
    %24 = vector.load %arg11[%c0_12, %c0_13] : memref<1x152xf32, #tpu.memory_space<vmem>>, vector<1x152xf32>
    %25 = vector.broadcast %24 : vector<1x152xf32> to vector<16x152xf32>
    %26 = arith.addf %23, %25 : vector<16x152xf32>
    %cst_14 = arith.constant 2.000000e+01 : f32
    %27 = vector.broadcast %cst_14 : f32 to vector<16x152xf32>
    %28 = arith.minimumf %26, %27 : vector<16x152xf32>
    %29 = math.exp %28 : vector<16x152xf32>
    %cst_15 = arith.constant 2.000000e+00 : f32
    %30 = vector.broadcast %cst_15 : f32 to vector<16x152xf32>
    %31 = arith.addf %29, %30 : vector<16x152xf32>
    %32 = arith.mulf %29, %31 : vector<16x152xf32>
    %cst_16 = arith.constant 2.000000e+00 : f32
    %33 = vector.broadcast %cst_16 : f32 to vector<16x152xf32>
    %34 = arith.addf %32, %33 : vector<16x152xf32>
    %35 = tpu.reciprocal %34 {approx = true} : vector<16x152xf32> -> vector<16x152xf32>
    %36 = arith.mulf %32, %35 : vector<16x152xf32>
    %cst_17 = arith.constant 2.000000e+01 : f32
    %37 = vector.broadcast %cst_17 : f32 to vector<16x152xf32>
    %38 = arith.cmpf ogt, %26, %37 : vector<16x152xf32>
    %39 = arith.mulf %26, %36 : vector<16x152xf32>
    %40 = arith.select %38, %26, %39 : vector<16x152xi1>, vector<16x152xf32>
    %41 = vector.extract_strided_slice %40 {offsets = [0, 0], sizes = [16, 76], strides = [1, 1]} : vector<16x152xf32> to vector<16x76xf32>
    %42 = arith.truncf %40 : vector<16x152xf32> to vector<16x152xbf16>
    %c0_18 = arith.constant 0 : index
    %c0_19 = arith.constant 0 : index
    %43 = vector.load %arg12[%c0_18, %c0_19] : memref<152x76xbf16, #tpu.memory_space<vmem>>, vector<152x76xbf16>
    %cst_20 = arith.constant dense<0.000000e+00> : vector<16x76xf32>
    %44 = tpu.matmul %42, %43, %cst_20 {dimension_numbers = #tpu.dot_dimension_numbers<[1], [0], [0], [1], [0, 0, 1, 1], [], []>} : vector<16x152xbf16>, vector<152x76xbf16>, vector<16x76xf32> -> vector<16x76xf32>
    %c0_21 = arith.constant 0 : index
    %c0_22 = arith.constant 0 : index
    %45 = vector.load %arg13[%c0_21, %c0_22] : memref<1x76xf32, #tpu.memory_space<vmem>>, vector<1x76xf32>
    %46 = vector.broadcast %45 : vector<1x76xf32> to vector<16x76xf32>
    %47 = arith.addf %44, %46 : vector<16x76xf32>
    %cst_23 = arith.constant 2.000000e+01 : f32
    %48 = vector.broadcast %cst_23 : f32 to vector<16x76xf32>
    %49 = arith.minimumf %47, %48 : vector<16x76xf32>
    %50 = math.exp %49 : vector<16x76xf32>
    %cst_24 = arith.constant 2.000000e+00 : f32
    %51 = vector.broadcast %cst_24 : f32 to vector<16x76xf32>
    %52 = arith.addf %50, %51 : vector<16x76xf32>
    %53 = arith.mulf %50, %52 : vector<16x76xf32>
    %cst_25 = arith.constant 2.000000e+00 : f32
    %54 = vector.broadcast %cst_25 : f32 to vector<16x76xf32>
    %55 = arith.addf %53, %54 : vector<16x76xf32>
    %56 = tpu.reciprocal %55 {approx = true} : vector<16x76xf32> -> vector<16x76xf32>
    %57 = arith.mulf %53, %56 : vector<16x76xf32>
    %cst_26 = arith.constant 2.000000e+01 : f32
    %58 = vector.broadcast %cst_26 : f32 to vector<16x76xf32>
    %59 = arith.cmpf ogt, %47, %58 : vector<16x76xf32>
    %60 = arith.mulf %47, %57 : vector<16x76xf32>
    %61 = arith.select %59, %47, %60 : vector<16x76xi1>, vector<16x76xf32>
    %62 = vector.extract_strided_slice %61 {offsets = [0, 0], sizes = [16, 51], strides = [1, 1]} : vector<16x76xf32> to vector<16x51xf32>
    %63 = arith.truncf %61 : vector<16x76xf32> to vector<16x76xbf16>
    %c0_27 = arith.constant 0 : index
    %c0_28 = arith.constant 0 : index
    %64 = vector.load %arg14[%c0_27, %c0_28] : memref<76x27xbf16, #tpu.memory_space<vmem>>, vector<76x27xbf16>
    %cst_29 = arith.constant dense<0.000000e+00> : vector<16x27xf32>
    %65 = tpu.matmul %63, %64, %cst_29 {dimension_numbers = #tpu.dot_dimension_numbers<[1], [0], [0], [1], [0, 0, 1, 1], [], []>} : vector<16x76xbf16>, vector<76x27xbf16>, vector<16x27xf32> -> vector<16x27xf32>
    %c0_30 = arith.constant 0 : index
    %c0_31 = arith.constant 0 : index
    %66 = vector.load %arg15[%c0_30, %c0_31] : memref<1x27xf32, #tpu.memory_space<vmem>>, vector<1x27xf32>
    %67 = vector.broadcast %66 : vector<1x27xf32> to vector<16x27xf32>
    %68 = arith.addf %65, %67 : vector<16x27xf32>
    %cst_32 = arith.constant 2.000000e+01 : f32
    %69 = vector.broadcast %cst_32 : f32 to vector<16x27xf32>
    %70 = arith.minimumf %68, %69 : vector<16x27xf32>
    %71 = math.exp %70 : vector<16x27xf32>
    %cst_33 = arith.constant 2.000000e+00 : f32
    %72 = vector.broadcast %cst_33 : f32 to vector<16x27xf32>
    %73 = arith.addf %71, %72 : vector<16x27xf32>
    %74 = arith.mulf %71, %73 : vector<16x27xf32>
    %cst_34 = arith.constant 2.000000e+00 : f32
    %75 = vector.broadcast %cst_34 : f32 to vector<16x27xf32>
    %76 = arith.addf %74, %75 : vector<16x27xf32>
    %77 = tpu.reciprocal %76 {approx = true} : vector<16x27xf32> -> vector<16x27xf32>
    %78 = arith.mulf %74, %77 : vector<16x27xf32>
    %cst_35 = arith.constant 2.000000e+01 : f32
    %79 = vector.broadcast %cst_35 : f32 to vector<16x27xf32>
    %80 = arith.cmpf ogt, %68, %79 : vector<16x27xf32>
    %81 = arith.mulf %68, %78 : vector<16x27xf32>
    %82 = arith.select %80, %68, %81 : vector<16x27xi1>, vector<16x27xf32>
    %c0_36 = arith.constant 0 : index
    %c0_37 = arith.constant 0 : index
    %83 = vector.load %arg2[%c0_36, %c0_37] : memref<16x1xf32, #tpu.memory_space<vmem>>, vector<16x1xf32>
    %c0_38 = arith.constant 0 : index
    %c0_39 = arith.constant 0 : index
    %84 = vector.load %arg3[%c0_38, %c0_39] : memref<16x1xf32, #tpu.memory_space<vmem>>, vector<16x1xf32>
    %cst_40 = arith.constant 2.000000e+01 : f32
    %85 = vector.broadcast %cst_40 : f32 to vector<16x102xf32>
    %86 = arith.minimumf %20, %85 : vector<16x102xf32>
    %87 = math.exp %86 : vector<16x102xf32>
    %cst_41 = arith.constant 2.000000e+00 : f32
    %88 = vector.broadcast %cst_41 : f32 to vector<16x102xf32>
    %89 = arith.addf %87, %88 : vector<16x102xf32>
    %90 = arith.mulf %87, %89 : vector<16x102xf32>
    %cst_42 = arith.constant 2.000000e+00 : f32
    %91 = vector.broadcast %cst_42 : f32 to vector<16x102xf32>
    %92 = arith.addf %90, %91 : vector<16x102xf32>
    %93 = tpu.reciprocal %92 {approx = true} : vector<16x102xf32> -> vector<16x102xf32>
    %94 = arith.mulf %90, %93 : vector<16x102xf32>
    %cst_43 = arith.constant 2.000000e+01 : f32
    %95 = vector.broadcast %cst_43 : f32 to vector<16x102xf32>
    %96 = arith.cmpf ogt, %20, %95 : vector<16x102xf32>
    %97 = arith.mulf %20, %94 : vector<16x102xf32>
    %98 = arith.select %96, %20, %97 : vector<16x102xi1>, vector<16x102xf32>
    %99 = vector.broadcast %83 : vector<16x1xf32> to vector<16x102xf32>
    %100 = arith.mulf %99, %98 : vector<16x102xf32>
    %101 = vector.broadcast %84 : vector<16x1xf32> to vector<16x102xf32>
    %102 = arith.addf %100, %101 : vector<16x102xf32>
    %103 = arith.truncf %102 : vector<16x102xf32> to vector<16x102xbf16>
    %cst_44 = arith.constant 2.000000e+01 : f32
    %104 = vector.broadcast %cst_44 : f32 to vector<16x76xf32>
    %105 = arith.minimumf %41, %104 : vector<16x76xf32>
    %106 = math.exp %105 : vector<16x76xf32>
    %cst_45 = arith.constant 2.000000e+00 : f32
    %107 = vector.broadcast %cst_45 : f32 to vector<16x76xf32>
    %108 = arith.addf %106, %107 : vector<16x76xf32>
    %109 = arith.mulf %106, %108 : vector<16x76xf32>
    %cst_46 = arith.constant 2.000000e+00 : f32
    %110 = vector.broadcast %cst_46 : f32 to vector<16x76xf32>
    %111 = arith.addf %109, %110 : vector<16x76xf32>
    %112 = tpu.reciprocal %111 {approx = true} : vector<16x76xf32> -> vector<16x76xf32>
    %113 = arith.mulf %109, %112 : vector<16x76xf32>
    %cst_47 = arith.constant 2.000000e+01 : f32
    %114 = vector.broadcast %cst_47 : f32 to vector<16x76xf32>
    %115 = arith.cmpf ogt, %41, %114 : vector<16x76xf32>
    %116 = arith.mulf %41, %113 : vector<16x76xf32>
    %117 = arith.select %115, %41, %116 : vector<16x76xi1>, vector<16x76xf32>
    %118 = vector.broadcast %83 : vector<16x1xf32> to vector<16x76xf32>
    %119 = arith.mulf %118, %117 : vector<16x76xf32>
    %120 = vector.broadcast %84 : vector<16x1xf32> to vector<16x76xf32>
    %121 = arith.addf %119, %120 : vector<16x76xf32>
    %122 = arith.truncf %121 : vector<16x76xf32> to vector<16x76xbf16>
    %cst_48 = arith.constant 2.000000e+01 : f32
    %123 = vector.broadcast %cst_48 : f32 to vector<16x51xf32>
    %124 = arith.minimumf %62, %123 : vector<16x51xf32>
    %125 = math.exp %124 : vector<16x51xf32>
    %cst_49 = arith.constant 2.000000e+00 : f32
    %126 = vector.broadcast %cst_49 : f32 to vector<16x51xf32>
    %127 = arith.addf %125, %126 : vector<16x51xf32>
    %128 = arith.mulf %125, %127 : vector<16x51xf32>
    %cst_50 = arith.constant 2.000000e+00 : f32
    %129 = vector.broadcast %cst_50 : f32 to vector<16x51xf32>
    %130 = arith.addf %128, %129 : vector<16x51xf32>
    %131 = tpu.reciprocal %130 {approx = true} : vector<16x51xf32> -> vector<16x51xf32>
    %132 = arith.mulf %128, %131 : vector<16x51xf32>
    %cst_51 = arith.constant 2.000000e+01 : f32
    %133 = vector.broadcast %cst_51 : f32 to vector<16x51xf32>
    %134 = arith.cmpf ogt, %62, %133 : vector<16x51xf32>
    %135 = arith.mulf %62, %132 : vector<16x51xf32>
    %136 = arith.select %134, %62, %135 : vector<16x51xi1>, vector<16x51xf32>
    %137 = vector.broadcast %83 : vector<16x1xf32> to vector<16x51xf32>
    %138 = arith.mulf %137, %136 : vector<16x51xf32>
    %139 = vector.broadcast %84 : vector<16x1xf32> to vector<16x51xf32>
    %140 = arith.addf %138, %139 : vector<16x51xf32>
    %141 = arith.truncf %140 : vector<16x51xf32> to vector<16x51xbf16>
    %cst_52 = arith.constant 2.000000e+01 : f32
    %142 = vector.broadcast %cst_52 : f32 to vector<16x27xf32>
    %143 = arith.minimumf %82, %142 : vector<16x27xf32>
    %144 = math.exp %143 : vector<16x27xf32>
    %cst_53 = arith.constant 2.000000e+00 : f32
    %145 = vector.broadcast %cst_53 : f32 to vector<16x27xf32>
    %146 = arith.addf %144, %145 : vector<16x27xf32>
    %147 = arith.mulf %144, %146 : vector<16x27xf32>
    %cst_54 = arith.constant 2.000000e+00 : f32
    %148 = vector.broadcast %cst_54 : f32 to vector<16x27xf32>
    %149 = arith.addf %147, %148 : vector<16x27xf32>
    %150 = tpu.reciprocal %149 {approx = true} : vector<16x27xf32> -> vector<16x27xf32>
    %151 = arith.mulf %147, %150 : vector<16x27xf32>
    %cst_55 = arith.constant 2.000000e+01 : f32
    %152 = vector.broadcast %cst_55 : f32 to vector<16x27xf32>
    %153 = arith.cmpf ogt, %82, %152 : vector<16x27xf32>
    %154 = arith.mulf %82, %151 : vector<16x27xf32>
    %155 = arith.select %153, %82, %154 : vector<16x27xi1>, vector<16x27xf32>
    %156 = vector.broadcast %83 : vector<16x1xf32> to vector<16x27xf32>
    %157 = arith.mulf %156, %155 : vector<16x27xf32>
    %158 = vector.broadcast %84 : vector<16x1xf32> to vector<16x27xf32>
    %159 = arith.addf %157, %158 : vector<16x27xf32>
    %160 = arith.truncf %159 : vector<16x27xf32> to vector<16x27xbf16>
    %c0_56 = arith.constant 0 : index
    %c0_57 = arith.constant 0 : index
    %161 = vector.load %arg16[%c0_56, %c0_57] : memref<102x320xbf16, #tpu.memory_space<vmem>>, vector<102x320xbf16>
    %cst_58 = arith.constant dense<0.000000e+00> : vector<16x320xf32>
    %162 = tpu.matmul %103, %161, %cst_58 {dimension_numbers = #tpu.dot_dimension_numbers<[1], [0], [0], [1], [0, 0, 1, 1], [], []>} : vector<16x102xbf16>, vector<102x320xbf16>, vector<16x320xf32> -> vector<16x320xf32>
    %c0_59 = arith.constant 0 : index
    %c0_60 = arith.constant 0 : index
    %163 = vector.load %arg17[%c0_59, %c0_60] : memref<76x320xbf16, #tpu.memory_space<vmem>>, vector<76x320xbf16>
    %cst_61 = arith.constant dense<0.000000e+00> : vector<16x320xf32>
    %164 = tpu.matmul %122, %163, %cst_61 {dimension_numbers = #tpu.dot_dimension_numbers<[1], [0], [0], [1], [0, 0, 1, 1], [], []>} : vector<16x76xbf16>, vector<76x320xbf16>, vector<16x320xf32> -> vector<16x320xf32>
    %165 = arith.addf %162, %164 : vector<16x320xf32>
    %c0_62 = arith.constant 0 : index
    %c0_63 = arith.constant 0 : index
    %166 = vector.load %arg18[%c0_62, %c0_63] : memref<51x320xbf16, #tpu.memory_space<vmem>>, vector<51x320xbf16>
    %cst_64 = arith.constant dense<0.000000e+00> : vector<16x320xf32>
    %167 = tpu.matmul %141, %166, %cst_64 {dimension_numbers = #tpu.dot_dimension_numbers<[1], [0], [0], [1], [0, 0, 1, 1], [], []>} : vector<16x51xbf16>, vector<51x320xbf16>, vector<16x320xf32> -> vector<16x320xf32>
    %168 = arith.addf %165, %167 : vector<16x320xf32>
    %c0_65 = arith.constant 0 : index
    %c0_66 = arith.constant 0 : index
    %169 = vector.load %arg19[%c0_65, %c0_66] : memref<27x320xbf16, #tpu.memory_space<vmem>>, vector<27x320xbf16>
    %cst_67 = arith.constant dense<0.000000e+00> : vector<16x320xf32>
    %170 = tpu.matmul %160, %169, %cst_67 {dimension_numbers = #tpu.dot_dimension_numbers<[1], [0], [0], [1], [0, 0, 1, 1], [], []>} : vector<16x27xbf16>, vector<27x320xbf16>, vector<16x320xf32> -> vector<16x320xf32>
    %171 = arith.addf %168, %170 : vector<16x320xf32>
    %c0_68 = arith.constant 0 : index
    %c0_69 = arith.constant 0 : index
    %172 = vector.load %arg20[%c0_68, %c0_69] : memref<1x320xf32, #tpu.memory_space<vmem>>, vector<1x320xf32>
    %173 = vector.broadcast %172 : vector<1x320xf32> to vector<16x320xf32>
    %174 = arith.addf %171, %173 : vector<16x320xf32>
    %cst_70 = arith.constant 2.000000e+01 : f32
    %175 = vector.broadcast %cst_70 : f32 to vector<16x320xf32>
    %176 = arith.minimumf %174, %175 : vector<16x320xf32>
    %177 = math.exp %176 : vector<16x320xf32>
    %cst_71 = arith.constant 2.000000e+00 : f32
    %178 = vector.broadcast %cst_71 : f32 to vector<16x320xf32>
    %179 = arith.addf %177, %178 : vector<16x320xf32>
    %180 = arith.mulf %177, %179 : vector<16x320xf32>
    %cst_72 = arith.constant 2.000000e+00 : f32
    %181 = vector.broadcast %cst_72 : f32 to vector<16x320xf32>
    %182 = arith.addf %180, %181 : vector<16x320xf32>
    %183 = tpu.reciprocal %182 {approx = true} : vector<16x320xf32> -> vector<16x320xf32>
    %184 = arith.mulf %180, %183 : vector<16x320xf32>
    %cst_73 = arith.constant 2.000000e+01 : f32
    %185 = vector.broadcast %cst_73 : f32 to vector<16x320xf32>
    %186 = arith.cmpf ogt, %174, %185 : vector<16x320xf32>
    %187 = arith.mulf %174, %184 : vector<16x320xf32>
    %188 = arith.select %186, %174, %187 : vector<16x320xi1>, vector<16x320xf32>
    %189 = vector.extract_strided_slice %188 {offsets = [0, 0], sizes = [16, 128], strides = [1, 1]} : vector<16x320xf32> to vector<16x128xf32>
    %190 = arith.truncf %188 : vector<16x320xf32> to vector<16x320xbf16>
    %c0_74 = arith.constant 0 : index
    %c0_75 = arith.constant 0 : index
    %191 = vector.load %arg21[%c0_74, %c0_75] : memref<320x192xbf16, #tpu.memory_space<vmem>>, vector<320x192xbf16>
    %cst_76 = arith.constant dense<0.000000e+00> : vector<16x192xf32>
    %192 = tpu.matmul %190, %191, %cst_76 {dimension_numbers = #tpu.dot_dimension_numbers<[1], [0], [0], [1], [0, 0, 1, 1], [], []>} : vector<16x320xbf16>, vector<320x192xbf16>, vector<16x192xf32> -> vector<16x192xf32>
    %c0_77 = arith.constant 0 : index
    %c0_78 = arith.constant 0 : index
    %193 = vector.load %arg22[%c0_77, %c0_78] : memref<1x192xf32, #tpu.memory_space<vmem>>, vector<1x192xf32>
    %194 = vector.broadcast %193 : vector<1x192xf32> to vector<16x192xf32>
    %195 = arith.addf %192, %194 : vector<16x192xf32>
    %cst_79 = arith.constant 2.000000e+01 : f32
    %196 = vector.broadcast %cst_79 : f32 to vector<16x192xf32>
    %197 = arith.minimumf %195, %196 : vector<16x192xf32>
    %198 = math.exp %197 : vector<16x192xf32>
    %cst_80 = arith.constant 2.000000e+00 : f32
    %199 = vector.broadcast %cst_80 : f32 to vector<16x192xf32>
    %200 = arith.addf %198, %199 : vector<16x192xf32>
    %201 = arith.mulf %198, %200 : vector<16x192xf32>
    %cst_81 = arith.constant 2.000000e+00 : f32
    %202 = vector.broadcast %cst_81 : f32 to vector<16x192xf32>
    %203 = arith.addf %201, %202 : vector<16x192xf32>
    %204 = tpu.reciprocal %203 {approx = true} : vector<16x192xf32> -> vector<16x192xf32>
    %205 = arith.mulf %201, %204 : vector<16x192xf32>
    %cst_82 = arith.constant 2.000000e+01 : f32
    %206 = vector.broadcast %cst_82 : f32 to vector<16x192xf32>
    %207 = arith.cmpf ogt, %195, %206 : vector<16x192xf32>
    %208 = arith.mulf %195, %205 : vector<16x192xf32>
    %209 = arith.select %207, %195, %208 : vector<16x192xi1>, vector<16x192xf32>
    %210 = vector.extract_strided_slice %209 {offsets = [0, 0], sizes = [16, 96], strides = [1, 1]} : vector<16x192xf32> to vector<16x96xf32>
    %211 = arith.truncf %209 : vector<16x192xf32> to vector<16x192xbf16>
    %c0_83 = arith.constant 0 : index
    %c0_84 = arith.constant 0 : index
    %212 = vector.load %arg23[%c0_83, %c0_84] : memref<192x96xbf16, #tpu.memory_space<vmem>>, vector<192x96xbf16>
    %cst_85 = arith.constant dense<0.000000e+00> : vector<16x96xf32>
    %213 = tpu.matmul %211, %212, %cst_85 {dimension_numbers = #tpu.dot_dimension_numbers<[1], [0], [0], [1], [0, 0, 1, 1], [], []>} : vector<16x192xbf16>, vector<192x96xbf16>, vector<16x96xf32> -> vector<16x96xf32>
    %c0_86 = arith.constant 0 : index
    %c0_87 = arith.constant 0 : index
    %214 = vector.load %arg24[%c0_86, %c0_87] : memref<1x96xf32, #tpu.memory_space<vmem>>, vector<1x96xf32>
    %215 = vector.broadcast %214 : vector<1x96xf32> to vector<16x96xf32>
    %216 = arith.addf %213, %215 : vector<16x96xf32>
    %cst_88 = arith.constant 2.000000e+01 : f32
    %217 = vector.broadcast %cst_88 : f32 to vector<16x96xf32>
    %218 = arith.minimumf %216, %217 : vector<16x96xf32>
    %219 = math.exp %218 : vector<16x96xf32>
    %cst_89 = arith.constant 2.000000e+00 : f32
    %220 = vector.broadcast %cst_89 : f32 to vector<16x96xf32>
    %221 = arith.addf %219, %220 : vector<16x96xf32>
    %222 = arith.mulf %219, %221 : vector<16x96xf32>
    %cst_90 = arith.constant 2.000000e+00 : f32
    %223 = vector.broadcast %cst_90 : f32 to vector<16x96xf32>
    %224 = arith.addf %222, %223 : vector<16x96xf32>
    %225 = tpu.reciprocal %224 {approx = true} : vector<16x96xf32> -> vector<16x96xf32>
    %226 = arith.mulf %222, %225 : vector<16x96xf32>
    %cst_91 = arith.constant 2.000000e+01 : f32
    %227 = vector.broadcast %cst_91 : f32 to vector<16x96xf32>
    %228 = arith.cmpf ogt, %216, %227 : vector<16x96xf32>
    %229 = arith.mulf %216, %226 : vector<16x96xf32>
    %230 = arith.select %228, %216, %229 : vector<16x96xi1>, vector<16x96xf32>
    %231 = vector.extract_strided_slice %230 {offsets = [0, 0], sizes = [16, 64], strides = [1, 1]} : vector<16x96xf32> to vector<16x64xf32>
    %232 = arith.truncf %230 : vector<16x96xf32> to vector<16x96xbf16>
    %c0_92 = arith.constant 0 : index
    %c0_93 = arith.constant 0 : index
    %233 = vector.load %arg25[%c0_92, %c0_93] : memref<96x32xbf16, #tpu.memory_space<vmem>>, vector<96x32xbf16>
    %cst_94 = arith.constant dense<0.000000e+00> : vector<16x32xf32>
    %234 = tpu.matmul %232, %233, %cst_94 {dimension_numbers = #tpu.dot_dimension_numbers<[1], [0], [0], [1], [0, 0, 1, 1], [], []>} : vector<16x96xbf16>, vector<96x32xbf16>, vector<16x32xf32> -> vector<16x32xf32>
    %c0_95 = arith.constant 0 : index
    %c0_96 = arith.constant 0 : index
    %235 = vector.load %arg26[%c0_95, %c0_96] : memref<1x32xf32, #tpu.memory_space<vmem>>, vector<1x32xf32>
    %236 = vector.broadcast %235 : vector<1x32xf32> to vector<16x32xf32>
    %237 = arith.addf %234, %236 : vector<16x32xf32>
    %cst_97 = arith.constant 2.000000e+01 : f32
    %238 = vector.broadcast %cst_97 : f32 to vector<16x32xf32>
    %239 = arith.minimumf %237, %238 : vector<16x32xf32>
    %240 = math.exp %239 : vector<16x32xf32>
    %cst_98 = arith.constant 2.000000e+00 : f32
    %241 = vector.broadcast %cst_98 : f32 to vector<16x32xf32>
    %242 = arith.addf %240, %241 : vector<16x32xf32>
    %243 = arith.mulf %240, %242 : vector<16x32xf32>
    %cst_99 = arith.constant 2.000000e+00 : f32
    %244 = vector.broadcast %cst_99 : f32 to vector<16x32xf32>
    %245 = arith.addf %243, %244 : vector<16x32xf32>
    %246 = tpu.reciprocal %245 {approx = true} : vector<16x32xf32> -> vector<16x32xf32>
    %247 = arith.mulf %243, %246 : vector<16x32xf32>
    %cst_100 = arith.constant 2.000000e+01 : f32
    %248 = vector.broadcast %cst_100 : f32 to vector<16x32xf32>
    %249 = arith.cmpf ogt, %237, %248 : vector<16x32xf32>
    %250 = arith.mulf %237, %247 : vector<16x32xf32>
    %251 = arith.select %249, %237, %250 : vector<16x32xi1>, vector<16x32xf32>
    %c0_101 = arith.constant 0 : index
    %c0_102 = arith.constant 0 : index
    %252 = vector.load %arg4[%c0_101, %c0_102] : memref<16x1xf32, #tpu.memory_space<vmem>>, vector<16x1xf32>
    %c0_103 = arith.constant 0 : index
    %c0_104 = arith.constant 0 : index
    %253 = vector.load %arg5[%c0_103, %c0_104] : memref<16x1xf32, #tpu.memory_space<vmem>>, vector<16x1xf32>
    %cst_105 = arith.constant 2.000000e+01 : f32
    %254 = vector.broadcast %cst_105 : f32 to vector<16x128xf32>
    %255 = arith.minimumf %189, %254 : vector<16x128xf32>
    %256 = math.exp %255 : vector<16x128xf32>
    %cst_106 = arith.constant 2.000000e+00 : f32
    %257 = vector.broadcast %cst_106 : f32 to vector<16x128xf32>
    %258 = arith.addf %256, %257 : vector<16x128xf32>
    %259 = arith.mulf %256, %258 : vector<16x128xf32>
    %cst_107 = arith.constant 2.000000e+00 : f32
    %260 = vector.broadcast %cst_107 : f32 to vector<16x128xf32>
    %261 = arith.addf %259, %260 : vector<16x128xf32>
    %262 = tpu.reciprocal %261 {approx = true} : vector<16x128xf32> -> vector<16x128xf32>
    %263 = arith.mulf %259, %262 : vector<16x128xf32>
    %cst_108 = arith.constant 2.000000e+01 : f32
    %264 = vector.broadcast %cst_108 : f32 to vector<16x128xf32>
    %265 = arith.cmpf ogt, %189, %264 : vector<16x128xf32>
    %266 = arith.mulf %189, %263 : vector<16x128xf32>
    %267 = arith.select %265, %189, %266 : vector<16x128xi1>, vector<16x128xf32>
    %268 = vector.broadcast %252 : vector<16x1xf32> to vector<16x128xf32>
    %269 = arith.mulf %268, %267 : vector<16x128xf32>
    %270 = vector.broadcast %253 : vector<16x1xf32> to vector<16x128xf32>
    %271 = arith.addf %269, %270 : vector<16x128xf32>
    %272 = arith.truncf %271 : vector<16x128xf32> to vector<16x128xbf16>
    %cst_109 = arith.constant 2.000000e+01 : f32
    %273 = vector.broadcast %cst_109 : f32 to vector<16x96xf32>
    %274 = arith.minimumf %210, %273 : vector<16x96xf32>
    %275 = math.exp %274 : vector<16x96xf32>
    %cst_110 = arith.constant 2.000000e+00 : f32
    %276 = vector.broadcast %cst_110 : f32 to vector<16x96xf32>
    %277 = arith.addf %275, %276 : vector<16x96xf32>
    %278 = arith.mulf %275, %277 : vector<16x96xf32>
    %cst_111 = arith.constant 2.000000e+00 : f32
    %279 = vector.broadcast %cst_111 : f32 to vector<16x96xf32>
    %280 = arith.addf %278, %279 : vector<16x96xf32>
    %281 = tpu.reciprocal %280 {approx = true} : vector<16x96xf32> -> vector<16x96xf32>
    %282 = arith.mulf %278, %281 : vector<16x96xf32>
    %cst_112 = arith.constant 2.000000e+01 : f32
    %283 = vector.broadcast %cst_112 : f32 to vector<16x96xf32>
    %284 = arith.cmpf ogt, %210, %283 : vector<16x96xf32>
    %285 = arith.mulf %210, %282 : vector<16x96xf32>
    %286 = arith.select %284, %210, %285 : vector<16x96xi1>, vector<16x96xf32>
    %287 = vector.broadcast %252 : vector<16x1xf32> to vector<16x96xf32>
    %288 = arith.mulf %287, %286 : vector<16x96xf32>
    %289 = vector.broadcast %253 : vector<16x1xf32> to vector<16x96xf32>
    %290 = arith.addf %288, %289 : vector<16x96xf32>
    %291 = arith.truncf %290 : vector<16x96xf32> to vector<16x96xbf16>
    %cst_113 = arith.constant 2.000000e+01 : f32
    %292 = vector.broadcast %cst_113 : f32 to vector<16x64xf32>
    %293 = arith.minimumf %231, %292 : vector<16x64xf32>
    %294 = math.exp %293 : vector<16x64xf32>
    %cst_114 = arith.constant 2.000000e+00 : f32
    %295 = vector.broadcast %cst_114 : f32 to vector<16x64xf32>
    %296 = arith.addf %294, %295 : vector<16x64xf32>
    %297 = arith.mulf %294, %296 : vector<16x64xf32>
    %cst_115 = arith.constant 2.000000e+00 : f32
    %298 = vector.broadcast %cst_115 : f32 to vector<16x64xf32>
    %299 = arith.addf %297, %298 : vector<16x64xf32>
    %300 = tpu.reciprocal %299 {approx = true} : vector<16x64xf32> -> vector<16x64xf32>
    %301 = arith.mulf %297, %300 : vector<16x64xf32>
    %cst_116 = arith.constant 2.000000e+01 : f32
    %302 = vector.broadcast %cst_116 : f32 to vector<16x64xf32>
    %303 = arith.cmpf ogt, %231, %302 : vector<16x64xf32>
    %304 = arith.mulf %231, %301 : vector<16x64xf32>
    %305 = arith.select %303, %231, %304 : vector<16x64xi1>, vector<16x64xf32>
    %306 = vector.broadcast %252 : vector<16x1xf32> to vector<16x64xf32>
    %307 = arith.mulf %306, %305 : vector<16x64xf32>
    %308 = vector.broadcast %253 : vector<16x1xf32> to vector<16x64xf32>
    %309 = arith.addf %307, %308 : vector<16x64xf32>
    %310 = arith.truncf %309 : vector<16x64xf32> to vector<16x64xbf16>
    %cst_117 = arith.constant 2.000000e+01 : f32
    %311 = vector.broadcast %cst_117 : f32 to vector<16x32xf32>
    %312 = arith.minimumf %251, %311 : vector<16x32xf32>
    %313 = math.exp %312 : vector<16x32xf32>
    %cst_118 = arith.constant 2.000000e+00 : f32
    %314 = vector.broadcast %cst_118 : f32 to vector<16x32xf32>
    %315 = arith.addf %313, %314 : vector<16x32xf32>
    %316 = arith.mulf %313, %315 : vector<16x32xf32>
    %cst_119 = arith.constant 2.000000e+00 : f32
    %317 = vector.broadcast %cst_119 : f32 to vector<16x32xf32>
    %318 = arith.addf %316, %317 : vector<16x32xf32>
    %319 = tpu.reciprocal %318 {approx = true} : vector<16x32xf32> -> vector<16x32xf32>
    %320 = arith.mulf %316, %319 : vector<16x32xf32>
    %cst_120 = arith.constant 2.000000e+01 : f32
    %321 = vector.broadcast %cst_120 : f32 to vector<16x32xf32>
    %322 = arith.cmpf ogt, %251, %321 : vector<16x32xf32>
    %323 = arith.mulf %251, %320 : vector<16x32xf32>
    %324 = arith.select %322, %251, %323 : vector<16x32xi1>, vector<16x32xf32>
    %325 = vector.broadcast %252 : vector<16x1xf32> to vector<16x32xf32>
    %326 = arith.mulf %325, %324 : vector<16x32xf32>
    %327 = vector.broadcast %253 : vector<16x1xf32> to vector<16x32xf32>
    %328 = arith.addf %326, %327 : vector<16x32xf32>
    %329 = arith.truncf %328 : vector<16x32xf32> to vector<16x32xbf16>
    %c0_121 = arith.constant 0 : index
    %c0_122 = arith.constant 0 : index
    %330 = vector.load %arg27[%c0_121, %c0_122] : memref<128x243xbf16, #tpu.memory_space<vmem>>, vector<128x243xbf16>
    %cst_123 = arith.constant dense<0.000000e+00> : vector<16x243xf32>
    %331 = tpu.matmul %272, %330, %cst_123 {dimension_numbers = #tpu.dot_dimension_numbers<[1], [0], [0], [1], [0, 0, 1, 1], [], []>} : vector<16x128xbf16>, vector<128x243xbf16>, vector<16x243xf32> -> vector<16x243xf32>
    %c0_124 = arith.constant 0 : index
    %c0_125 = arith.constant 0 : index
    %332 = vector.load %arg28[%c0_124, %c0_125] : memref<96x243xbf16, #tpu.memory_space<vmem>>, vector<96x243xbf16>
    %cst_126 = arith.constant dense<0.000000e+00> : vector<16x243xf32>
    %333 = tpu.matmul %291, %332, %cst_126 {dimension_numbers = #tpu.dot_dimension_numbers<[1], [0], [0], [1], [0, 0, 1, 1], [], []>} : vector<16x96xbf16>, vector<96x243xbf16>, vector<16x243xf32> -> vector<16x243xf32>
    %334 = arith.addf %331, %333 : vector<16x243xf32>
    %c0_127 = arith.constant 0 : index
    %c0_128 = arith.constant 0 : index
    %335 = vector.load %arg29[%c0_127, %c0_128] : memref<64x243xbf16, #tpu.memory_space<vmem>>, vector<64x243xbf16>
    %cst_129 = arith.constant dense<0.000000e+00> : vector<16x243xf32>
    %336 = tpu.matmul %310, %335, %cst_129 {dimension_numbers = #tpu.dot_dimension_numbers<[1], [0], [0], [1], [0, 0, 1, 1], [], []>} : vector<16x64xbf16>, vector<64x243xbf16>, vector<16x243xf32> -> vector<16x243xf32>
    %337 = arith.addf %334, %336 : vector<16x243xf32>
    %c0_130 = arith.constant 0 : index
    %c0_131 = arith.constant 0 : index
    %338 = vector.load %arg30[%c0_130, %c0_131] : memref<32x243xbf16, #tpu.memory_space<vmem>>, vector<32x243xbf16>
    %cst_132 = arith.constant dense<0.000000e+00> : vector<16x243xf32>
    %339 = tpu.matmul %329, %338, %cst_132 {dimension_numbers = #tpu.dot_dimension_numbers<[1], [0], [0], [1], [0, 0, 1, 1], [], []>} : vector<16x32xbf16>, vector<32x243xbf16>, vector<16x243xf32> -> vector<16x243xf32>
    %340 = arith.addf %337, %339 : vector<16x243xf32>
    %c0_133 = arith.constant 0 : index
    %c0_134 = arith.constant 0 : index
    %341 = vector.load %arg31[%c0_133, %c0_134] : memref<1x243xf32, #tpu.memory_space<vmem>>, vector<1x243xf32>
    %342 = vector.broadcast %341 : vector<1x243xf32> to vector<16x243xf32>
    %343 = arith.addf %340, %342 : vector<16x243xf32>
    %cst_135 = arith.constant 2.000000e+01 : f32
    %344 = vector.broadcast %cst_135 : f32 to vector<16x243xf32>
    %345 = arith.minimumf %343, %344 : vector<16x243xf32>
    %346 = math.exp %345 : vector<16x243xf32>
    %cst_136 = arith.constant 2.000000e+00 : f32
    %347 = vector.broadcast %cst_136 : f32 to vector<16x243xf32>
    %348 = arith.addf %346, %347 : vector<16x243xf32>
    %349 = arith.mulf %346, %348 : vector<16x243xf32>
    %cst_137 = arith.constant 2.000000e+00 : f32
    %350 = vector.broadcast %cst_137 : f32 to vector<16x243xf32>
    %351 = arith.addf %349, %350 : vector<16x243xf32>
    %352 = tpu.reciprocal %351 {approx = true} : vector<16x243xf32> -> vector<16x243xf32>
    %353 = arith.mulf %349, %352 : vector<16x243xf32>
    %cst_138 = arith.constant 2.000000e+01 : f32
    %354 = vector.broadcast %cst_138 : f32 to vector<16x243xf32>
    %355 = arith.cmpf ogt, %343, %354 : vector<16x243xf32>
    %356 = arith.mulf %343, %353 : vector<16x243xf32>
    %357 = arith.select %355, %343, %356 : vector<16x243xi1>, vector<16x243xf32>
    %358 = vector.extract_strided_slice %357 {offsets = [0, 0], sizes = [16, 51], strides = [1, 1]} : vector<16x243xf32> to vector<16x51xf32>
    %359 = arith.truncf %357 : vector<16x243xf32> to vector<16x243xbf16>
    %c0_139 = arith.constant 0 : index
    %c0_140 = arith.constant 0 : index
    %360 = vector.load %arg32[%c0_139, %c0_140] : memref<243x134xbf16, #tpu.memory_space<vmem>>, vector<243x134xbf16>
    %cst_141 = arith.constant dense<0.000000e+00> : vector<16x134xf32>
    %361 = tpu.matmul %359, %360, %cst_141 {dimension_numbers = #tpu.dot_dimension_numbers<[1], [0], [0], [1], [0, 0, 1, 1], [], []>} : vector<16x243xbf16>, vector<243x134xbf16>, vector<16x134xf32> -> vector<16x134xf32>
    %c0_142 = arith.constant 0 : index
    %c0_143 = arith.constant 0 : index
    %362 = vector.load %arg33[%c0_142, %c0_143] : memref<1x134xf32, #tpu.memory_space<vmem>>, vector<1x134xf32>
    %363 = vector.broadcast %362 : vector<1x134xf32> to vector<16x134xf32>
    %364 = arith.addf %361, %363 : vector<16x134xf32>
    %cst_144 = arith.constant 2.000000e+01 : f32
    %365 = vector.broadcast %cst_144 : f32 to vector<16x134xf32>
    %366 = arith.minimumf %364, %365 : vector<16x134xf32>
    %367 = math.exp %366 : vector<16x134xf32>
    %cst_145 = arith.constant 2.000000e+00 : f32
    %368 = vector.broadcast %cst_145 : f32 to vector<16x134xf32>
    %369 = arith.addf %367, %368 : vector<16x134xf32>
    %370 = arith.mulf %367, %369 : vector<16x134xf32>
    %cst_146 = arith.constant 2.000000e+00 : f32
    %371 = vector.broadcast %cst_146 : f32 to vector<16x134xf32>
    %372 = arith.addf %370, %371 : vector<16x134xf32>
    %373 = tpu.reciprocal %372 {approx = true} : vector<16x134xf32> -> vector<16x134xf32>
    %374 = arith.mulf %370, %373 : vector<16x134xf32>
    %cst_147 = arith.constant 2.000000e+01 : f32
    %375 = vector.broadcast %cst_147 : f32 to vector<16x134xf32>
    %376 = arith.cmpf ogt, %364, %375 : vector<16x134xf32>
    %377 = arith.mulf %364, %374 : vector<16x134xf32>
    %378 = arith.select %376, %364, %377 : vector<16x134xi1>, vector<16x134xf32>
    %379 = vector.extract_strided_slice %378 {offsets = [0, 0], sizes = [16, 38], strides = [1, 1]} : vector<16x134xf32> to vector<16x38xf32>
    %380 = arith.truncf %378 : vector<16x134xf32> to vector<16x134xbf16>
    %c0_148 = arith.constant 0 : index
    %c0_149 = arith.constant 0 : index
    %381 = vector.load %arg34[%c0_148, %c0_149] : memref<134x57xbf16, #tpu.memory_space<vmem>>, vector<134x57xbf16>
    %cst_150 = arith.constant dense<0.000000e+00> : vector<16x57xf32>
    %382 = tpu.matmul %380, %381, %cst_150 {dimension_numbers = #tpu.dot_dimension_numbers<[1], [0], [0], [1], [0, 0, 1, 1], [], []>} : vector<16x134xbf16>, vector<134x57xbf16>, vector<16x57xf32> -> vector<16x57xf32>
    %c0_151 = arith.constant 0 : index
    %c0_152 = arith.constant 0 : index
    %383 = vector.load %arg35[%c0_151, %c0_152] : memref<1x57xf32, #tpu.memory_space<vmem>>, vector<1x57xf32>
    %384 = vector.broadcast %383 : vector<1x57xf32> to vector<16x57xf32>
    %385 = arith.addf %382, %384 : vector<16x57xf32>
    %cst_153 = arith.constant 2.000000e+01 : f32
    %386 = vector.broadcast %cst_153 : f32 to vector<16x57xf32>
    %387 = arith.minimumf %385, %386 : vector<16x57xf32>
    %388 = math.exp %387 : vector<16x57xf32>
    %cst_154 = arith.constant 2.000000e+00 : f32
    %389 = vector.broadcast %cst_154 : f32 to vector<16x57xf32>
    %390 = arith.addf %388, %389 : vector<16x57xf32>
    %391 = arith.mulf %388, %390 : vector<16x57xf32>
    %cst_155 = arith.constant 2.000000e+00 : f32
    %392 = vector.broadcast %cst_155 : f32 to vector<16x57xf32>
    %393 = arith.addf %391, %392 : vector<16x57xf32>
    %394 = tpu.reciprocal %393 {approx = true} : vector<16x57xf32> -> vector<16x57xf32>
    %395 = arith.mulf %391, %394 : vector<16x57xf32>
    %cst_156 = arith.constant 2.000000e+01 : f32
    %396 = vector.broadcast %cst_156 : f32 to vector<16x57xf32>
    %397 = arith.cmpf ogt, %385, %396 : vector<16x57xf32>
    %398 = arith.mulf %385, %395 : vector<16x57xf32>
    %399 = arith.select %397, %385, %398 : vector<16x57xi1>, vector<16x57xf32>
    %400 = vector.extract_strided_slice %399 {offsets = [0, 0], sizes = [16, 25], strides = [1, 1]} : vector<16x57xf32> to vector<16x25xf32>
    %401 = arith.truncf %399 : vector<16x57xf32> to vector<16x57xbf16>
    %c0_157 = arith.constant 0 : index
    %c0_158 = arith.constant 0 : index
    %402 = vector.load %arg36[%c0_157, %c0_158] : memref<57x14xbf16, #tpu.memory_space<vmem>>, vector<57x14xbf16>
    %cst_159 = arith.constant dense<0.000000e+00> : vector<16x14xf32>
    %403 = tpu.matmul %401, %402, %cst_159 {dimension_numbers = #tpu.dot_dimension_numbers<[1], [0], [0], [1], [0, 0, 1, 1], [], []>} : vector<16x57xbf16>, vector<57x14xbf16>, vector<16x14xf32> -> vector<16x14xf32>
    %c0_160 = arith.constant 0 : index
    %c0_161 = arith.constant 0 : index
    %404 = vector.load %arg37[%c0_160, %c0_161] : memref<1x14xf32, #tpu.memory_space<vmem>>, vector<1x14xf32>
    %405 = vector.broadcast %404 : vector<1x14xf32> to vector<16x14xf32>
    %406 = arith.addf %403, %405 : vector<16x14xf32>
    %cst_162 = arith.constant 2.000000e+01 : f32
    %407 = vector.broadcast %cst_162 : f32 to vector<16x14xf32>
    %408 = arith.minimumf %406, %407 : vector<16x14xf32>
    %409 = math.exp %408 : vector<16x14xf32>
    %cst_163 = arith.constant 2.000000e+00 : f32
    %410 = vector.broadcast %cst_163 : f32 to vector<16x14xf32>
    %411 = arith.addf %409, %410 : vector<16x14xf32>
    %412 = arith.mulf %409, %411 : vector<16x14xf32>
    %cst_164 = arith.constant 2.000000e+00 : f32
    %413 = vector.broadcast %cst_164 : f32 to vector<16x14xf32>
    %414 = arith.addf %412, %413 : vector<16x14xf32>
    %415 = tpu.reciprocal %414 {approx = true} : vector<16x14xf32> -> vector<16x14xf32>
    %416 = arith.mulf %412, %415 : vector<16x14xf32>
    %cst_165 = arith.constant 2.000000e+01 : f32
    %417 = vector.broadcast %cst_165 : f32 to vector<16x14xf32>
    %418 = arith.cmpf ogt, %406, %417 : vector<16x14xf32>
    %419 = arith.mulf %406, %416 : vector<16x14xf32>
    %420 = arith.select %418, %406, %419 : vector<16x14xi1>, vector<16x14xf32>
    %c0_166 = arith.constant 0 : index
    %c0_167 = arith.constant 0 : index
    %421 = vector.load %arg6[%c0_166, %c0_167] : memref<16x1xf32, #tpu.memory_space<vmem>>, vector<16x1xf32>
    %c0_168 = arith.constant 0 : index
    %c0_169 = arith.constant 0 : index
    %422 = vector.load %arg7[%c0_168, %c0_169] : memref<16x1xf32, #tpu.memory_space<vmem>>, vector<16x1xf32>
    %cst_170 = arith.constant 2.000000e+01 : f32
    %423 = vector.broadcast %cst_170 : f32 to vector<16x51xf32>
    %424 = arith.minimumf %358, %423 : vector<16x51xf32>
    %425 = math.exp %424 : vector<16x51xf32>
    %cst_171 = arith.constant 2.000000e+00 : f32
    %426 = vector.broadcast %cst_171 : f32 to vector<16x51xf32>
    %427 = arith.addf %425, %426 : vector<16x51xf32>
    %428 = arith.mulf %425, %427 : vector<16x51xf32>
    %cst_172 = arith.constant 2.000000e+00 : f32
    %429 = vector.broadcast %cst_172 : f32 to vector<16x51xf32>
    %430 = arith.addf %428, %429 : vector<16x51xf32>
    %431 = tpu.reciprocal %430 {approx = true} : vector<16x51xf32> -> vector<16x51xf32>
    %432 = arith.mulf %428, %431 : vector<16x51xf32>
    %cst_173 = arith.constant 2.000000e+01 : f32
    %433 = vector.broadcast %cst_173 : f32 to vector<16x51xf32>
    %434 = arith.cmpf ogt, %358, %433 : vector<16x51xf32>
    %435 = arith.mulf %358, %432 : vector<16x51xf32>
    %436 = arith.select %434, %358, %435 : vector<16x51xi1>, vector<16x51xf32>
    %437 = vector.broadcast %421 : vector<16x1xf32> to vector<16x51xf32>
    %438 = arith.mulf %437, %436 : vector<16x51xf32>
    %439 = vector.broadcast %422 : vector<16x1xf32> to vector<16x51xf32>
    %440 = arith.addf %438, %439 : vector<16x51xf32>
    %441 = arith.truncf %440 : vector<16x51xf32> to vector<16x51xbf16>
    %cst_174 = arith.constant 2.000000e+01 : f32
    %442 = vector.broadcast %cst_174 : f32 to vector<16x38xf32>
    %443 = arith.minimumf %379, %442 : vector<16x38xf32>
    %444 = math.exp %443 : vector<16x38xf32>
    %cst_175 = arith.constant 2.000000e+00 : f32
    %445 = vector.broadcast %cst_175 : f32 to vector<16x38xf32>
    %446 = arith.addf %444, %445 : vector<16x38xf32>
    %447 = arith.mulf %444, %446 : vector<16x38xf32>
    %cst_176 = arith.constant 2.000000e+00 : f32
    %448 = vector.broadcast %cst_176 : f32 to vector<16x38xf32>
    %449 = arith.addf %447, %448 : vector<16x38xf32>
    %450 = tpu.reciprocal %449 {approx = true} : vector<16x38xf32> -> vector<16x38xf32>
    %451 = arith.mulf %447, %450 : vector<16x38xf32>
    %cst_177 = arith.constant 2.000000e+01 : f32
    %452 = vector.broadcast %cst_177 : f32 to vector<16x38xf32>
    %453 = arith.cmpf ogt, %379, %452 : vector<16x38xf32>
    %454 = arith.mulf %379, %451 : vector<16x38xf32>
    %455 = arith.select %453, %379, %454 : vector<16x38xi1>, vector<16x38xf32>
    %456 = vector.broadcast %421 : vector<16x1xf32> to vector<16x38xf32>
    %457 = arith.mulf %456, %455 : vector<16x38xf32>
    %458 = vector.broadcast %422 : vector<16x1xf32> to vector<16x38xf32>
    %459 = arith.addf %457, %458 : vector<16x38xf32>
    %460 = arith.truncf %459 : vector<16x38xf32> to vector<16x38xbf16>
    %cst_178 = arith.constant 2.000000e+01 : f32
    %461 = vector.broadcast %cst_178 : f32 to vector<16x25xf32>
    %462 = arith.minimumf %400, %461 : vector<16x25xf32>
    %463 = math.exp %462 : vector<16x25xf32>
    %cst_179 = arith.constant 2.000000e+00 : f32
    %464 = vector.broadcast %cst_179 : f32 to vector<16x25xf32>
    %465 = arith.addf %463, %464 : vector<16x25xf32>
    %466 = arith.mulf %463, %465 : vector<16x25xf32>
    %cst_180 = arith.constant 2.000000e+00 : f32
    %467 = vector.broadcast %cst_180 : f32 to vector<16x25xf32>
    %468 = arith.addf %466, %467 : vector<16x25xf32>
    %469 = tpu.reciprocal %468 {approx = true} : vector<16x25xf32> -> vector<16x25xf32>
    %470 = arith.mulf %466, %469 : vector<16x25xf32>
    %cst_181 = arith.constant 2.000000e+01 : f32
    %471 = vector.broadcast %cst_181 : f32 to vector<16x25xf32>
    %472 = arith.cmpf ogt, %400, %471 : vector<16x25xf32>
    %473 = arith.mulf %400, %470 : vector<16x25xf32>
    %474 = arith.select %472, %400, %473 : vector<16x25xi1>, vector<16x25xf32>
    %475 = vector.broadcast %421 : vector<16x1xf32> to vector<16x25xf32>
    %476 = arith.mulf %475, %474 : vector<16x25xf32>
    %477 = vector.broadcast %422 : vector<16x1xf32> to vector<16x25xf32>
    %478 = arith.addf %476, %477 : vector<16x25xf32>
    %479 = arith.truncf %478 : vector<16x25xf32> to vector<16x25xbf16>
    %cst_182 = arith.constant 2.000000e+01 : f32
    %480 = vector.broadcast %cst_182 : f32 to vector<16x14xf32>
    %481 = arith.minimumf %420, %480 : vector<16x14xf32>
    %482 = math.exp %481 : vector<16x14xf32>
    %cst_183 = arith.constant 2.000000e+00 : f32
    %483 = vector.broadcast %cst_183 : f32 to vector<16x14xf32>
    %484 = arith.addf %482, %483 : vector<16x14xf32>
    %485 = arith.mulf %482, %484 : vector<16x14xf32>
    %cst_184 = arith.constant 2.000000e+00 : f32
    %486 = vector.broadcast %cst_184 : f32 to vector<16x14xf32>
    %487 = arith.addf %485, %486 : vector<16x14xf32>
    %488 = tpu.reciprocal %487 {approx = true} : vector<16x14xf32> -> vector<16x14xf32>
    %489 = arith.mulf %485, %488 : vector<16x14xf32>
    %cst_185 = arith.constant 2.000000e+01 : f32
    %490 = vector.broadcast %cst_185 : f32 to vector<16x14xf32>
    %491 = arith.cmpf ogt, %420, %490 : vector<16x14xf32>
    %492 = arith.mulf %420, %489 : vector<16x14xf32>
    %493 = arith.select %491, %420, %492 : vector<16x14xi1>, vector<16x14xf32>
    %494 = vector.broadcast %421 : vector<16x1xf32> to vector<16x14xf32>
    %495 = arith.mulf %494, %493 : vector<16x14xf32>
    %496 = vector.broadcast %422 : vector<16x1xf32> to vector<16x14xf32>
    %497 = arith.addf %495, %496 : vector<16x14xf32>
    %498 = arith.truncf %497 : vector<16x14xf32> to vector<16x14xbf16>
    %c0_186 = arith.constant 0 : index
    %c0_187 = arith.constant 0 : index
    %499 = vector.load %arg38[%c0_186, %c0_187] : memref<51x4xbf16, #tpu.memory_space<vmem>>, vector<51x4xbf16>
    %cst_188 = arith.constant dense<0.000000e+00> : vector<16x4xf32>
    %500 = tpu.matmul %441, %499, %cst_188 {dimension_numbers = #tpu.dot_dimension_numbers<[1], [0], [0], [1], [0, 0, 1, 1], [], []>} : vector<16x51xbf16>, vector<51x4xbf16>, vector<16x4xf32> -> vector<16x4xf32>
    %c0_189 = arith.constant 0 : index
    %c0_190 = arith.constant 0 : index
    %501 = vector.load %arg39[%c0_189, %c0_190] : memref<38x4xbf16, #tpu.memory_space<vmem>>, vector<38x4xbf16>
    %cst_191 = arith.constant dense<0.000000e+00> : vector<16x4xf32>
    %502 = tpu.matmul %460, %501, %cst_191 {dimension_numbers = #tpu.dot_dimension_numbers<[1], [0], [0], [1], [0, 0, 1, 1], [], []>} : vector<16x38xbf16>, vector<38x4xbf16>, vector<16x4xf32> -> vector<16x4xf32>
    %503 = arith.addf %500, %502 : vector<16x4xf32>
    %c0_192 = arith.constant 0 : index
    %c0_193 = arith.constant 0 : index
    %504 = vector.load %arg40[%c0_192, %c0_193] : memref<25x4xbf16, #tpu.memory_space<vmem>>, vector<25x4xbf16>
    %cst_194 = arith.constant dense<0.000000e+00> : vector<16x4xf32>
    %505 = tpu.matmul %479, %504, %cst_194 {dimension_numbers = #tpu.dot_dimension_numbers<[1], [0], [0], [1], [0, 0, 1, 1], [], []>} : vector<16x25xbf16>, vector<25x4xbf16>, vector<16x4xf32> -> vector<16x4xf32>
    %506 = arith.addf %503, %505 : vector<16x4xf32>
    %c0_195 = arith.constant 0 : index
    %c0_196 = arith.constant 0 : index
    %507 = vector.load %arg41[%c0_195, %c0_196] : memref<14x4xbf16, #tpu.memory_space<vmem>>, vector<14x4xbf16>
    %cst_197 = arith.constant dense<0.000000e+00> : vector<16x4xf32>
    %508 = tpu.matmul %498, %507, %cst_197 {dimension_numbers = #tpu.dot_dimension_numbers<[1], [0], [0], [1], [0, 0, 1, 1], [], []>} : vector<16x14xbf16>, vector<14x4xbf16>, vector<16x4xf32> -> vector<16x4xf32>
    %509 = arith.addf %506, %508 : vector<16x4xf32>
    %c0_198 = arith.constant 0 : index
    %c0_199 = arith.constant 0 : index
    %510 = vector.load %arg42[%c0_198, %c0_199] : memref<1x4xf32, #tpu.memory_space<vmem>>, vector<1x4xf32>
    %511 = vector.broadcast %510 : vector<1x4xf32> to vector<16x4xf32>
    %512 = arith.addf %509, %511 : vector<16x4xf32>
    %cst_200 = arith.constant 0.000000e+00 : f32
    %513 = vector.broadcast %cst_200 : f32 to vector<16x4xf32>
    %514 = arith.subf %513, %512 : vector<16x4xf32>
    %cst_201 = arith.constant 3.000000e+01 : f32
    %515 = vector.broadcast %cst_201 : f32 to vector<16x4xf32>
    %516 = arith.minimumf %514, %515 : vector<16x4xf32>
    %517 = math.exp %516 : vector<16x4xf32>
    %cst_202 = arith.constant 1.000000e+00 : f32
    %518 = vector.broadcast %cst_202 : f32 to vector<16x4xf32>
    %519 = arith.addf %518, %517 : vector<16x4xf32>
    %520 = tpu.reciprocal %519 {approx = true} : vector<16x4xf32> -> vector<16x4xf32>
    %c0_203 = arith.constant 0 : index
    %c0_204 = arith.constant 0 : index
    %521 = vector.load %arg43[%c0_203, %c0_204] : memref<16x4xf32, #tpu.memory_space<vmem>>, vector<16x4xf32>
    tpu.vector_store %arg43[%c0_203, %c0_204], %520 {strides = array<i32>} : memref<16x4xf32, #tpu.memory_space<vmem>>, vector<16x4xf32>,
    return
  }
  func.func @transform_0(%arg0: i32) -> (i32, i32) {
    %c0_i32 = arith.constant 0 : i32
    %c0_i32_0 = arith.constant 0 : i32
    return %arg0, %c0_i32 : i32, i32
  }
  func.func @transform_1(%arg0: i32) -> (i32, i32) {
    %c0_i32 = arith.constant 0 : i32
    %c0_i32_0 = arith.constant 0 : i32
    %c0_i32_1 = arith.constant 0 : i32
    return %c0_i32, %c0_i32_0 : i32, i32
  }
  func.func @transform_2(%arg0: i32) -> (i32, i32) {
    %c0_i32 = arith.constant 0 : i32
    %c0_i32_0 = arith.constant 0 : i32
    %c0_i32_1 = arith.constant 0 : i32
    return %c0_i32, %c0_i32_0 : i32, i32
  }
  func.func @transform_3(%arg0: i32) -> (i32, i32) {
    %c0_i32 = arith.constant 0 : i32
    %c0_i32_0 = arith.constant 0 : i32
    %c0_i32_1 = arith.constant 0 : i32
    return %c0_i32, %c0_i32_0 : i32, i32
  }
  func.func @transform_4(%arg0: i32) -> (i32, i32) {
    %c0_i32 = arith.constant 0 : i32
    %c0_i32_0 = arith.constant 0 : i32
    %c0_i32_1 = arith.constant 0 : i32
    return %c0_i32, %c0_i32_0 : i32, i32
  }
  func.func @transform_5(%arg0: i32) -> (i32, i32) {
    %c0_i32 = arith.constant 0 : i32
    %c0_i32_0 = arith.constant 0 : i32
    %c0_i32_1 = arith.constant 0 : i32
    return %c0_i32, %c0_i32_0 : i32, i32
  }
  func.func @transform_6(%arg0: i32) -> (i32, i32) {
    %c0_i32 = arith.constant 0 : i32
    %c0_i32_0 = arith.constant 0 : i32
    %c0_i32_1 = arith.constant 0 : i32
    return %c0_i32, %c0_i32_0 : i32, i32
  }
  func.func @transform_7(%arg0: i32) -> (i32, i32) {
    %c0_i32 = arith.constant 0 : i32
    %c0_i32_0 = arith.constant 0 : i32
    %c0_i32_1 = arith.constant 0 : i32
    return %c0_i32, %c0_i32_0 : i32, i32
  }
  func.func @transform_8(%arg0: i32) -> (i32, i32) {
    %c0_i32 = arith.constant 0 : i32
    %c0_i32_0 = arith.constant 0 : i32
    %c0_i32_1 = arith.constant 0 : i32
    return %c0_i32, %c0_i32_0 : i32, i32
  }
  func.func @transform_9(%arg0: i32) -> (i32, i32) {
    %c0_i32 = arith.constant 0 : i32
    %c0_i32_0 = arith.constant 0 : i32
    %c0_i32_1 = arith.constant 0 : i32
    return %c0_i32, %c0_i32_0 : i32, i32
  }
  func.func @transform_10(%arg0: i32) -> (i32, i32) {
    %c0_i32 = arith.constant 0 : i32
    %c0_i32_0 = arith.constant 0 : i32
    %c0_i32_1 = arith.constant 0 : i32
    return %c0_i32, %c0_i32_0 : i32, i32
  }
  func.func @transform_11(%arg0: i32) -> (i32, i32) {
    %c0_i32 = arith.constant 0 : i32
    %c0_i32_0 = arith.constant 0 : i32
    %c0_i32_1 = arith.constant 0 : i32
    return %c0_i32, %c0_i32_0 : i32, i32
  }
  func.func @transform_12(%arg0: i32) -> (i32, i32) {
    %c0_i32 = arith.constant 0 : i32
    %c0_i32_0 = arith.constant 0 : i32
    %c0_i32_1 = arith.constant 0 : i32
    return %c0_i32, %c0_i32_0 : i32, i32
  }
  func.func @transform_13(%arg0: i32) -> (i32, i32) {
    %c0_i32 = arith.constant 0 : i32
    %c0_i32_0 = arith.constant 0 : i32
    %c0_i32_1 = arith.constant 0 : i32
    return %c0_i32, %c0_i32_0 : i32, i32
  }
  func.func @transform_14(%arg0: i32) -> (i32, i32) {
    %c0_i32 = arith.constant 0 : i32
    %c0_i32_0 = arith.constant 0 : i32
    %c0_i32_1 = arith.constant 0 : i32
    return %c0_i32, %c0_i32_0 : i32, i32
  }
  func.func @transform_15(%arg0: i32) -> (i32, i32) {
    %c0_i32 = arith.constant 0 : i32
    %c0_i32_0 = arith.constant 0 : i32
    %c0_i32_1 = arith.constant 0 : i32
    return %c0_i32, %c0_i32_0 : i32, i32
  }
  func.func @transform_16(%arg0: i32) -> (i32, i32) {
    %c0_i32 = arith.constant 0 : i32
    %c0_i32_0 = arith.constant 0 : i32
    %c0_i32_1 = arith.constant 0 : i32
    return %c0_i32, %c0_i32_0 : i32, i32
  }
  func.func @transform_17(%arg0: i32) -> (i32, i32) {
    %c0_i32 = arith.constant 0 : i32
    %c0_i32_0 = arith.constant 0 : i32
    %c0_i32_1 = arith.constant 0 : i32
    return %c0_i32, %c0_i32_0 : i32, i32
  }
  func.func @transform_18(%arg0: i32) -> (i32, i32) {
    %c0_i32 = arith.constant 0 : i32
    %c0_i32_0 = arith.constant 0 : i32
    %c0_i32_1 = arith.constant 0 : i32
    return %c0_i32, %c0_i32_0 : i32, i32
  }
  func.func @transform_19(%arg0: i32) -> (i32, i32) {
    %c0_i32 = arith.constant 0 : i32
    %c0_i32_0 = arith.constant 0 : i32
    %c0_i32_1 = arith.constant 0 : i32
    return %c0_i32, %c0_i32_0 : i32, i32
  }
  func.func @transform_20(%arg0: i32) -> (i32, i32) {
    %c0_i32 = arith.constant 0 : i32
    %c0_i32_0 = arith.constant 0 : i32
    %c0_i32_1 = arith.constant 0 : i32
    return %c0_i32, %c0_i32_0 : i32, i32
  }
  func.func @transform_21(%arg0: i32) -> (i32, i32) {
    %c0_i32 = arith.constant 0 : i32
    %c0_i32_0 = arith.constant 0 : i32
    %c0_i32_1 = arith.constant 0 : i32
    return %c0_i32, %c0_i32_0 : i32, i32
  }
  func.func @transform_22(%arg0: i32) -> (i32, i32) {
    %c0_i32 = arith.constant 0 : i32
    %c0_i32_0 = arith.constant 0 : i32
    %c0_i32_1 = arith.constant 0 : i32
    return %c0_i32, %c0_i32_0 : i32, i32
  }
  func.func @transform_23(%arg0: i32) -> (i32, i32) {
    %c0_i32 = arith.constant 0 : i32
    %c0_i32_0 = arith.constant 0 : i32
    %c0_i32_1 = arith.constant 0 : i32
    return %c0_i32, %c0_i32_0 : i32, i32
  }
  func.func @transform_24(%arg0: i32) -> (i32, i32) {
    %c0_i32 = arith.constant 0 : i32
    %c0_i32_0 = arith.constant 0 : i32
    %c0_i32_1 = arith.constant 0 : i32
    return %c0_i32, %c0_i32_0 : i32, i32
  }
  func.func @transform_25(%arg0: i32) -> (i32, i32) {
    %c0_i32 = arith.constant 0 : i32
    %c0_i32_0 = arith.constant 0 : i32
    %c0_i32_1 = arith.constant 0 : i32
    return %c0_i32, %c0_i32_0 : i32, i32
  }
  func.func @transform_26(%arg0: i32) -> (i32, i32) {
    %c0_i32 = arith.constant 0 : i32
    %c0_i32_0 = arith.constant 0 : i32
    %c0_i32_1 = arith.constant 0 : i32
    return %c0_i32, %c0_i32_0 : i32, i32
  }
  func.func @transform_27(%arg0: i32) -> (i32, i32) {
    %c0_i32 = arith.constant 0 : i32
    %c0_i32_0 = arith.constant 0 : i32
    %c0_i32_1 = arith.constant 0 : i32
    return %c0_i32, %c0_i32_0 : i32, i32
  }
  func.func @transform_28(%arg0: i32) -> (i32, i32) {
    %c0_i32 = arith.constant 0 : i32
    %c0_i32_0 = arith.constant 0 : i32
    %c0_i32_1 = arith.constant 0 : i32
    return %c0_i32, %c0_i32_0 : i32, i32
  }
  func.func @transform_29(%arg0: i32) -> (i32, i32) {
    %c0_i32 = arith.constant 0 : i32
    %c0_i32_0 = arith.constant 0 : i32
    %c0_i32_1 = arith.constant 0 : i32
    return %c0_i32, %c0_i32_0 : i32, i32
  }
  func.func @transform_30(%arg0: i32) -> (i32, i32) {
    %c0_i32 = arith.constant 0 : i32
    %c0_i32_0 = arith.constant 0 : i32
    %c0_i32_1 = arith.constant 0 : i32
    return %c0_i32, %c0_i32_0 : i32, i32
  }
  func.func @transform_31(%arg0: i32) -> (i32, i32) {
    %c0_i32 = arith.constant 0 : i32
    %c0_i32_0 = arith.constant 0 : i32
    %c0_i32_1 = arith.constant 0 : i32
    return %c0_i32, %c0_i32_0 : i32, i32
  }
  func.func @transform_32(%arg0: i32) -> (i32, i32) {
    %c0_i32 = arith.constant 0 : i32
    %c0_i32_0 = arith.constant 0 : i32
    %c0_i32_1 = arith.constant 0 : i32
    return %c0_i32, %c0_i32_0 : i32, i32
  }
  func.func @transform_33(%arg0: i32) -> (i32, i32) {
    %c0_i32 = arith.constant 0 : i32
    %c0_i32_0 = arith.constant 0 : i32
    %c0_i32_1 = arith.constant 0 : i32
    return %c0_i32, %c0_i32_0 : i32, i32
  }
  func.func @transform_34(%arg0: i32) -> (i32, i32) {
    %c0_i32 = arith.constant 0 : i32
    %c0_i32_0 = arith.constant 0 : i32
    %c0_i32_1 = arith.constant 0 : i32
    return %c0_i32, %c0_i32_0 : i32, i32
  }
  func.func @transform_35(%arg0: i32) -> (i32, i32) {
    %c0_i32 = arith.constant 0 : i32
    %c0_i32_0 = arith.constant 0 : i32
    %c0_i32_1 = arith.constant 0 : i32
    return %c0_i32, %c0_i32_0 : i32, i32
  }
  func.func @transform_36(%arg0: i32) -> (i32, i32) {
    %c0_i32 = arith.constant 0 : i32
    %c0_i32_0 = arith.constant 0 : i32
    %c0_i32_1 = arith.constant 0 : i32
    return %c0_i32, %c0_i32_0 : i32, i32
  }
  func.func @transform_37(%arg0: i32) -> (i32, i32) {
    %c0_i32 = arith.constant 0 : i32
    %c0_i32_0 = arith.constant 0 : i32
    %c0_i32_1 = arith.constant 0 : i32
    return %c0_i32, %c0_i32_0 : i32, i32
  }
  func.func @transform_38(%arg0: i32) -> (i32, i32) {
    %c0_i32 = arith.constant 0 : i32
    %c0_i32_0 = arith.constant 0 : i32
    %c0_i32_1 = arith.constant 0 : i32
    return %c0_i32, %c0_i32_0 : i32, i32
  }
  func.func @transform_39(%arg0: i32) -> (i32, i32) {
    %c0_i32 = arith.constant 0 : i32
    %c0_i32_0 = arith.constant 0 : i32
    %c0_i32_1 = arith.constant 0 : i32
    return %c0_i32, %c0_i32_0 : i32, i32
  }
  func.func @transform_40(%arg0: i32) -> (i32, i32) {
    %c0_i32 = arith.constant 0 : i32
    %c0_i32_0 = arith.constant 0 : i32
    %c0_i32_1 = arith.constant 0 : i32
    return %c0_i32, %c0_i32_0 : i32, i32
  }
  func.func @transform_41(%arg0: i32) -> (i32, i32) {
    %c0_i32 = arith.constant 0 : i32
    %c0_i32_0 = arith.constant 0 : i32
    %c0_i32_1 = arith.constant 0 : i32
    return %c0_i32, %c0_i32_0 : i32, i32
  }
  func.func @transform_42(%arg0: i32) -> (i32, i32) {
    %c0_i32 = arith.constant 0 : i32
    %c0_i32_0 = arith.constant 0 : i32
    return %arg0, %c0_i32 : i32, i32
  }
}

</mosaic_0001>

<llo_original>
// kernel: tpu_custom_call.1
$region0: #{tpu_custom_call.1}
  #allocation0 [shape = 'u32[]', space=smem, size = 0x4, offset = 0x4, fixed_abs, tag = 'smem constant byte address 0x4 - core index']
  #allocation1 [shape = 'u32[144,128]{1,0:T(1,128)}', space=vmem, size = 0x12000, scoped, tag = 'internal scratch']
  %s0 = inlined_call_operand.smem [shape: u32[43], index: -1, kind: input, shape index: {}]
  %s1 = sld [smem:[%s0]]
  %s2 = scalar_lea.smem %s0, 1
  %s3 = sld [smem:[%s2]]
  %s4 = scalar_lea.smem %s0, 2
  %s5 = sld [smem:[%s4]]
  %s6 = scalar_lea.smem %s0, 3
  %s7 = sld [smem:[%s6]]
  %s8 = scalar_lea.smem %s0, 4
  %s9 = sld [smem:[%s8]]
  %s10 = scalar_lea.smem %s0, 5
  %s11 = sld [smem:[%s10]]
  %s12 = scalar_lea.smem %s0, 6
  %s13 = sld [smem:[%s12]]
  %s14 = scalar_lea.smem %s0, 7
  %s15 = sld [smem:[%s14]]
  %s16 = scalar_lea.smem %s0, 8
  %s17 = sld [smem:[%s16]]
  %s18 = scalar_lea.smem %s0, 9
  %s19 = sld [smem:[%s18]]
  %s20 = scalar_lea.smem %s0, 10
  %s21 = sld [smem:[%s20]]
  %s22 = scalar_lea.smem %s0, 11
  %s23 = sld [smem:[%s22]]
  %s24 = scalar_lea.smem %s0, 12
  %s25 = sld [smem:[%s24]]
  %s26 = scalar_lea.smem %s0, 13
  %s27 = sld [smem:[%s26]]
  %s28 = scalar_lea.smem %s0, 14
  %s29 = sld [smem:[%s28]]
  %s30 = scalar_lea.smem %s0, 15
  %s31 = sld [smem:[%s30]]
  %s32 = scalar_lea.smem %s0, 16
  %s33 = sld [smem:[%s32]]
  %s34 = scalar_lea.smem %s0, 17
  %s35 = sld [smem:[%s34]]
  %s36 = scalar_lea.smem %s0, 18
  %s37 = sld [smem:[%s36]]
  %s38 = scalar_lea.smem %s0, 19
  %s39 = sld [smem:[%s38]]
  %s40 = scalar_lea.smem %s0, 20
  %s41 = sld [smem:[%s40]]
  %s42 = scalar_lea.smem %s0, 21
  %s43 = sld [smem:[%s42]]
  %s44 = scalar_lea.smem %s0, 22
  %s45 = sld [smem:[%s44]]
  %s46 = scalar_lea.smem %s0, 23
  %s47 = sld [smem:[%s46]]
  %s48 = scalar_lea.smem %s0, 24
  %s49 = sld [smem:[%s48]]
  %s50 = scalar_lea.smem %s0, 25
  %s51 = sld [smem:[%s50]]
  %s52 = scalar_lea.smem %s0, 26
  %s53 = sld [smem:[%s52]]
  %s54 = scalar_lea.smem %s0, 27
  %s55 = sld [smem:[%s54]]
  %s56 = scalar_lea.smem %s0, 28
  %s57 = sld [smem:[%s56]]
  %s58 = scalar_lea.smem %s0, 29
  %s59 = sld [smem:[%s58]]
  %s60 = scalar_lea.smem %s0, 30
  %s61 = sld [smem:[%s60]]
  %s62 = scalar_lea.smem %s0, 31
  %s63 = sld [smem:[%s62]]
  %s64 = scalar_lea.smem %s0, 32
  %s65 = sld [smem:[%s64]]
  %s66 = scalar_lea.smem %s0, 33
  %s67 = sld [smem:[%s66]]
  %s68 = scalar_lea.smem %s0, 34
  %s69 = sld [smem:[%s68]]
  %s70 = scalar_lea.smem %s0, 35
  %s71 = sld [smem:[%s70]]
  %s72 = scalar_lea.smem %s0, 36
  %s73 = sld [smem:[%s72]]
  %s74 = scalar_lea.smem %s0, 37
  %s75 = sld [smem:[%s74]]
  %s76 = scalar_lea.smem %s0, 38
  %s77 = sld [smem:[%s76]]
  %s78 = scalar_lea.smem %s0, 39
  %s79 = sld [smem:[%s78]]
  %s80 = scalar_lea.smem %s0, 40
  %s81 = sld [smem:[%s80]]
  %s82 = scalar_lea.smem %s0, 41
  %s83 = sld [smem:[%s82]]
  %s84 = scalar_lea.smem %s0, 42
  %s85 = sld [smem:[%s84]]
  %s86 = sld [smem:[#allocation0]]
  $region178: #{tpu_custom_call.1} parent=0
    _
  %s88 = ssub.s32 1, %s86
  %s89 = scalar_select 0, %s88, %s86
  // Predicated region
  $region2: #{tpu_custom_call.1} parent=0 // pred_check
    _
  $region3: #{tpu_custom_call.1} parent=0 // pred_check_branch
    %91 = sbr.rel (0) target = $region5
  $region4: #{tpu_custom_call.1} parent=0 // pred_region
    _
  $region5: #{tpu_custom_call.1} parent=0 // pred_fallthru
    _
  // Predicated region
  $region6: #{tpu_custom_call.1} parent=0 // pred_check
    _
  $region7: #{tpu_custom_call.1} parent=0 // pred_check_branch
    %93 = sbr.rel (0) target = $region9
  $region8: #{tpu_custom_call.1} parent=0 // pred_region
    _
  $region9: #{tpu_custom_call.1} parent=0 // pred_fallthru
    _
  // Predicated region
  $region10: #{tpu_custom_call.1} parent=0 // pred_check
    _
  $region11: #{tpu_custom_call.1} parent=0 // pred_check_branch
    %95 = sbr.rel (0) target = $region13
  $region12: #{tpu_custom_call.1} parent=0 // pred_region
    _
  $region13: #{tpu_custom_call.1} parent=0 // pred_fallthru
    _
  // Predicated region
  $region14: #{tpu_custom_call.1} parent=0 // pred_check
    _
  $region15: #{tpu_custom_call.1} parent=0 // pred_check_branch
    %97 = sbr.rel (0) target = $region17
  $region16: #{tpu_custom_call.1} parent=0 // pred_region
    _
  $region17: #{tpu_custom_call.1} parent=0 // pred_fallthru
    _
  // Predicated region
  $region18: #{tpu_custom_call.1} parent=0 // pred_check
    _
  $region19: #{tpu_custom_call.1} parent=0 // pred_check_branch
    %99 = sbr.rel (0) target = $region21
  $region20: #{tpu_custom_call.1} parent=0 // pred_region
    _
  $region21: #{tpu_custom_call.1} parent=0 // pred_fallthru
    _
  // Predicated region
  $region22: #{tpu_custom_call.1} parent=0 // pred_check
    _
  $region23: #{tpu_custom_call.1} parent=0 // pred_check_branch
    %101 = sbr.rel (0) target = $region25
  $region24: #{tpu_custom_call.1} parent=0 // pred_region
    _
  $region25: #{tpu_custom_call.1} parent=0 // pred_fallthru
    _
  // Predicated region
  $region26: #{tpu_custom_call.1} parent=0 // pred_check
    _
  $region27: #{tpu_custom_call.1} parent=0 // pred_check_branch
    %103 = sbr.rel (0) target = $region29
  $region28: #{tpu_custom_call.1} parent=0 // pred_region
    _
  $region29: #{tpu_custom_call.1} parent=0 // pred_fallthru
    _
  // Predicated region
  $region30: #{tpu_custom_call.1} parent=0 // pred_check
    _
  $region31: #{tpu_custom_call.1} parent=0 // pred_check_branch
    %105 = sbr.rel (0) target = $region33
  $region32: #{tpu_custom_call.1} parent=0 // pred_region
    _
  $region33: #{tpu_custom_call.1} parent=0 // pred_fallthru
    _
  // Predicated region
  $region34: #{tpu_custom_call.1} parent=0 // pred_check
    _
  $region35: #{tpu_custom_call.1} parent=0 // pred_check_branch
    %107 = sbr.rel (0) target = $region37
  $region36: #{tpu_custom_call.1} parent=0 // pred_region
    _
  $region37: #{tpu_custom_call.1} parent=0 // pred_fallthru
    _
  // Predicated region
  $region38: #{tpu_custom_call.1} parent=0 // pred_check
    _
  $region39: #{tpu_custom_call.1} parent=0 // pred_check_branch
    %109 = sbr.rel (0) target = $region41
  $region40: #{tpu_custom_call.1} parent=0 // pred_region
    _
  $region41: #{tpu_custom_call.1} parent=0 // pred_fallthru
    _
  // Predicated region
  $region42: #{tpu_custom_call.1} parent=0 // pred_check
    _
  $region43: #{tpu_custom_call.1} parent=0 // pred_check_branch
    %111 = sbr.rel (0) target = $region45
  $region44: #{tpu_custom_call.1} parent=0 // pred_region
    _
  $region45: #{tpu_custom_call.1} parent=0 // pred_fallthru
    _
  // Predicated region
  $region46: #{tpu_custom_call.1} parent=0 // pred_check
    _
  $region47: #{tpu_custom_call.1} parent=0 // pred_check_branch
    %113 = sbr.rel (0) target = $region49
  $region48: #{tpu_custom_call.1} parent=0 // pred_region
    _
  $region49: #{tpu_custom_call.1} parent=0 // pred_fallthru
    _
  // Predicated region
  $region50: #{tpu_custom_call.1} parent=0 // pred_check
    _
  $region51: #{tpu_custom_call.1} parent=0 // pred_check_branch
    %115 = sbr.rel (0) target = $region53
  $region52: #{tpu_custom_call.1} parent=0 // pred_region
    _
  $region53: #{tpu_custom_call.1} parent=0 // pred_fallthru
    _
  // Predicated region
  $region54: #{tpu_custom_call.1} parent=0 // pred_check
    _
  $region55: #{tpu_custom_call.1} parent=0 // pred_check_branch
    %117 = sbr.rel (0) target = $region57
  $region56: #{tpu_custom_call.1} parent=0 // pred_region
    _
  $region57: #{tpu_custom_call.1} parent=0 // pred_fallthru
    _
  // Predicated region
  $region58: #{tpu_custom_call.1} parent=0 // pred_check
    _
  $region59: #{tpu_custom_call.1} parent=0 // pred_check_branch
    %119 = sbr.rel (0) target = $region61
  $region60: #{tpu_custom_call.1} parent=0 // pred_region
    _
  $region61: #{tpu_custom_call.1} parent=0 // pred_fallthru
    _
  // Predicated region
  $region62: #{tpu_custom_call.1} parent=0 // pred_check
    _
  $region63: #{tpu_custom_call.1} parent=0 // pred_check_branch
    %121 = sbr.rel (0) target = $region65
  $region64: #{tpu_custom_call.1} parent=0 // pred_region
    _
  $region65: #{tpu_custom_call.1} parent=0 // pred_fallthru
    _
  // Predicated region
  $region66: #{tpu_custom_call.1} parent=0 // pred_check
    _
  $region67: #{tpu_custom_call.1} parent=0 // pred_check_branch
    %123 = sbr.rel (0) target = $region69
  $region68: #{tpu_custom_call.1} parent=0 // pred_region
    _
  $region69: #{tpu_custom_call.1} parent=0 // pred_fallthru
    _
  // Predicated region
  $region70: #{tpu_custom_call.1} parent=0 // pred_check
    _
  $region71: #{tpu_custom_call.1} parent=0 // pred_check_branch
    %125 = sbr.rel (0) target = $region73
  $region72: #{tpu_custom_call.1} parent=0 // pred_region
    _
  $region73: #{tpu_custom_call.1} parent=0 // pred_fallthru
    _
  // Predicated region
  $region74: #{tpu_custom_call.1} parent=0 // pred_check
    _
  $region75: #{tpu_custom_call.1} parent=0 // pred_check_branch
    %127 = sbr.rel (0) target = $region77
  $region76: #{tpu_custom_call.1} parent=0 // pred_region
    _
  $region77: #{tpu_custom_call.1} parent=0 // pred_fallthru
    _
  // Predicated region
  $region78: #{tpu_custom_call.1} parent=0 // pred_check
    _
  $region79: #{tpu_custom_call.1} parent=0 // pred_check_branch
    %129 = sbr.rel (0) target = $region81
  $region80: #{tpu_custom_call.1} parent=0 // pred_region
    _
  $region81: #{tpu_custom_call.1} parent=0 // pred_fallthru
    _
  // Predicated region
  $region82: #{tpu_custom_call.1} parent=0 // pred_check
    _
  $region83: #{tpu_custom_call.1} parent=0 // pred_check_branch
    %131 = sbr.rel (0) target = $region85
  $region84: #{tpu_custom_call.1} parent=0 // pred_region
    _
  $region85: #{tpu_custom_call.1} parent=0 // pred_fallthru
    _
  // Predicated region
  $region86: #{tpu_custom_call.1} parent=0 // pred_check
    _
  $region87: #{tpu_custom_call.1} parent=0 // pred_check_branch
    %133 = sbr.rel (0) target = $region89
  $region88: #{tpu_custom_call.1} parent=0 // pred_region
    _
  $region89: #{tpu_custom_call.1} parent=0 // pred_fallthru
    _
  // Predicated region
  $region90: #{tpu_custom_call.1} parent=0 // pred_check
    _
  $region91: #{tpu_custom_call.1} parent=0 // pred_check_branch
    %135 = sbr.rel (0) target = $region93
  $region92: #{tpu_custom_call.1} parent=0 // pred_region
    _
  $region93: #{tpu_custom_call.1} parent=0 // pred_fallthru
    _
  // Predicated region
  $region94: #{tpu_custom_call.1} parent=0 // pred_check
    _
  $region95: #{tpu_custom_call.1} parent=0 // pred_check_branch
    %137 = sbr.rel (0) target = $region97
  $region96: #{tpu_custom_call.1} parent=0 // pred_region
    _
  $region97: #{tpu_custom_call.1} parent=0 // pred_fallthru
    _
  // Predicated region
  $region98: #{tpu_custom_call.1} parent=0 // pred_check
    _
  $region99: #{tpu_custom_call.1} parent=0 // pred_check_branch
    %139 = sbr.rel (0) target = $region101
  $region100: #{tpu_custom_call.1} parent=0 // pred_region
    _
  $region101: #{tpu_custom_call.1} parent=0 // pred_fallthru
    _
  // Predicated region
  $region102: #{tpu_custom_call.1} parent=0 // pred_check
    _
  $region103: #{tpu_custom_call.1} parent=0 // pred_check_branch
    %141 = sbr.rel (0) target = $region105
  $region104: #{tpu_custom_call.1} parent=0 // pred_region
    _
  $region105: #{tpu_custom_call.1} parent=0 // pred_fallthru
    _
  // Predicated region
  $region106: #{tpu_custom_call.1} parent=0 // pred_check
    _
  $region107: #{tpu_custom_call.1} parent=0 // pred_check_branch
    %143 = sbr.rel (0) target = $region109
  $region108: #{tpu_custom_call.1} parent=0 // pred_region
    _
  $region109: #{tpu_custom_call.1} parent=0 // pred_fallthru
    _
  // Predicated region
  $region110: #{tpu_custom_call.1} parent=0 // pred_check
    _
  $region111: #{tpu_custom_call.1} parent=0 // pred_check_branch
    %145 = sbr.rel (0) target = $region113
  $region112: #{tpu_custom_call.1} parent=0 // pred_region
    _
  $region113: #{tpu_custom_call.1} parent=0 // pred_fallthru
    _
  // Predicated region
  $region114: #{tpu_custom_call.1} parent=0 // pred_check
    _
  $region115: #{tpu_custom_call.1} parent=0 // pred_check_branch
    %147 = sbr.rel (0) target = $region117
  $region116: #{tpu_custom_call.1} parent=0 // pred_region
    _
  $region117: #{tpu_custom_call.1} parent=0 // pred_fallthru
    _
  // Predicated region
  $region118: #{tpu_custom_call.1} parent=0 // pred_check
    _
  $region119: #{tpu_custom_call.1} parent=0 // pred_check_branch
    %149 = sbr.rel (0) target = $region121
  $region120: #{tpu_custom_call.1} parent=0 // pred_region
    _
  $region121: #{tpu_custom_call.1} parent=0 // pred_fallthru
    _
  // Predicated region
  $region122: #{tpu_custom_call.1} parent=0 // pred_check
    _
  $region123: #{tpu_custom_call.1} parent=0 // pred_check_branch
    %151 = sbr.rel (0) target = $region125
  $region124: #{tpu_custom_call.1} parent=0 // pred_region
    _
  $region125: #{tpu_custom_call.1} parent=0 // pred_fallthru
    _
  // Predicated region
  $region126: #{tpu_custom_call.1} parent=0 // pred_check
    _
  $region127: #{tpu_custom_call.1} parent=0 // pred_check_branch
    %153 = sbr.rel (0) target = $region129
  $region128: #{tpu_custom_call.1} parent=0 // pred_region
    _
  $region129: #{tpu_custom_call.1} parent=0 // pred_fallthru
    _
  // Predicated region
  $region130: #{tpu_custom_call.1} parent=0 // pred_check
    _
  $region131: #{tpu_custom_call.1} parent=0 // pred_check_branch
    %155 = sbr.rel (0) target = $region133
  $region132: #{tpu_custom_call.1} parent=0 // pred_region
    _
  $region133: #{tpu_custom_call.1} parent=0 // pred_fallthru
    _
  // Predicated region
  $region134: #{tpu_custom_call.1} parent=0 // pred_check
    _
  $region135: #{tpu_custom_call.1} parent=0 // pred_check_branch
    %157 = sbr.rel (0) target = $region137
  $region136: #{tpu_custom_call.1} parent=0 // pred_region
    _
  $region137: #{tpu_custom_call.1} parent=0 // pred_fallthru
    _
  // Predicated region
  $region138: #{tpu_custom_call.1} parent=0 // pred_check
    _
  $region139: #{tpu_custom_call.1} parent=0 // pred_check_branch
    %159 = sbr.rel (0) target = $region141
  $region140: #{tpu_custom_call.1} parent=0 // pred_region
    _
  $region141: #{tpu_custom_call.1} parent=0 // pred_fallthru
    _
  // Predicated region
  $region142: #{tpu_custom_call.1} parent=0 // pred_check
    _
  $region143: #{tpu_custom_call.1} parent=0 // pred_check_branch
    %161 = sbr.rel (0) target = $region145
  $region144: #{tpu_custom_call.1} parent=0 // pred_region
    _
  $region145: #{tpu_custom_call.1} parent=0 // pred_fallthru
    _
  // Predicated region
  $region146: #{tpu_custom_call.1} parent=0 // pred_check
    _
  $region147: #{tpu_custom_call.1} parent=0 // pred_check_branch
    %163 = sbr.rel (0) target = $region149
  $region148: #{tpu_custom_call.1} parent=0 // pred_region
    _
  $region149: #{tpu_custom_call.1} parent=0 // pred_fallthru
    _
  // Predicated region
  $region150: #{tpu_custom_call.1} parent=0 // pred_check
    _
  $region151: #{tpu_custom_call.1} parent=0 // pred_check_branch
    %165 = sbr.rel (0) target = $region153
  $region152: #{tpu_custom_call.1} parent=0 // pred_region
    _
  $region153: #{tpu_custom_call.1} parent=0 // pred_fallthru
    _
  // Predicated region
  $region154: #{tpu_custom_call.1} parent=0 // pred_check
    _
  $region155: #{tpu_custom_call.1} parent=0 // pred_check_branch
    %167 = sbr.rel (0) target = $region157
  $region156: #{tpu_custom_call.1} parent=0 // pred_region
    _
  $region157: #{tpu_custom_call.1} parent=0 // pred_fallthru
    _
  // Predicated region
  $region158: #{tpu_custom_call.1} parent=0 // pred_check
    _
  $region159: #{tpu_custom_call.1} parent=0 // pred_check_branch
    %169 = sbr.rel (0) target = $region161
  $region160: #{tpu_custom_call.1} parent=0 // pred_region
    _
  $region161: #{tpu_custom_call.1} parent=0 // pred_fallthru
    _
  // Predicated region
  $region162: #{tpu_custom_call.1} parent=0 // pred_check
    _
  $region163: #{tpu_custom_call.1} parent=0 // pred_check_branch
    %171 = sbr.rel (0) target = $region165
  $region164: #{tpu_custom_call.1} parent=0 // pred_region
    _
  $region165: #{tpu_custom_call.1} parent=0 // pred_fallthru
    _
  // Predicated region
  $region166: #{tpu_custom_call.1} parent=0 // pred_check
    _
  $region167: #{tpu_custom_call.1} parent=0 // pred_check_branch
    %173 = sbr.rel (0) target = $region169
  $region168: #{tpu_custom_call.1} parent=0 // pred_region
    _
  $region169: #{tpu_custom_call.1} parent=0 // pred_fallthru
    _
  %v175 = vld [vmem:[%s1] sm:$0xf]
  %v176 = vld [vmem:[%s1 + $0x4] sm:$0xf]
  %v177 = vld [vmem:[%s15] sm:$0xff]
  %v178 = vld [vmem:[%s15 + $0x8] sm:$0xff]
  %v179 = vld [vmem:[%s15 + $0x10] sm:$0xff]
  %v180 = vld [vmem:[%s15 + $0x18] sm:$0xff]
  %v181 = vld [vmem:[%s17] sm:$0x3]
  %v183 = vlaneseq
  %v184 = vshrl.u32 %v183, 7
  %v185 = vsub.s32 0, %v184
  %v186 = vrot.slane %v181, %v185
  %v187 = vlaneseq
  %v188 = vshrl.u32 %v187, 7
  %v189 = vsub.s32 1, %v188
  %v190 = vrot.slane %v181, %v189
  %v195 = vunpack.c.l.b16 %v175
  %v196 = vunpack.c.l.b16 %v176
  %v197 = vpack.c.b16 %v196, %v195
  %v202 = vunpack.c.l.b16 %v177
  %v203 = vunpack.c.h.b16 %v177
  %v204 = vunpack.c.l.b16 %v178
  %v205 = vunpack.c.h.b16 %v178
  %v206 = vunpack.c.l.b16 %v179
  %v207 = vunpack.c.h.b16 %v179
  %v208 = vunpack.c.l.b16 %v180
  %v209 = vunpack.c.h.b16 %v180
  %v210 = vpack.c.b16 %v204, %v202
  %v211 = vpack.c.b16 %v205, %v203
  %v212 = vpack.c.b16 %v208, %v206
  %v213 = vpack.c.b16 %v209, %v207
  %vm218 = vcmask 261120
  %v220 = vsel %vm218, %v197, 0
  %222 = vmatprep.subr.bf16.mxu0 %v211
  %223 = vmatpush1.bf16.msra.mxu0 %v210
  %224 = vmatprep.subr.bf16.mxu0 %v213
  %225 = vmatpush1.bf16.msra.mxu0 %v212
  %226 = vmatprep.subr.bf16.mxu0 0
  %227 = vmatpush1.bf16.msra.mxu0 0
  %228 = vmatprep.subr.bf16.mxu0 0
  %229 = vmatpush1.bf16.msra.mxu0 0
  %230 = vmatprep.subr.bf16.mxu0 0
  %231 = vmatpush1.bf16.msra.mxu0 0
  %232 = vmatprep.subr.bf16.mxu0 0
  %233 = vmatpush1.bf16.msra.mxu0 0
  %234 = vmatprep.subr.bf16.mxu0 0
  %235 = vmatpush1.bf16.msra.mxu0 0
  %236 = vmatprep.subr.bf16.mxu0 0
  %237 = vmatpush1.bf16.msra.mxu0 0
  %238 = vmatprep.subr.bf16.mxu0 0
  %239 = vmatpush1.bf16.msra.mxu0 0
  %240 = vmatprep.subr.bf16.mxu0 0
  %241 = vmatpush1.bf16.msra.mxu0 0
  %242 = vmatprep.subr.bf16.mxu0 0
  %243 = vmatpush1.bf16.msra.mxu0 0
  %244 = vmatprep.subr.bf16.mxu0 0
  %245 = vmatpush1.bf16.msra.mxu0 0
  %246 = vmatprep.subr.bf16.mxu0 0
  %247 = vmatpush1.bf16.msra.mxu0 0
  %248 = vmatprep.subr.bf16.mxu0 0
  %249 = vmatpush1.bf16.msra.mxu0 0
  %250 = vmatprep.subr.bf16.mxu0 0
  %251 = vmatpush1.bf16.msra.mxu0 0
  %252 = vmatprep.subr.bf16.mxu0 0
  %253 = vmatpush1.bf16.msra.mxu0 0
  %254 = vmatprep.mubr.bf16.mxu0 0
  %255 = vmatmul.mubr.bf16.gmra.mrb[0].mxu0 %v220
  %v256 = vpop.f32.mrb[0].mxu0
  %v257 = vadd.f32 %v186, %v256
  %v258 = vpop.f32.mrb[0].mxu0
  %v259 = vadd.f32 %v190, %v258
  %v260 = vpop.f32.mrb[0].mxu0
  %v261 = vadd.f32 %v186, %v260
  %v262 = vpop.f32.mrb[0].mxu0
  %v263 = vadd.f32 %v190, %v262
  %264 = vdwg.mxu0
  %v265 = vmin.f32 %v257, 20.0
  %v266 = vmin.f32 %v259, 20.0
  %v267 = vmin.f32 %v261, 20.0
  %v268 = vmin.f32 %v263, 20.0
  %v269 = vmul.f32 %v265, 1.442695
  %v270 = vpow.pop %v269
  %v271 = vmul.f32 %v266, 1.442695
  %v272 = vpow.pop %v271
  %v273 = vmul.f32 %v267, 1.442695
  %v274 = vpow.pop %v273
  %v275 = vmul.f32 %v268, 1.442695
  %v276 = vpow.pop %v275
  %v277 = vadd.f32 %v270, 2.0
  %v278 = vadd.f32 %v272, 2.0
  %v279 = vadd.f32 %v274, 2.0
  %v280 = vadd.f32 %v276, 2.0
  %v281 = vmul.f32 %v270, %v277
  %v282 = vmul.f32 %v272, %v278
  %v283 = vmul.f32 %v274, %v279
  %v284 = vmul.f32 %v276, %v280
  %v285 = vadd.f32 %v281, 2.0
  %v286 = vadd.f32 %v282, 2.0
  %v287 = vadd.f32 %v283, 2.0
  %v288 = vadd.f32 %v284, 2.0
  %v289 = vrcp.pop %v285
  %v290 = vrcp.pop %v286
  %v291 = vrcp.pop %v287
  %v292 = vrcp.pop %v288
  %v293 = vmul.f32 %v281, %v289
  %v294 = vmul.f32 %v282, %v290
  %v295 = vmul.f32 %v283, %v291
  %v296 = vmul.f32 %v284, %v292
  %vm297 = vcmp.gt.f32.partialorder %v257, 20.0
  %vm298 = vcmp.gt.f32.partialorder %v259, 20.0
  %vm299 = vcmp.gt.f32.partialorder %v261, 20.0
  %vm300 = vcmp.gt.f32.partialorder %v263, 20.0
  %v301 = vmul.f32 %v257, %v293
  %v302 = vmul.f32 %v259, %v294
  %v303 = vmul.f32 %v261, %v295
  %v304 = vmul.f32 %v263, %v296
  %v305 = vsel %vm297, %v257, %v301
  %v306 = vsel %vm298, %v259, %v302
  %v307 = vsel %vm299, %v261, %v303
  %v308 = vsel %vm300, %v263, %v304
  %v309 = vpack.c.bf16 %v307, %v305
  %v310 = vpack.c.bf16 %v308, %v306
  %v311 = vld [vmem:[%s19] sm:$0xff]
  %v312 = vld [vmem:[%s19 + $0x8] sm:$0xff]
  %v313 = vld [vmem:[%s19 + $0x10] sm:$0xff]
  %v314 = vld [vmem:[%s19 + $0x18] sm:$0xff]
  %v315 = vld [vmem:[%s19 + $0x20] sm:$0xff]
  %v316 = vld [vmem:[%s19 + $0x28] sm:$0xff]
  %v317 = vld [vmem:[%s19 + $0x30] sm:$0xff]
  %v318 = vld [vmem:[%s19 + $0x38] sm:$0xff]
  %v319 = vld [vmem:[%s19 + $0x40] sm:$0xff]
  %v320 = vld [vmem:[%s19 + $0x48] sm:$0xff]
  %v321 = vld [vmem:[%s19 + $0x50] sm:$0xff]
  %v322 = vld [vmem:[%s19 + $0x58] sm:$0xff]
  %v323 = vld [vmem:[%s19 + $0x60] sm:$0xff]
  %v324 = vld [vmem:[%s19 + $0x68] sm:$0xff]
  %v325 = vld [vmem:[%s19 + $0x70] sm:$0xff]
  %v326 = vld [vmem:[%s19 + $0x78] sm:$0xff]
  %v327 = vld [vmem:[%s19 + $0x80] sm:$0xff]
  %v328 = vld [vmem:[%s19 + $0x88] sm:$0xff]
  %v329 = vld [vmem:[%s19 + $0x90] sm:$0xff]
  %v330 = vld [vmem:[%s19 + $0x98] sm:$0xff]
  %v331 = vld [vmem:[%s19 + $0xa0] sm:$0xff]
  %v332 = vld [vmem:[%s19 + $0xa8] sm:$0xff]
  %v333 = vld [vmem:[%s19 + $0xb0] sm:$0xff]
  %v334 = vld [vmem:[%s19 + $0xb8] sm:$0xff]
  %v335 = vld [vmem:[%s19 + $0xc0] sm:$0xff]
  %v336 = vld [vmem:[%s19 + $0xc8] sm:$0xff]
  %v337 = vld [vmem:[%s19 + $0xd0] sm:$0xff]
  %v338 = vld [vmem:[%s19 + $0xd8] sm:$0xff]
  %v339 = vld [vmem:[%s19 + $0xe0] sm:$0xff]
  %v340 = vld [vmem:[%s19 + $0xe8] sm:$0xff]
  %v341 = vld [vmem:[%s19 + $0xf0] sm:$0xff]
  %v342 = vld [vmem:[%s19 + $0xf8] sm:$0xff]
  %v343 = vld [vmem:[%s21] sm:$0x3]
  %v345 = vlaneseq
  %v346 = vshrl.u32 %v345, 7
  %v347 = vsub.s32 0, %v346
  %v348 = vrot.slane %v343, %v347
  %v349 = vlaneseq
  %v350 = vshrl.u32 %v349, 7
  %v351 = vsub.s32 1, %v350
  %v352 = vrot.slane %v343, %v351
  %v387 = vunpack.c.l.b16 %v311
  %v388 = vunpack.c.h.b16 %v311
  %v389 = vunpack.c.l.b16 %v312
  %v390 = vunpack.c.h.b16 %v312
  %v391 = vunpack.c.l.b16 %v313
  %v392 = vunpack.c.h.b16 %v313
  %v393 = vunpack.c.l.b16 %v314
  %v394 = vunpack.c.h.b16 %v314
  %v395 = vunpack.c.l.b16 %v315
  %v396 = vunpack.c.h.b16 %v315
  %v397 = vunpack.c.l.b16 %v316
  %v398 = vunpack.c.h.b16 %v316
  %v399 = vunpack.c.l.b16 %v317
  %v400 = vunpack.c.h.b16 %v317
  %v401 = vunpack.c.l.b16 %v318
  %v402 = vunpack.c.h.b16 %v318
  %v403 = vunpack.c.l.b16 %v319
  %v404 = vunpack.c.h.b16 %v319
  %v405 = vunpack.c.l.b16 %v320
  %v406 = vunpack.c.h.b16 %v320
  %v407 = vunpack.c.l.b16 %v321
  %v408 = vunpack.c.h.b16 %v321
  %v409 = vunpack.c.l.b16 %v322
  %v410 = vunpack.c.h.b16 %v322
  %v411 = vunpack.c.l.b16 %v323
  %v412 = vunpack.c.h.b16 %v323
  %v413 = vunpack.c.l.b16 %v324
  %v414 = vunpack.c.h.b16 %v324
  %v415 = vunpack.c.l.b16 %v325
  %v416 = vunpack.c.h.b16 %v325
  %v417 = vunpack.c.l.b16 %v326
  %v418 = vunpack.c.h.b16 %v326
  %v419 = vunpack.c.l.b16 %v327
  %v420 = vunpack.c.h.b16 %v327
  %v421 = vunpack.c.l.b16 %v328
  %v422 = vunpack.c.h.b16 %v328
  %v423 = vunpack.c.l.b16 %v329
  %v424 = vunpack.c.h.b16 %v329
  %v425 = vunpack.c.l.b16 %v330
  %v426 = vunpack.c.h.b16 %v330
  %v427 = vunpack.c.l.b16 %v331
  %v428 = vunpack.c.h.b16 %v331
  %v429 = vunpack.c.l.b16 %v332
  %v430 = vunpack.c.h.b16 %v332
  %v431 = vunpack.c.l.b16 %v333
  %v432 = vunpack.c.h.b16 %v333
  %v433 = vunpack.c.l.b16 %v334
  %v434 = vunpack.c.h.b16 %v334
  %v435 = vunpack.c.l.b16 %v335
  %v436 = vunpack.c.h.b16 %v335
  %v437 = vunpack.c.l.b16 %v336
  %v438 = vunpack.c.h.b16 %v336
  %v439 = vunpack.c.l.b16 %v337
  %v440 = vunpack.c.h.b16 %v337
  %v441 = vunpack.c.l.b16 %v338
  %v442 = vunpack.c.h.b16 %v338
  %v443 = vunpack.c.l.b16 %v339
  %v444 = vunpack.c.h.b16 %v339
  %v445 = vunpack.c.l.b16 %v340
  %v446 = vunpack.c.h.b16 %v340
  %v447 = vunpack.c.l.b16 %v341
  %v448 = vunpack.c.h.b16 %v341
  %v449 = vunpack.c.l.b16 %v342
  %v450 = vunpack.c.h.b16 %v342
  %v451 = vpack.c.b16 %v389, %v387
  %v452 = vpack.c.b16 %v390, %v388
  %v453 = vpack.c.b16 %v393, %v391
  %v454 = vpack.c.b16 %v394, %v392
  %v455 = vpack.c.b16 %v397, %v395
  %v456 = vpack.c.b16 %v398, %v396
  %v457 = vpack.c.b16 %v401, %v399
  %v458 = vpack.c.b16 %v402, %v400
  %v459 = vpack.c.b16 %v405, %v403
  %v460 = vpack.c.b16 %v406, %v404
  %v461 = vpack.c.b16 %v409, %v407
  %v462 = vpack.c.b16 %v410, %v408
  %v463 = vpack.c.b16 %v413, %v411
  %v464 = vpack.c.b16 %v414, %v412
  %v465 = vpack.c.b16 %v417, %v415
  %v466 = vpack.c.b16 %v418, %v416
  %v467 = vpack.c.b16 %v421, %v419
  %v468 = vpack.c.b16 %v422, %v420
  %v469 = vpack.c.b16 %v425, %v423
  %v470 = vpack.c.b16 %v426, %v424
  %v471 = vpack.c.b16 %v429, %v427
  %v472 = vpack.c.b16 %v430, %v428
  %v473 = vpack.c.b16 %v433, %v431
  %v474 = vpack.c.b16 %v434, %v432
  %v475 = vpack.c.b16 %v437, %v435
  %v476 = vpack.c.b16 %v438, %v436
  %v477 = vpack.c.b16 %v441, %v439
  %v478 = vpack.c.b16 %v442, %v440
  %v479 = vpack.c.b16 %v445, %v443
  %v480 = vpack.c.b16 %v446, %v444
  %v481 = vpack.c.b16 %v449, %v447
  %v482 = vpack.c.b16 %v450, %v448
  %vm513 = vcmask 1039360
  %v515 = vsel %vm513, %v310, 0
  %vm517 = vcmask 1046528
  %vm518 = vcmask 1047552
  %v519 = vsel %vm517, 4294967295, 65535
  %v520 = vsel %vm518, %v519, 0
  %v522 = vand.u32 %v481, %v520
  %v525 = vand.u32 %v482, %v520
  %527 = vmatprep.subr.bf16.mxu0 %v452
  %528 = vmatpush1.bf16.msra.mxu0 %v451
  %529 = vmatprep.subr.bf16.mxu0 %v454
  %530 = vmatpush1.bf16.msra.mxu0 %v453
  %531 = vmatprep.subr.bf16.mxu0 %v456
  %532 = vmatpush1.bf16.msra.mxu0 %v455
  %533 = vmatprep.subr.bf16.mxu0 %v458
  %534 = vmatpush1.bf16.msra.mxu0 %v457
  %535 = vmatprep.subr.bf16.mxu0 %v460
  %536 = vmatpush1.bf16.msra.mxu0 %v459
  %537 = vmatprep.subr.bf16.mxu0 %v462
  %538 = vmatpush1.bf16.msra.mxu0 %v461
  %539 = vmatprep.subr.bf16.mxu0 %v464
  %540 = vmatpush1.bf16.msra.mxu0 %v463
  %541 = vmatprep.subr.bf16.mxu0 %v466
  %542 = vmatpush1.bf16.msra.mxu0 %v465
  %543 = vmatprep.subr.bf16.mxu0 %v468
  %544 = vmatpush1.bf16.msra.mxu0 %v467
  %545 = vmatprep.subr.bf16.mxu0 %v470
  %546 = vmatpush1.bf16.msra.mxu0 %v469
  %547 = vmatprep.subr.bf16.mxu0 %v472
  %548 = vmatpush1.bf16.msra.mxu0 %v471
  %549 = vmatprep.subr.bf16.mxu0 %v474
  %550 = vmatpush1.bf16.msra.mxu0 %v473
  %551 = vmatprep.subr.bf16.mxu0 %v476
  %552 = vmatpush1.bf16.msra.mxu0 %v475
  %553 = vmatprep.subr.bf16.mxu0 %v478
  %554 = vmatpush1.bf16.msra.mxu0 %v477
  %555 = vmatprep.subr.bf16.mxu0 %v480
  %556 = vmatpush1.bf16.msra.mxu0 %v479
  %557 = vmatprep.subr.bf16.mxu0 %v525
  %558 = vmatpush1.bf16.msra.mxu0 %v522
  %559 = vmatprep.mubr.bf16.mxu0 %v515
  %560 = vmatmul.mubr.bf16.gmra.mrb[0].mxu0 %v309
  %v561 = vpop.f32.mrb[0].mxu0
  %v562 = vadd.f32 %v348, %v561
  %v563 = vpop.f32.mrb[0].mxu0
  %v564 = vadd.f32 %v352, %v563
  %v565 = vpop.f32.mrb[0].mxu0
  %v566 = vadd.f32 %v348, %v565
  %v567 = vpop.f32.mrb[0].mxu0
  %v568 = vadd.f32 %v352, %v567
  %569 = vdwg.mxu0
  %v570 = vmin.f32 %v562, 20.0
  %v571 = vmin.f32 %v564, 20.0
  %v572 = vmin.f32 %v566, 20.0
  %v573 = vmin.f32 %v568, 20.0
  %v574 = vmul.f32 %v570, 1.442695
  %v575 = vpow.pop %v574
  %v576 = vmul.f32 %v571, 1.442695
  %v577 = vpow.pop %v576
  %v578 = vmul.f32 %v572, 1.442695
  %v579 = vpow.pop %v578
  %v580 = vmul.f32 %v573, 1.442695
  %v581 = vpow.pop %v580
  %v582 = vadd.f32 %v575, 2.0
  %v583 = vadd.f32 %v577, 2.0
  %v584 = vadd.f32 %v579, 2.0
  %v585 = vadd.f32 %v581, 2.0
  %v586 = vmul.f32 %v575, %v582
  %v587 = vmul.f32 %v577, %v583
  %v588 = vmul.f32 %v579, %v584
  %v589 = vmul.f32 %v581, %v585
  %v590 = vadd.f32 %v586, 2.0
  %v591 = vadd.f32 %v587, 2.0
  %v592 = vadd.f32 %v588, 2.0
  %v593 = vadd.f32 %v589, 2.0
  %v594 = vrcp.pop %v590
  %v595 = vrcp.pop %v591
  %v596 = vrcp.pop %v592
  %v597 = vrcp.pop %v593
  %v598 = vmul.f32 %v586, %v594
  %v599 = vmul.f32 %v587, %v595
  %v600 = vmul.f32 %v588, %v596
  %v601 = vmul.f32 %v589, %v597
  %vm602 = vcmp.gt.f32.partialorder %v562, 20.0
  %vm603 = vcmp.gt.f32.partialorder %v564, 20.0
  %vm604 = vcmp.gt.f32.partialorder %v566, 20.0
  %vm605 = vcmp.gt.f32.partialorder %v568, 20.0
  %v606 = vmul.f32 %v562, %v598
  %v607 = vmul.f32 %v564, %v599
  %v608 = vmul.f32 %v566, %v600
  %v609 = vmul.f32 %v568, %v601
  %v610 = vsel %vm602, %v562, %v606
  %v611 = vsel %vm603, %v564, %v607
  %v612 = vsel %vm604, %v566, %v608
  %v613 = vsel %vm605, %v568, %v609
  %v614 = vpack.c.bf16 %v612, %v610
  %v615 = vpack.c.bf16 %v613, %v611
  %v616 = vld [vmem:[%s23] sm:$0xf]
  %v617 = vld [vmem:[%s23 + $0x4] sm:$0xf]
  %v618 = vld [vmem:[%s23 + $0x8] sm:$0xf]
  %v619 = vld [vmem:[%s23 + $0xc] sm:$0xf]
  %v620 = vld [vmem:[%s23 + $0x10] sm:$0xf]
  %v621 = vld [vmem:[%s23 + $0x14] sm:$0xf]
  %v622 = vld [vmem:[%s23 + $0x18] sm:$0xf]
  %v623 = vld [vmem:[%s23 + $0x1c] sm:$0xf]
  %v624 = vld [vmem:[%s23 + $0x20] sm:$0xf]
  %v625 = vld [vmem:[%s23 + $0x24] sm:$0xf]
  %v626 = vld [vmem:[%s23 + $0x28] sm:$0xf]
  %v627 = vld [vmem:[%s23 + $0x2c] sm:$0xf]
  %v628 = vld [vmem:[%s23 + $0x30] sm:$0xf]
  %v629 = vld [vmem:[%s23 + $0x34] sm:$0xf]
  %v630 = vld [vmem:[%s23 + $0x38] sm:$0xf]
  %v631 = vld [vmem:[%s23 + $0x3c] sm:$0xf]
  %v632 = vld [vmem:[%s23 + $0x40] sm:$0xf]
  %v633 = vld [vmem:[%s23 + $0x44] sm:$0xf]
  %v634 = vld [vmem:[%s23 + $0x48] sm:$0xf]
  %v635 = vld [vmem:[%s25] sm:$0x1]
  %v637 = vlaneseq
  %v638 = vshrl.u32 %v637, 7
  %v639 = vsub.s32 0, %v638
  %v640 = vrot.slane %v635, %v639
  %v661 = vunpack.c.l.b16 %v616
  %v662 = vunpack.c.l.b16 %v617
  %v663 = vunpack.c.l.b16 %v618
  %v664 = vunpack.c.l.b16 %v619
  %v665 = vunpack.c.l.b16 %v620
  %v666 = vunpack.c.l.b16 %v621
  %v667 = vunpack.c.l.b16 %v622
  %v668 = vunpack.c.l.b16 %v623
  %v669 = vunpack.c.l.b16 %v624
  %v670 = vunpack.c.l.b16 %v625
  %v671 = vunpack.c.l.b16 %v626
  %v672 = vunpack.c.l.b16 %v627
  %v673 = vunpack.c.l.b16 %v628
  %v674 = vunpack.c.l.b16 %v629
  %v675 = vunpack.c.l.b16 %v630
  %v676 = vunpack.c.l.b16 %v631
  %v677 = vunpack.c.l.b16 %v632
  %v678 = vunpack.c.l.b16 %v633
  %v679 = vunpack.c.l.b16 %v634
  %v680 = vpack.c.b16 %v662, %v661
  %v681 = vpack.c.b16 %v664, %v663
  %v682 = vpack.c.b16 %v666, %v665
  %v683 = vpack.c.b16 %v668, %v667
  %v684 = vpack.c.b16 %v670, %v669
  %v685 = vpack.c.b16 %v672, %v671
  %v686 = vpack.c.b16 %v674, %v673
  %v687 = vpack.c.b16 %v676, %v675
  %v688 = vpack.c.b16 %v678, %v677
  %v689 = vpack.c.b16 %v679, %v679
  %vm699 = vcmask 195584
  %v701 = vsel %vm699, %v615, 0
  %vm703 = vcmask 1043456
  %v705 = vsel %vm703, %v689, 0
  %707 = vmatprep.subr.bf16.mxu0 0
  %708 = vmatpush1.bf16.msra.mxu0 %v680
  %709 = vmatprep.subr.bf16.mxu0 0
  %710 = vmatpush1.bf16.msra.mxu0 %v681
  %711 = vmatprep.subr.bf16.mxu0 0
  %712 = vmatpush1.bf16.msra.mxu0 %v682
  %713 = vmatprep.subr.bf16.mxu0 0
  %714 = vmatpush1.bf16.msra.mxu0 %v683
  %715 = vmatprep.subr.bf16.mxu0 0
  %716 = vmatpush1.bf16.msra.mxu0 %v684
  %717 = vmatprep.subr.bf16.mxu0 0
  %718 = vmatpush1.bf16.msra.mxu0 %v685
  %719 = vmatprep.subr.bf16.mxu0 0
  %720 = vmatpush1.bf16.msra.mxu0 %v686
  %721 = vmatprep.subr.bf16.mxu0 0
  %722 = vmatpush1.bf16.msra.mxu0 %v687
  %723 = vmatprep.subr.bf16.mxu0 0
  %724 = vmatpush1.bf16.msra.mxu0 %v688
  %725 = vmatprep.subr.bf16.mxu0 0
  %726 = vmatpush1.bf16.msra.mxu0 %v705
  %727 = vmatprep.subr.bf16.mxu0 0
  %728 = vmatpush1.bf16.msra.mxu0 0
  %729 = vmatprep.subr.bf16.mxu0 0
  %730 = vmatpush1.bf16.msra.mxu0 0
  %731 = vmatprep.subr.bf16.mxu0 0
  %732 = vmatpush1.bf16.msra.mxu0 0
  %733 = vmatprep.subr.bf16.mxu0 0
  %734 = vmatpush1.bf16.msra.mxu0 0
  %735 = vmatprep.subr.bf16.mxu0 0
  %736 = vmatpush1.bf16.msra.mxu0 0
  %737 = vmatprep.subr.bf16.mxu0 0
  %738 = vmatpush1.bf16.msra.mxu0 0
  %739 = vmatprep.mubr.bf16.mxu0 %v701
  %740 = vmatmul.mubr.bf16.gmra.mrb[0].mxu0 %v614
  %v741 = vpop.f32.mrb[0].mxu0
  %v742 = vadd.f32 %v640, %v741
  %v743 = vpop.f32.mrb[0].mxu0
  %v744 = vpop.f32.mrb[0].mxu0
  %v745 = vadd.f32 %v640, %v744
  %v746 = vpop.f32.mrb[0].mxu0
  %747 = vdwg.mxu0
  %v748 = vmin.f32 %v742, 20.0
  %v749 = vmin.f32 %v745, 20.0
  %v750 = vmul.f32 %v748, 1.442695
  %v751 = vpow.pop %v750
  %v752 = vmul.f32 %v749, 1.442695
  %v753 = vpow.pop %v752
  %v754 = vadd.f32 %v751, 2.0
  %v755 = vadd.f32 %v753, 2.0
  %v756 = vmul.f32 %v751, %v754
  %v757 = vmul.f32 %v753, %v755
  %v758 = vadd.f32 %v756, 2.0
  %v759 = vadd.f32 %v757, 2.0
  %v760 = vrcp.pop %v758
  %v761 = vrcp.pop %v759
  %v762 = vmul.f32 %v756, %v760
  %v763 = vmul.f32 %v757, %v761
  %vm764 = vcmp.gt.f32.partialorder %v742, 20.0
  %vm765 = vcmp.gt.f32.partialorder %v745, 20.0
  %v766 = vmul.f32 %v742, %v762
  %v767 = vmul.f32 %v745, %v763
  %v768 = vsel %vm764, %v742, %v766
  %v769 = vsel %vm765, %v745, %v767
  %v770 = vpack.c.bf16 %v769, %v768
  %v771 = vld [vmem:[%s27] sm:$0xf]
  %v772 = vld [vmem:[%s27 + $0x4] sm:$0xf]
  %v773 = vld [vmem:[%s27 + $0x8] sm:$0xf]
  %v774 = vld [vmem:[%s27 + $0xc] sm:$0xf]
  %v775 = vld [vmem:[%s27 + $0x10] sm:$0xf]
  %v776 = vld [vmem:[%s27 + $0x14] sm:$0xf]
  %v777 = vld [vmem:[%s27 + $0x18] sm:$0xf]
  %v778 = vld [vmem:[%s27 + $0x1c] sm:$0xf]
  %v779 = vld [vmem:[%s27 + $0x20] sm:$0xf]
  %v780 = vld [vmem:[%s27 + $0x24] sm:$0x3]
  %v781 = vld [vmem:[%s29] sm:$0x1]
  %v783 = vlaneseq
  %v784 = vshrl.u32 %v783, 7
  %v785 = vsub.s32 0, %v784
  %v786 = vrot.slane %v781, %v785
  %v798 = vunpack.c.l.b16 %v771
  %v799 = vunpack.c.l.b16 %v772
  %v800 = vunpack.c.l.b16 %v773
  %v801 = vunpack.c.l.b16 %v774
  %v802 = vunpack.c.l.b16 %v775
  %v803 = vunpack.c.l.b16 %v776
  %v804 = vunpack.c.l.b16 %v777
  %v805 = vunpack.c.l.b16 %v778
  %v806 = vunpack.c.l.b16 %v779
  %v807 = vunpack.c.l.b16 %v780
  %v808 = vpack.c.b16 %v799, %v798
  %v809 = vpack.c.b16 %v801, %v800
  %v810 = vpack.c.b16 %v803, %v802
  %v811 = vpack.c.b16 %v805, %v804
  %v812 = vpack.c.b16 %v807, %v806
  %vm817 = vcmask 621568
  %v819 = vsel %vm817, %v770, 0
  %vm821 = vcmask 1045504
  %v823 = vsel %vm821, %v812, 0
  %825 = vmatprep.subr.bf16.mxu0 0
  %826 = vmatpush1.bf16.msra.mxu0 %v808
  %827 = vmatprep.subr.bf16.mxu0 0
  %828 = vmatpush1.bf16.msra.mxu0 %v809
  %829 = vmatprep.subr.bf16.mxu0 0
  %830 = vmatpush1.bf16.msra.mxu0 %v810
  %831 = vmatprep.subr.bf16.mxu0 0
  %832 = vmatpush1.bf16.msra.mxu0 %v811
  %833 = vmatprep.subr.bf16.mxu0 0
  %834 = vmatpush1.bf16.msra.mxu0 %v823
  %835 = vmatprep.subr.bf16.mxu0 0
  %836 = vmatpush1.bf16.msra.mxu0 0
  %837 = vmatprep.subr.bf16.mxu0 0
  %838 = vmatpush1.bf16.msra.mxu0 0
  %839 = vmatprep.subr.bf16.mxu0 0
  %840 = vmatpush1.bf16.msra.mxu0 0
  %841 = vmatprep.subr.bf16.mxu0 0
  %842 = vmatpush1.bf16.msra.mxu0 0
  %843 = vmatprep.subr.bf16.mxu0 0
  %844 = vmatpush1.bf16.msra.mxu0 0
  %845 = vmatprep.subr.bf16.mxu0 0
  %846 = vmatpush1.bf16.msra.mxu0 0
  %847 = vmatprep.subr.bf16.mxu0 0
  %848 = vmatpush1.bf16.msra.mxu0 0
  %849 = vmatprep.subr.bf16.mxu0 0
  %850 = vmatpush1.bf16.msra.mxu0 0
  %851 = vmatprep.subr.bf16.mxu0 0
  %852 = vmatpush1.bf16.msra.mxu0 0
  %853 = vmatprep.subr.bf16.mxu0 0
  %854 = vmatpush1.bf16.msra.mxu0 0
  %855 = vmatprep.subr.bf16.mxu0 0
  %856 = vmatpush1.bf16.msra.mxu0 0
  %857 = vmatprep.mubr.bf16.mxu0 0
  %858 = vmatmul.mubr.bf16.gmra.mrb[0].mxu0 %v819
  %v859 = vpop.f32.mrb[0].mxu0
  %v860 = vadd.f32 %v786, %v859
  %v861 = vpop.f32.mrb[0].mxu0
  %v862 = vpop.f32.mrb[0].mxu0
  %v863 = vadd.f32 %v786, %v862
  %v864 = vpop.f32.mrb[0].mxu0
  %865 = vdwg.mxu0
  %v866 = vmin.f32 %v860, 20.0
  %v867 = vmin.f32 %v863, 20.0
  %v868 = vmul.f32 %v866, 1.442695
  %v869 = vpow.pop %v868
  %v870 = vmul.f32 %v867, 1.442695
  %v871 = vpow.pop %v870
  %v872 = vadd.f32 %v869, 2.0
  %v873 = vadd.f32 %v871, 2.0
  %v874 = vmul.f32 %v869, %v872
  %v875 = vmul.f32 %v871, %v873
  %v876 = vadd.f32 %v874, 2.0
  %v877 = vadd.f32 %v875, 2.0
  %v878 = vrcp.pop %v876
  %v879 = vrcp.pop %v877
  %v880 = vmul.f32 %v874, %v878
  %v881 = vmul.f32 %v875, %v879
  %vm882 = vcmp.gt.f32.partialorder %v860, 20.0
  %vm883 = vcmp.gt.f32.partialorder %v863, 20.0
  %v884 = vmul.f32 %v860, %v880
  %v885 = vmul.f32 %v863, %v881
  %v886 = vsel %vm882, %v860, %v884
  %v887 = vsel %vm883, %v863, %v885
  %v888 = vld [vmem:[%s3] sm:$0xff]
  %v889 = vld [vmem:[%s3 + $0x8] sm:$0xff]
  %v890 = vld [vmem:[%s5] sm:$0xff]
  %v891 = vld [vmem:[%s5 + $0x8] sm:$0xff]
  %v892 = vmin.f32 %v305, 20.0
  %v893 = vmin.f32 %v307, 20.0
  %v894 = vmul.f32 %v892, 1.442695
  %v895 = vpow.pop %v894
  %v896 = vmul.f32 %v893, 1.442695
  %v897 = vpow.pop %v896
  %v898 = vadd.f32 %v895, 2.0
  %v899 = vadd.f32 %v897, 2.0
  %v900 = vmul.f32 %v895, %v898
  %v901 = vmul.f32 %v897, %v899
  %v902 = vadd.f32 %v900, 2.0
  %v903 = vadd.f32 %v901, 2.0
  %v904 = vrcp.pop %v902
  %v905 = vrcp.pop %v903
  %v906 = vmul.f32 %v900, %v904
  %v907 = vmul.f32 %v901, %v905
  %vm908 = vcmp.gt.f32.partialorder %v305, 20.0
  %vm909 = vcmp.gt.f32.partialorder %v307, 20.0
  %v910 = vmul.f32 %v305, %v906
  %v911 = vmul.f32 %v307, %v907
  %v912 = vsel %vm908, %v305, %v910
  %v913 = vsel %vm909, %v307, %v911
  %915 = vset.pattern.permute.xlu0 0
  %916 = vperm.xlu0 %915, %v888
  %v917 = vpop.permute.xlu0 %916
  %920 = vset.pattern.permute.xlu0 0
  %921 = vperm.xlu0 %920, %v889
  %v922 = vpop.permute.xlu0 %921
  %v924 = vmul.f32 %v917, %v912
  %v925 = vmul.f32 %v922, %v913
  %927 = vset.pattern.permute.xlu0 0
  %928 = vperm.xlu0 %927, %v890
  %v929 = vpop.permute.xlu0 %928
  %932 = vset.pattern.permute.xlu0 0
  %933 = vperm.xlu0 %932, %v891
  %v934 = vpop.permute.xlu0 %933
  %v936 = vadd.f32 %v924, %v929
  %v937 = vadd.f32 %v925, %v934
  %v938 = vpack.c.bf16 %v937, %v936
  %v939 = vmin.f32 %v610, 20.0
  %v940 = vmin.f32 %v612, 20.0
  %v941 = vmul.f32 %v939, 1.442695
  %v942 = vpow.pop %v941
  %v943 = vmul.f32 %v940, 1.442695
  %v944 = vpow.pop %v943
  %v945 = vadd.f32 %v942, 2.0
  %v946 = vadd.f32 %v944, 2.0
  %v947 = vmul.f32 %v942, %v945
  %v948 = vmul.f32 %v944, %v946
  %v949 = vadd.f32 %v947, 2.0
  %v950 = vadd.f32 %v948, 2.0
  %v951 = vrcp.pop %v949
  %v952 = vrcp.pop %v950
  %v953 = vmul.f32 %v947, %v951
  %v954 = vmul.f32 %v948, %v952
  %vm955 = vcmp.gt.f32.partialorder %v610, 20.0
  %vm956 = vcmp.gt.f32.partialorder %v612, 20.0
  %v957 = vmul.f32 %v610, %v953
  %v958 = vmul.f32 %v612, %v954
  %v959 = vsel %vm955, %v610, %v957
  %v960 = vsel %vm956, %v612, %v958
  %v961 = vmul.f32 %v917, %v959
  %v962 = vmul.f32 %v922, %v960
  %v963 = vadd.f32 %v961, %v929
  %v964 = vadd.f32 %v962, %v934
  %v965 = vpack.c.bf16 %v964, %v963
  %v966 = vmin.f32 %v768, 20.0
  %v967 = vmin.f32 %v769, 20.0
  %v968 = vmul.f32 %v966, 1.442695
  %v969 = vpow.pop %v968
  %v970 = vmul.f32 %v967, 1.442695
  %v971 = vpow.pop %v970
  %v972 = vadd.f32 %v969, 2.0
  %v973 = vadd.f32 %v971, 2.0
  %v974 = vmul.f32 %v969, %v972
  %v975 = vmul.f32 %v971, %v973
  %v976 = vadd.f32 %v974, 2.0
  %v977 = vadd.f32 %v975, 2.0
  %v978 = vrcp.pop %v976
  %v979 = vrcp.pop %v977
  %v980 = vmul.f32 %v974, %v978
  %v981 = vmul.f32 %v975, %v979
  %vm982 = vcmp.gt.f32.partialorder %v768, 20.0
  %vm983 = vcmp.gt.f32.partialorder %v769, 20.0
  %v984 = vmul.f32 %v768, %v980
  %v985 = vmul.f32 %v769, %v981
  %v986 = vsel %vm982, %v768, %v984
  %v987 = vsel %vm983, %v769, %v985
  %v988 = vmul.f32 %v917, %v986
  %v989 = vmul.f32 %v922, %v987
  %v990 = vadd.f32 %v988, %v929
  %v991 = vadd.f32 %v989, %v934
  %v992 = vpack.c.bf16 %v991, %v990
  %v993 = vmin.f32 %v886, 20.0
  %v994 = vmin.f32 %v887, 20.0
  %v995 = vmul.f32 %v993, 1.442695
  %v996 = vpow.pop %v995
  %v997 = vmul.f32 %v994, 1.442695
  %v998 = vpow.pop %v997
  %v999 = vadd.f32 %v996, 2.0
  %v1000 = vadd.f32 %v998, 2.0
  %v1001 = vmul.f32 %v996, %v999
  %v1002 = vmul.f32 %v998, %v1000
  %v1003 = vadd.f32 %v1001, 2.0
  %v1004 = vadd.f32 %v1002, 2.0
  %v1005 = vrcp.pop %v1003
  %v1006 = vrcp.pop %v1004
  %v1007 = vmul.f32 %v1001, %v1005
  %v1008 = vmul.f32 %v1002, %v1006
  %vm1009 = vcmp.gt.f32.partialorder %v886, 20.0
  %vm1010 = vcmp.gt.f32.partialorder %v887, 20.0
  %v1011 = vmul.f32 %v886, %v1007
  %v1012 = vmul.f32 %v887, %v1008
  %v1013 = vsel %vm1009, %v886, %v1011
  %v1014 = vsel %vm1010, %v887, %v1012
  %v1015 = vmul.f32 %v917, %v1013
  %v1016 = vmul.f32 %v922, %v1014
  %v1017 = vadd.f32 %v1015, %v929
  %v1018 = vadd.f32 %v1016, %v934
  %v1019 = vpack.c.bf16 %v1018, %v1017
  %v1020 = vld [vmem:[%s31] sm:$0xff]
  %v1021 = vld [vmem:[%s31 + $0x8] sm:$0xf]
  %v1022 = vld [vmem:[%s31 + $0xc] sm:$0xff]
  %v1023 = vld [vmem:[%s31 + $0x14] sm:$0xf]
  %v1024 = vld [vmem:[%s31 + $0x18] sm:$0xff]
  %v1025 = vld [vmem:[%s31 + $0x20] sm:$0xf]
  %v1026 = vld [vmem:[%s31 + $0x24] sm:$0xff]
  %v1027 = vld [vmem:[%s31 + $0x2c] sm:$0xf]
  %v1028 = vld [vmem:[%s31 + $0x30] sm:$0xff]
  %v1029 = vld [vmem:[%s31 + $0x38] sm:$0xf]
  %v1030 = vld [vmem:[%s31 + $0x3c] sm:$0xff]
  %v1031 = vld [vmem:[%s31 + $0x44] sm:$0xf]
  %v1032 = vld [vmem:[%s31 + $0x48] sm:$0xff]
  %v1033 = vld [vmem:[%s31 + $0x50] sm:$0xf]
  %v1034 = vld [vmem:[%s31 + $0x54] sm:$0xff]
  %v1035 = vld [vmem:[%s31 + $0x5c] sm:$0xf]
  %v1036 = vld [vmem:[%s31 + $0x60] sm:$0xff]
  %v1037 = vld [vmem:[%s31 + $0x68] sm:$0xf]
  %v1038 = vld [vmem:[%s31 + $0x6c] sm:$0xff]
  %v1039 = vld [vmem:[%s31 + $0x74] sm:$0xf]
  %v1040 = vld [vmem:[%s31 + $0x78] sm:$0xff]
  %v1041 = vld [vmem:[%s31 + $0x80] sm:$0xf]
  %v1042 = vld [vmem:[%s31 + $0x84] sm:$0xff]
  %v1043 = vld [vmem:[%s31 + $0x8c] sm:$0xf]
  %v1044 = vld [vmem:[%s31 + $0x90] sm:$0x77]
  %v1045 = vld [vmem:[%s31 + $0x98] sm:$0x7]
  %v1046 = vld [vmem:[%s33] sm:$0xff]
  %v1047 = vld [vmem:[%s33 + $0x8] sm:$0xf]
  %v1048 = vld [vmem:[%s33 + $0xc] sm:$0xff]
  %v1049 = vld [vmem:[%s33 + $0x14] sm:$0xf]
  %v1050 = vld [vmem:[%s33 + $0x18] sm:$0xff]
  %v1051 = vld [vmem:[%s33 + $0x20] sm:$0xf]
  %v1052 = vld [vmem:[%s33 + $0x24] sm:$0xff]
  %v1053 = vld [vmem:[%s33 + $0x2c] sm:$0xf]
  %v1054 = vld [vmem:[%s33 + $0x30] sm:$0xff]
  %v1055 = vld [vmem:[%s33 + $0x38] sm:$0xf]
  %v1056 = vld [vmem:[%s33 + $0x3c] sm:$0xff]
  %v1057 = vld [vmem:[%s33 + $0x44] sm:$0xf]
  %v1058 = vld [vmem:[%s33 + $0x48] sm:$0xff]
  %v1059 = vld [vmem:[%s33 + $0x50] sm:$0xf]
  %v1060 = vld [vmem:[%s33 + $0x54] sm:$0xff]
  %v1061 = vld [vmem:[%s33 + $0x5c] sm:$0xf]
  %v1062 = vld [vmem:[%s33 + $0x60] sm:$0xff]
  %v1063 = vld [vmem:[%s33 + $0x68] sm:$0xf]
  %v1064 = vld [vmem:[%s33 + $0x6c] sm:$0x33]
  %v1065 = vld [vmem:[%s33 + $0x74] sm:$0x3]
  %v1086 = vunpack.c.l.b16 %v1046
  %v1087 = vunpack.c.h.b16 %v1046
  %v1088 = vunpack.c.l.b16 %v1047
  %v1089 = vunpack.c.l.b16 %v1048
  %v1090 = vunpack.c.h.b16 %v1048
  %v1091 = vunpack.c.l.b16 %v1049
  %v1092 = vunpack.c.l.b16 %v1050
  %v1093 = vunpack.c.h.b16 %v1050
  %v1094 = vunpack.c.l.b16 %v1051
  %v1095 = vunpack.c.l.b16 %v1052
  %v1096 = vunpack.c.h.b16 %v1052
  %v1097 = vunpack.c.l.b16 %v1053
  %v1098 = vunpack.c.l.b16 %v1054
  %v1099 = vunpack.c.h.b16 %v1054
  %v1100 = vunpack.c.l.b16 %v1055
  %v1101 = vunpack.c.l.b16 %v1056
  %v1102 = vunpack.c.h.b16 %v1056
  %v1103 = vunpack.c.l.b16 %v1057
  %v1104 = vunpack.c.l.b16 %v1058
  %v1105 = vunpack.c.h.b16 %v1058
  %v1106 = vunpack.c.l.b16 %v1059
  %v1107 = vunpack.c.l.b16 %v1060
  %v1108 = vunpack.c.h.b16 %v1060
  %v1109 = vunpack.c.l.b16 %v1061
  %v1110 = vunpack.c.l.b16 %v1062
  %v1111 = vunpack.c.h.b16 %v1062
  %v1112 = vunpack.c.l.b16 %v1063
  %v1113 = vunpack.c.l.b16 %v1064
  %v1114 = vunpack.c.h.b16 %v1064
  %v1115 = vunpack.c.l.b16 %v1065
  %v1116 = vpack.c.b16 %v1089, %v1086
  %v1117 = vpack.c.b16 %v1090, %v1087
  %v1118 = vpack.c.b16 %v1091, %v1088
  %v1119 = vpack.c.b16 %v1095, %v1092
  %v1120 = vpack.c.b16 %v1096, %v1093
  %v1121 = vpack.c.b16 %v1097, %v1094
  %v1122 = vpack.c.b16 %v1101, %v1098
  %v1123 = vpack.c.b16 %v1102, %v1099
  %v1124 = vpack.c.b16 %v1103, %v1100
  %v1125 = vpack.c.b16 %v1107, %v1104
  %v1126 = vpack.c.b16 %v1108, %v1105
  %v1127 = vpack.c.b16 %v1109, %v1106
  %v1128 = vpack.c.b16 %v1113, %v1110
  %v1129 = vpack.c.b16 %v1114, %v1111
  %v1130 = vpack.c.b16 %v1115, %v1112
  %v1144 = vsel %vm817, %v965, 0
  %v1147 = vsel %vm821, %v1128, 0
  %v1150 = vsel %vm821, %v1129, 0
  %v1153 = vsel %vm821, %v1130, 0
  %1155 = vmatprep.subr.bf16.mxu0 %v1117
  %1156 = vmatpush1.bf16.msra.mxu0 %v1116
  %1157 = vmatprep.subr.bf16.mxu0 %v1120
  %1158 = vmatpush1.bf16.msra.mxu0 %v1119
  %1159 = vmatprep.subr.bf16.mxu0 %v1123
  %1160 = vmatpush1.bf16.msra.mxu0 %v1122
  %1161 = vmatprep.subr.bf16.mxu0 %v1126
  %1162 = vmatpush1.bf16.msra.mxu0 %v1125
  %1163 = vmatprep.subr.bf16.mxu0 %v1150
  %1164 = vmatpush1.bf16.msra.mxu0 %v1147
  %1165 = vmatprep.subr.bf16.mxu0 0
  %1166 = vmatpush1.bf16.msra.mxu0 0
  %1167 = vmatprep.subr.bf16.mxu0 0
  %1168 = vmatpush1.bf16.msra.mxu0 0
  %1169 = vmatprep.subr.bf16.mxu0 0
  %1170 = vmatpush1.bf16.msra.mxu0 0
  %1171 = vmatprep.subr.bf16.mxu0 0
  %1172 = vmatpush1.bf16.msra.mxu0 0
  %1173 = vmatprep.subr.bf16.mxu0 0
  %1174 = vmatpush1.bf16.msra.mxu0 0
  %1175 = vmatprep.subr.bf16.mxu0 0
  %1176 = vmatpush1.bf16.msra.mxu0 0
  %1177 = vmatprep.subr.bf16.mxu0 0
  %1178 = vmatpush1.bf16.msra.mxu0 0
  %1179 = vmatprep.subr.bf16.mxu0 0
  %1180 = vmatpush1.bf16.msra.mxu0 0
  %1181 = vmatprep.subr.bf16.mxu0 0
  %1182 = vmatpush1.bf16.msra.mxu0 0
  %1183 = vmatprep.subr.bf16.mxu0 0
  %1184 = vmatpush1.bf16.msra.mxu0 0
  %1185 = vmatprep.subr.bf16.mxu0 0
  %1186 = vmatpush1.bf16.msra.mxu0 0
  %1187 = vmatprep.mubr.bf16.mxu0 0
  %1188 = vmatmul.mubr.bf16.gmra.mrb[0].mxu0 %v1144
  %v1189 = vpop.f32.mrb[0].mxu0
  %v1190 = vadd.f32 0.0, %v1189
  %v1191 = vpop.f32.mrb[0].mxu0
  %v1192 = vadd.f32 0.0, %v1191
  %v1193 = vpop.f32.mrb[0].mxu0
  %v1194 = vadd.f32 0.0, %v1193
  %v1195 = vpop.f32.mrb[0].mxu0
  %v1196 = vadd.f32 0.0, %v1195
  %1197 = vdwg.mxu0
  %1198 = vmatprep.subr.bf16.mxu0 0
  %1199 = vmatpush1.bf16.msra.mxu0 %v1118
  %1200 = vmatprep.subr.bf16.mxu0 0
  %1201 = vmatpush1.bf16.msra.mxu0 %v1121
  %1202 = vmatprep.subr.bf16.mxu0 0
  %1203 = vmatpush1.bf16.msra.mxu0 %v1124
  %1204 = vmatprep.subr.bf16.mxu0 0
  %1205 = vmatpush1.bf16.msra.mxu0 %v1127
  %1206 = vmatprep.subr.bf16.mxu0 0
  %1207 = vmatpush1.bf16.msra.mxu0 %v1153
  %1208 = vmatprep.subr.bf16.mxu0 0
  %1209 = vmatpush1.bf16.msra.mxu0 0
  %1210 = vmatprep.subr.bf16.mxu0 0
  %1211 = vmatpush1.bf16.msra.mxu0 0
  %1212 = vmatprep.subr.bf16.mxu0 0
  %1213 = vmatpush1.bf16.msra.mxu0 0
  %1214 = vmatprep.subr.bf16.mxu0 0
  %1215 = vmatpush1.bf16.msra.mxu0 0
  %1216 = vmatprep.subr.bf16.mxu0 0
  %1217 = vmatpush1.bf16.msra.mxu0 0
  %1218 = vmatprep.subr.bf16.mxu0 0
  %1219 = vmatpush1.bf16.msra.mxu0 0
  %1220 = vmatprep.subr.bf16.mxu0 0
  %1221 = vmatpush1.bf16.msra.mxu0 0
  %1222 = vmatprep.subr.bf16.mxu0 0
  %1223 = vmatpush1.bf16.msra.mxu0 0
  %1224 = vmatprep.subr.bf16.mxu0 0
  %1225 = vmatpush1.bf16.msra.mxu0 0
  %1226 = vmatprep.subr.bf16.mxu0 0
  %1227 = vmatpush1.bf16.msra.mxu0 0
  %1228 = vmatprep.subr.bf16.mxu0 0
  %1229 = vmatpush1.bf16.msra.mxu0 0
  %1230 = vmatprep.mubr.bf16.mxu0 0
  %1231 = vmatmul.mubr.bf16.gmra.mrb[0].mxu0 %v1144
  %v1232 = vpop.f32.mrb[0].mxu0
  %v1233 = vadd.f32 0.0, %v1232
  %v1234 = vpop.f32.mrb[0].mxu0
  %v1235 = vpop.f32.mrb[0].mxu0
  %v1236 = vadd.f32 0.0, %v1235
  %v1237 = vpop.f32.mrb[0].mxu0
  %1238 = vdwg.mxu0
  %v1265 = vunpack.c.l.b16 %v1020
  %v1266 = vunpack.c.h.b16 %v1020
  %v1267 = vunpack.c.l.b16 %v1021
  %v1268 = vunpack.c.l.b16 %v1022
  %v1269 = vunpack.c.h.b16 %v1022
  %v1270 = vunpack.c.l.b16 %v1023
  %v1271 = vunpack.c.l.b16 %v1024
  %v1272 = vunpack.c.h.b16 %v1024
  %v1273 = vunpack.c.l.b16 %v1025
  %v1274 = vunpack.c.l.b16 %v1026
  %v1275 = vunpack.c.h.b16 %v1026
  %v1276 = vunpack.c.l.b16 %v1027
  %v1277 = vunpack.c.l.b16 %v1028
  %v1278 = vunpack.c.h.b16 %v1028
  %v1279 = vunpack.c.l.b16 %v1029
  %v1280 = vunpack.c.l.b16 %v1030
  %v1281 = vunpack.c.h.b16 %v1030
  %v1282 = vunpack.c.l.b16 %v1031
  %v1283 = vunpack.c.l.b16 %v1032
  %v1284 = vunpack.c.h.b16 %v1032
  %v1285 = vunpack.c.l.b16 %v1033
  %v1286 = vunpack.c.l.b16 %v1034
  %v1287 = vunpack.c.h.b16 %v1034
  %v1288 = vunpack.c.l.b16 %v1035
  %v1289 = vunpack.c.l.b16 %v1036
  %v1290 = vunpack.c.h.b16 %v1036
  %v1291 = vunpack.c.l.b16 %v1037
  %v1292 = vunpack.c.l.b16 %v1038
  %v1293 = vunpack.c.h.b16 %v1038
  %v1294 = vunpack.c.l.b16 %v1039
  %v1295 = vunpack.c.l.b16 %v1040
  %v1296 = vunpack.c.h.b16 %v1040
  %v1297 = vunpack.c.l.b16 %v1041
  %v1298 = vunpack.c.l.b16 %v1042
  %v1299 = vunpack.c.h.b16 %v1042
  %v1300 = vunpack.c.l.b16 %v1043
  %v1301 = vunpack.c.l.b16 %v1044
  %v1302 = vunpack.c.h.b16 %v1044
  %v1303 = vunpack.c.l.b16 %v1045
  %v1304 = vpack.c.b16 %v1268, %v1265
  %v1305 = vpack.c.b16 %v1269, %v1266
  %v1306 = vpack.c.b16 %v1270, %v1267
  %v1307 = vpack.c.b16 %v1274, %v1271
  %v1308 = vpack.c.b16 %v1275, %v1272
  %v1309 = vpack.c.b16 %v1276, %v1273
  %v1310 = vpack.c.b16 %v1280, %v1277
  %v1311 = vpack.c.b16 %v1281, %v1278
  %v1312 = vpack.c.b16 %v1282, %v1279
  %v1313 = vpack.c.b16 %v1286, %v1283
  %v1314 = vpack.c.b16 %v1287, %v1284
  %v1315 = vpack.c.b16 %v1288, %v1285
  %v1316 = vpack.c.b16 %v1292, %v1289
  %v1317 = vpack.c.b16 %v1293, %v1290
  %v1318 = vpack.c.b16 %v1294, %v1291
  %v1319 = vpack.c.b16 %v1298, %v1295
  %v1320 = vpack.c.b16 %v1299, %v1296
  %v1321 = vpack.c.b16 %v1300, %v1297
  %v1322 = vpack.c.b16 %v1301, %v1301
  %v1323 = vpack.c.b16 %v1302, %v1302
  %v1324 = vpack.c.b16 %v1303, %v1303
  %vm1343 = vcmask 834560
  %v1345 = vsel %vm1343, %v938, 0
  %vm1347 = vcmask 1042432
  %v1349 = vsel %vm1347, %v1322, 0
  %v1352 = vsel %vm1347, %v1323, 0
  %v1355 = vsel %vm1347, %v1324, 0
  %1357 = vmatprep.subr.bf16.mxu0 %v1305
  %1358 = vmatpush1.bf16.msra.mxu0 %v1304
  %1359 = vmatprep.subr.bf16.mxu0 %v1308
  %1360 = vmatpush1.bf16.msra.mxu0 %v1307
  %1361 = vmatprep.subr.bf16.mxu0 %v1311
  %1362 = vmatpush1.bf16.msra.mxu0 %v1310
  %1363 = vmatprep.subr.bf16.mxu0 %v1314
  %1364 = vmatpush1.bf16.msra.mxu0 %v1313
  %1365 = vmatprep.subr.bf16.mxu0 %v1317
  %1366 = vmatpush1.bf16.msra.mxu0 %v1316
  %1367 = vmatprep.subr.bf16.mxu0 %v1320
  %1368 = vmatpush1.bf16.msra.mxu0 %v1319
  %1369 = vmatprep.subr.bf16.mxu0 %v1352
  %1370 = vmatpush1.bf16.msra.mxu0 %v1349
  %1371 = vmatprep.subr.bf16.mxu0 0
  %1372 = vmatpush1.bf16.msra.mxu0 0
  %1373 = vmatprep.subr.bf16.mxu0 0
  %1374 = vmatpush1.bf16.msra.mxu0 0
  %1375 = vmatprep.subr.bf16.mxu0 0
  %1376 = vmatpush1.bf16.msra.mxu0 0
  %1377 = vmatprep.subr.bf16.mxu0 0
  %1378 = vmatpush1.bf16.msra.mxu0 0
  %1379 = vmatprep.subr.bf16.mxu0 0
  %1380 = vmatpush1.bf16.msra.mxu0 0
  %1381 = vmatprep.subr.bf16.mxu0 0
  %1382 = vmatpush1.bf16.msra.mxu0 0
  %1383 = vmatprep.subr.bf16.mxu0 0
  %1384 = vmatpush1.bf16.msra.mxu0 0
  %1385 = vmatprep.subr.bf16.mxu0 0
  %1386 = vmatpush1.bf16.msra.mxu0 0
  %1387 = vmatprep.subr.bf16.mxu0 0
  %1388 = vmatpush1.bf16.msra.mxu0 0
  %1389 = vmatprep.mubr.bf16.mxu0 0
  %1390 = vmatmul.mubr.bf16.gmra.mrb[0].mxu0 %v1345
  %v1391 = vpop.f32.mrb[0].mxu0
  %v1392 = vadd.f32 %v1190, %v1391
  %v1393 = vpop.f32.mrb[0].mxu0
  %v1394 = vadd.f32 %v1192, %v1393
  %v1395 = vpop.f32.mrb[0].mxu0
  %v1396 = vadd.f32 %v1194, %v1395
  %v1397 = vpop.f32.mrb[0].mxu0
  %v1398 = vadd.f32 %v1196, %v1397
  %1399 = vdwg.mxu0
  %1400 = vmatprep.subr.bf16.mxu0 0
  %1401 = vmatpush1.bf16.msra.mxu0 %v1306
  %1402 = vmatprep.subr.bf16.mxu0 0
  %1403 = vmatpush1.bf16.msra.mxu0 %v1309
  %1404 = vmatprep.subr.bf16.mxu0 0
  %1405 = vmatpush1.bf16.msra.mxu0 %v1312
  %1406 = vmatprep.subr.bf16.mxu0 0
  %1407 = vmatpush1.bf16.msra.mxu0 %v1315
  %1408 = vmatprep.subr.bf16.mxu0 0
  %1409 = vmatpush1.bf16.msra.mxu0 %v1318
  %1410 = vmatprep.subr.bf16.mxu0 0
  %1411 = vmatpush1.bf16.msra.mxu0 %v1321
  %1412 = vmatprep.subr.bf16.mxu0 0
  %1413 = vmatpush1.bf16.msra.mxu0 %v1355
  %1414 = vmatprep.subr.bf16.mxu0 0
  %1415 = vmatpush1.bf16.msra.mxu0 0
  %1416 = vmatprep.subr.bf16.mxu0 0
  %1417 = vmatpush1.bf16.msra.mxu0 0
  %1418 = vmatprep.subr.bf16.mxu0 0
  %1419 = vmatpush1.bf16.msra.mxu0 0
  %1420 = vmatprep.subr.bf16.mxu0 0
  %1421 = vmatpush1.bf16.msra.mxu0 0
  %1422 = vmatprep.subr.bf16.mxu0 0
  %1423 = vmatpush1.bf16.msra.mxu0 0
  %1424 = vmatprep.subr.bf16.mxu0 0
  %1425 = vmatpush1.bf16.msra.mxu0 0
  %1426 = vmatprep.subr.bf16.mxu0 0
  %1427 = vmatpush1.bf16.msra.mxu0 0
  %1428 = vmatprep.subr.bf16.mxu0 0
  %1429 = vmatpush1.bf16.msra.mxu0 0
  %1430 = vmatprep.subr.bf16.mxu0 0
  %1431 = vmatpush1.bf16.msra.mxu0 0
  %1432 = vmatprep.mubr.bf16.mxu0 0
  %1433 = vmatmul.mubr.bf16.gmra.mrb[0].mxu0 %v1345
  %v1434 = vpop.f32.mrb[0].mxu0
  %v1435 = vadd.f32 %v1233, %v1434
  %v1436 = vpop.f32.mrb[0].mxu0
  %v1437 = vpop.f32.mrb[0].mxu0
  %v1438 = vadd.f32 %v1236, %v1437
  %v1439 = vpop.f32.mrb[0].mxu0
  %1440 = vdwg.mxu0
  %v1441 = vld [vmem:[%s35] sm:$0xff]
  %v1442 = vld [vmem:[%s35 + $0x8] sm:$0xf]
  %v1443 = vld [vmem:[%s35 + $0xc] sm:$0xff]
  %v1444 = vld [vmem:[%s35 + $0x14] sm:$0xf]
  %v1445 = vld [vmem:[%s35 + $0x18] sm:$0xff]
  %v1446 = vld [vmem:[%s35 + $0x20] sm:$0xf]
  %v1447 = vld [vmem:[%s35 + $0x24] sm:$0xff]
  %v1448 = vld [vmem:[%s35 + $0x2c] sm:$0xf]
  %v1449 = vld [vmem:[%s35 + $0x30] sm:$0xff]
  %v1450 = vld [vmem:[%s35 + $0x38] sm:$0xf]
  %v1451 = vld [vmem:[%s35 + $0x3c] sm:$0xff]
  %v1452 = vld [vmem:[%s35 + $0x44] sm:$0xf]
  %v1453 = vld [vmem:[%s35 + $0x48] sm:$0x33]
  %v1454 = vld [vmem:[%s35 + $0x50] sm:$0x3]
  %v1469 = vunpack.c.l.b16 %v1441
  %v1470 = vunpack.c.h.b16 %v1441
  %v1471 = vunpack.c.l.b16 %v1442
  %v1472 = vunpack.c.l.b16 %v1443
  %v1473 = vunpack.c.h.b16 %v1443
  %v1474 = vunpack.c.l.b16 %v1444
  %v1475 = vunpack.c.l.b16 %v1445
  %v1476 = vunpack.c.h.b16 %v1445
  %v1477 = vunpack.c.l.b16 %v1446
  %v1478 = vunpack.c.l.b16 %v1447
  %v1479 = vunpack.c.h.b16 %v1447
  %v1480 = vunpack.c.l.b16 %v1448
  %v1481 = vunpack.c.l.b16 %v1449
  %v1482 = vunpack.c.h.b16 %v1449
  %v1483 = vunpack.c.l.b16 %v1450
  %v1484 = vunpack.c.l.b16 %v1451
  %v1485 = vunpack.c.h.b16 %v1451
  %v1486 = vunpack.c.l.b16 %v1452
  %v1487 = vunpack.c.l.b16 %v1453
  %v1488 = vunpack.c.h.b16 %v1453
  %v1489 = vunpack.c.l.b16 %v1454
  %v1490 = vpack.c.b16 %v1472, %v1469
  %v1491 = vpack.c.b16 %v1473, %v1470
  %v1492 = vpack.c.b16 %v1474, %v1471
  %v1493 = vpack.c.b16 %v1478, %v1475
  %v1494 = vpack.c.b16 %v1479, %v1476
  %v1495 = vpack.c.b16 %v1480, %v1477
  %v1496 = vpack.c.b16 %v1484, %v1481
  %v1497 = vpack.c.b16 %v1485, %v1482
  %v1498 = vpack.c.b16 %v1486, %v1483
  %v1499 = vpack.c.b16 %v1487, %v1487
  %v1500 = vpack.c.b16 %v1488, %v1488
  %v1501 = vpack.c.b16 %v1489, %v1489
  %vm1511 = vcmask 416768
  %v1513 = vsel %vm1511, %v992, 0
  %vm1515 = vcmask 1040384
  %vm1516 = vcmask 1041408
  %v1517 = vsel %vm1515, 4294967295, 65535
  %v1518 = vsel %vm1516, %v1517, 0
  %v1520 = vand.u32 %v1499, %v1518
  %v1523 = vand.u32 %v1500, %v1518
  %v1526 = vand.u32 %v1501, %v1518
  %1528 = vmatprep.subr.bf16.mxu0 %v1491
  %1529 = vmatpush1.bf16.msra.mxu0 %v1490
  %1530 = vmatprep.subr.bf16.mxu0 %v1494
  %1531 = vmatpush1.bf16.msra.mxu0 %v1493
  %1532 = vmatprep.subr.bf16.mxu0 %v1497
  %1533 = vmatpush1.bf16.msra.mxu0 %v1496
  %1534 = vmatprep.subr.bf16.mxu0 %v1523
  %1535 = vmatpush1.bf16.msra.mxu0 %v1520
  %1536 = vmatprep.subr.bf16.mxu0 0
  %1537 = vmatpush1.bf16.msra.mxu0 0
  %1538 = vmatprep.subr.bf16.mxu0 0
  %1539 = vmatpush1.bf16.msra.mxu0 0
  %1540 = vmatprep.subr.bf16.mxu0 0
  %1541 = vmatpush1.bf16.msra.mxu0 0
  %1542 = vmatprep.subr.bf16.mxu0 0
  %1543 = vmatpush1.bf16.msra.mxu0 0
  %1544 = vmatprep.subr.bf16.mxu0 0
  %1545 = vmatpush1.bf16.msra.mxu0 0
  %1546 = vmatprep.subr.bf16.mxu0 0
  %1547 = vmatpush1.bf16.msra.mxu0 0
  %1548 = vmatprep.subr.bf16.mxu0 0
  %1549 = vmatpush1.bf16.msra.mxu0 0
  %1550 = vmatprep.subr.bf16.mxu0 0
  %1551 = vmatpush1.bf16.msra.mxu0 0
  %1552 = vmatprep.subr.bf16.mxu0 0
  %1553 = vmatpush1.bf16.msra.mxu0 0
  %1554 = vmatprep.subr.bf16.mxu0 0
  %1555 = vmatpush1.bf16.msra.mxu0 0
  %1556 = vmatprep.subr.bf16.mxu0 0
  %1557 = vmatpush1.bf16.msra.mxu0 0
  %1558 = vmatprep.subr.bf16.mxu0 0
  %1559 = vmatpush1.bf16.msra.mxu0 0
  %1560 = vmatprep.mubr.bf16.mxu0 0
  %1561 = vmatmul.mubr.bf16.gmra.mrb[0].mxu0 %v1513
  %v1562 = vpop.f32.mrb[0].mxu0
  %v1563 = vadd.f32 0.0, %v1562
  %v1564 = vpop.f32.mrb[0].mxu0
  %v1565 = vadd.f32 0.0, %v1564
  %v1566 = vpop.f32.mrb[0].mxu0
  %v1567 = vadd.f32 0.0, %v1566
  %v1568 = vpop.f32.mrb[0].mxu0
  %v1569 = vadd.f32 0.0, %v1568
  %1570 = vdwg.mxu0
  %1571 = vmatprep.subr.bf16.mxu0 0
  %1572 = vmatpush1.bf16.msra.mxu0 %v1492
  %1573 = vmatprep.subr.bf16.mxu0 0
  %1574 = vmatpush1.bf16.msra.mxu0 %v1495
  %1575 = vmatprep.subr.bf16.mxu0 0
  %1576 = vmatpush1.bf16.msra.mxu0 %v1498
  %1577 = vmatprep.subr.bf16.mxu0 0
  %1578 = vmatpush1.bf16.msra.mxu0 %v1526
  %1579 = vmatprep.subr.bf16.mxu0 0
  %1580 = vmatpush1.bf16.msra.mxu0 0
  %1581 = vmatprep.subr.bf16.mxu0 0
  %1582 = vmatpush1.bf16.msra.mxu0 0
  %1583 = vmatprep.subr.bf16.mxu0 0
  %1584 = vmatpush1.bf16.msra.mxu0 0
  %1585 = vmatprep.subr.bf16.mxu0 0
  %1586 = vmatpush1.bf16.msra.mxu0 0
  %1587 = vmatprep.subr.bf16.mxu0 0
  %1588 = vmatpush1.bf16.msra.mxu0 0
  %1589 = vmatprep.subr.bf16.mxu0 0
  %1590 = vmatpush1.bf16.msra.mxu0 0
  %1591 = vmatprep.subr.bf16.mxu0 0
  %1592 = vmatpush1.bf16.msra.mxu0 0
  %1593 = vmatprep.subr.bf16.mxu0 0
  %1594 = vmatpush1.bf16.msra.mxu0 0
  %1595 = vmatprep.subr.bf16.mxu0 0
  %1596 = vmatpush1.bf16.msra.mxu0 0
  %1597 = vmatprep.subr.bf16.mxu0 0
  %1598 = vmatpush1.bf16.msra.mxu0 0
  %1599 = vmatprep.subr.bf16.mxu0 0
  %1600 = vmatpush1.bf16.msra.mxu0 0
  %1601 = vmatprep.subr.bf16.mxu0 0
  %1602 = vmatpush1.bf16.msra.mxu0 0
  %1603 = vmatprep.mubr.bf16.mxu0 0
  %1604 = vmatmul.mubr.bf16.gmra.mrb[0].mxu0 %v1513
  %v1605 = vpop.f32.mrb[0].mxu0
  %v1606 = vadd.f32 0.0, %v1605
  %v1607 = vpop.f32.mrb[0].mxu0
  %v1608 = vpop.f32.mrb[0].mxu0
  %v1609 = vadd.f32 0.0, %v1608
  %v1610 = vpop.f32.mrb[0].mxu0
  %1611 = vdwg.mxu0
  %v1612 = vadd.f32 %v1392, %v1563
  %v1613 = vadd.f32 %v1394, %v1565
  %v1614 = vadd.f32 %v1435, %v1606
  %v1615 = vadd.f32 %v1396, %v1567
  %v1616 = vadd.f32 %v1398, %v1569
  %v1617 = vadd.f32 %v1438, %v1609
  %v1618 = vld [vmem:[%s37] sm:$0xff]
  %v1619 = vld [vmem:[%s37 + $0x8] sm:$0xf]
  %v1620 = vld [vmem:[%s37 + $0xc] sm:$0xff]
  %v1621 = vld [vmem:[%s37 + $0x14] sm:$0xf]
  %v1622 = vld [vmem:[%s37 + $0x18] sm:$0xff]
  %v1623 = vld [vmem:[%s37 + $0x20] sm:$0xf]
  %v1624 = vld [vmem:[%s37 + $0x24] sm:$0x33]
  %v1625 = vld [vmem:[%s37 + $0x2c] sm:$0x3]
  %v1634 = vunpack.c.l.b16 %v1618
  %v1635 = vunpack.c.h.b16 %v1618
  %v1636 = vunpack.c.l.b16 %v1619
  %v1637 = vunpack.c.l.b16 %v1620
  %v1638 = vunpack.c.h.b16 %v1620
  %v1639 = vunpack.c.l.b16 %v1621
  %v1640 = vunpack.c.l.b16 %v1622
  %v1641 = vunpack.c.h.b16 %v1622
  %v1642 = vunpack.c.l.b16 %v1623
  %v1643 = vunpack.c.l.b16 %v1624
  %v1644 = vunpack.c.h.b16 %v1624
  %v1645 = vunpack.c.l.b16 %v1625
  %v1646 = vpack.c.b16 %v1637, %v1634
  %v1647 = vpack.c.b16 %v1638, %v1635
  %v1648 = vpack.c.b16 %v1639, %v1636
  %v1649 = vpack.c.b16 %v1643, %v1640
  %v1650 = vpack.c.b16 %v1644, %v1641
  %v1651 = vpack.c.b16 %v1645, %v1642
  %vm1655 = vcmask 220160
  %v1657 = vsel %vm1655, %v1019, 0
  %vm1659 = vcmask 1044480
  %v1660 = vsel %vm1659, 4294967295, 65535
  %v1661 = vsel %vm821, %v1660, 0
  %v1663 = vand.u32 %v1649, %v1661
  %v1666 = vand.u32 %v1650, %v1661
  %v1669 = vand.u32 %v1651, %v1661
  %1671 = vmatprep.subr.bf16.mxu0 %v1647
  %1672 = vmatpush1.bf16.msra.mxu0 %v1646
  %1673 = vmatprep.subr.bf16.mxu0 %v1666
  %1674 = vmatpush1.bf16.msra.mxu0 %v1663
  %1675 = vmatprep.subr.bf16.mxu0 0
  %1676 = vmatpush1.bf16.msra.mxu0 0
  %1677 = vmatprep.subr.bf16.mxu0 0
  %1678 = vmatpush1.bf16.msra.mxu0 0
  %1679 = vmatprep.subr.bf16.mxu0 0
  %1680 = vmatpush1.bf16.msra.mxu0 0
  %1681 = vmatprep.subr.bf16.mxu0 0
  %1682 = vmatpush1.bf16.msra.mxu0 0
  %1683 = vmatprep.subr.bf16.mxu0 0
  %1684 = vmatpush1.bf16.msra.mxu0 0
  %1685 = vmatprep.subr.bf16.mxu0 0
  %1686 = vmatpush1.bf16.msra.mxu0 0
  %1687 = vmatprep.subr.bf16.mxu0 0
  %1688 = vmatpush1.bf16.msra.mxu0 0
  %1689 = vmatprep.subr.bf16.mxu0 0
  %1690 = vmatpush1.bf16.msra.mxu0 0
  %1691 = vmatprep.subr.bf16.mxu0 0
  %1692 = vmatpush1.bf16.msra.mxu0 0
  %1693 = vmatprep.subr.bf16.mxu0 0
  %1694 = vmatpush1.bf16.msra.mxu0 0
  %1695 = vmatprep.subr.bf16.mxu0 0
  %1696 = vmatpush1.bf16.msra.mxu0 0
  %1697 = vmatprep.subr.bf16.mxu0 0
  %1698 = vmatpush1.bf16.msra.mxu0 0
  %1699 = vmatprep.subr.bf16.mxu0 0
  %1700 = vmatpush1.bf16.msra.mxu0 0
  %1701 = vmatprep.subr.bf16.mxu0 0
  %1702 = vmatpush1.bf16.msra.mxu0 0
  %1703 = vmatprep.mubr.bf16.mxu0 0
  %1704 = vmatmul.mubr.bf16.gmra.mrb[0].mxu0 %v1657
  %v1705 = vpop.f32.mrb[0].mxu0
  %v1706 = vadd.f32 0.0, %v1705
  %v1707 = vpop.f32.mrb[0].mxu0
  %v1708 = vadd.f32 0.0, %v1707
  %v1709 = vpop.f32.mrb[0].mxu0
  %v1710 = vadd.f32 0.0, %v1709
  %v1711 = vpop.f32.mrb[0].mxu0
  %v1712 = vadd.f32 0.0, %v1711
  %1713 = vdwg.mxu0
  %1714 = vmatprep.subr.bf16.mxu0 0
  %1715 = vmatpush1.bf16.msra.mxu0 %v1648
  %1716 = vmatprep.subr.bf16.mxu0 0
  %1717 = vmatpush1.bf16.msra.mxu0 %v1669
  %1718 = vmatprep.subr.bf16.mxu0 0
  %1719 = vmatpush1.bf16.msra.mxu0 0
  %1720 = vmatprep.subr.bf16.mxu0 0
  %1721 = vmatpush1.bf16.msra.mxu0 0
  %1722 = vmatprep.subr.bf16.mxu0 0
  %1723 = vmatpush1.bf16.msra.mxu0 0
  %1724 = vmatprep.subr.bf16.mxu0 0
  %1725 = vmatpush1.bf16.msra.mxu0 0
  %1726 = vmatprep.subr.bf16.mxu0 0
  %1727 = vmatpush1.bf16.msra.mxu0 0
  %1728 = vmatprep.subr.bf16.mxu0 0
  %1729 = vmatpush1.bf16.msra.mxu0 0
  %1730 = vmatprep.subr.bf16.mxu0 0
  %1731 = vmatpush1.bf16.msra.mxu0 0
  %1732 = vmatprep.subr.bf16.mxu0 0
  %1733 = vmatpush1.bf16.msra.mxu0 0
  %1734 = vmatprep.subr.bf16.mxu0 0
  %1735 = vmatpush1.bf16.msra.mxu0 0
  %1736 = vmatprep.subr.bf16.mxu0 0
  %1737 = vmatpush1.bf16.msra.mxu0 0
  %1738 = vmatprep.subr.bf16.mxu0 0
  %1739 = vmatpush1.bf16.msra.mxu0 0
  %1740 = vmatprep.subr.bf16.mxu0 0
  %1741 = vmatpush1.bf16.msra.mxu0 0
  %1742 = vmatprep.subr.bf16.mxu0 0
  %1743 = vmatpush1.bf16.msra.mxu0 0
  %1744 = vmatprep.subr.bf16.mxu0 0
  %1745 = vmatpush1.bf16.msra.mxu0 0
  %1746 = vmatprep.mubr.bf16.mxu0 0
  %1747 = vmatmul.mubr.bf16.gmra.mrb[0].mxu0 %v1657
  %v1748 = vpop.f32.mrb[0].mxu0
  %v1749 = vadd.f32 0.0, %v1748
  %v1750 = vpop.f32.mrb[0].mxu0
  %v1751 = vpop.f32.mrb[0].mxu0
  %v1752 = vadd.f32 0.0, %v1751
  %v1753 = vpop.f32.mrb[0].mxu0
  %1754 = vdwg.mxu0
  %v1755 = vadd.f32 %v1612, %v1706
  %v1756 = vadd.f32 %v1613, %v1708
  %v1757 = vadd.f32 %v1614, %v1749
  %v1758 = vadd.f32 %v1615, %v1710
  %v1759 = vadd.f32 %v1616, %v1712
  %v1760 = vadd.f32 %v1617, %v1752
  %v1761 = vld [vmem:[%s39] sm:$0x7]
  %v1763 = vlaneseq
  %v1764 = vshrl.u32 %v1763, 7
  %v1765 = vsub.s32 0, %v1764
  %v1766 = vrot.slane %v1761, %v1765
  %v1767 = vlaneseq
  %v1768 = vshrl.u32 %v1767, 7
  %v1769 = vsub.s32 1, %v1768
  %v1770 = vrot.slane %v1761, %v1769
  %v1771 = vlaneseq
  %v1772 = vshrl.u32 %v1771, 7
  %v1773 = vsub.s32 2, %v1772
  %v1774 = vrot.slane %v1761, %v1773
  %v1778 = vadd.f32 %v1755, %v1766
  %v1779 = vadd.f32 %v1756, %v1770
  %v1780 = vadd.f32 %v1757, %v1774
  %v1781 = vadd.f32 %v1758, %v1766
  %v1782 = vadd.f32 %v1759, %v1770
  %v1783 = vadd.f32 %v1760, %v1774
  %v1784 = vmin.f32 %v1778, 20.0
  %v1785 = vmin.f32 %v1779, 20.0
  %v1786 = vmin.f32 %v1780, 20.0
  %v1787 = vmin.f32 %v1781, 20.0
  %v1788 = vmin.f32 %v1782, 20.0
  %v1789 = vmin.f32 %v1783, 20.0
  %v1790 = vmul.f32 %v1784, 1.442695
  %v1791 = vpow.pop %v1790
  %v1792 = vmul.f32 %v1785, 1.442695
  %v1793 = vpow.pop %v1792
  %v1794 = vmul.f32 %v1786, 1.442695
  %v1795 = vpow.pop %v1794
  %v1796 = vmul.f32 %v1787, 1.442695
  %v1797 = vpow.pop %v1796
  %v1798 = vmul.f32 %v1788, 1.442695
  %v1799 = vpow.pop %v1798
  %v1800 = vmul.f32 %v1789, 1.442695
  %v1801 = vpow.pop %v1800
  %v1802 = vadd.f32 %v1791, 2.0
  %v1803 = vadd.f32 %v1793, 2.0
  %v1804 = vadd.f32 %v1795, 2.0
  %v1805 = vadd.f32 %v1797, 2.0
  %v1806 = vadd.f32 %v1799, 2.0
  %v1807 = vadd.f32 %v1801, 2.0
  %v1808 = vmul.f32 %v1791, %v1802
  %v1809 = vmul.f32 %v1793, %v1803
  %v1810 = vmul.f32 %v1795, %v1804
  %v1811 = vmul.f32 %v1797, %v1805
  %v1812 = vmul.f32 %v1799, %v1806
  %v1813 = vmul.f32 %v1801, %v1807
  %v1814 = vadd.f32 %v1808, 2.0
  %v1815 = vadd.f32 %v1809, 2.0
  %v1816 = vadd.f32 %v1810, 2.0
  %v1817 = vadd.f32 %v1811, 2.0
  %v1818 = vadd.f32 %v1812, 2.0
  %v1819 = vadd.f32 %v1813, 2.0
  %v1820 = vrcp.pop %v1814
  %v1821 = vrcp.pop %v1815
  %v1822 = vrcp.pop %v1816
  %v1823 = vrcp.pop %v1817
  %v1824 = vrcp.pop %v1818
  %v1825 = vrcp.pop %v1819
  %v1826 = vmul.f32 %v1808, %v1820
  %v1827 = vmul.f32 %v1809, %v1821
  %v1828 = vmul.f32 %v1810, %v1822
  %v1829 = vmul.f32 %v1811, %v1823
  %v1830 = vmul.f32 %v1812, %v1824
  %v1831 = vmul.f32 %v1813, %v1825
  %vm1832 = vcmp.gt.f32.partialorder %v1778, 20.0
  %vm1833 = vcmp.gt.f32.partialorder %v1779, 20.0
  %vm1834 = vcmp.gt.f32.partialorder %v1780, 20.0
  %vm1835 = vcmp.gt.f32.partialorder %v1781, 20.0
  %vm1836 = vcmp.gt.f32.partialorder %v1782, 20.0
  %vm1837 = vcmp.gt.f32.partialorder %v1783, 20.0
  %v1838 = vmul.f32 %v1778, %v1826
  %v1839 = vmul.f32 %v1779, %v1827
  %v1840 = vmul.f32 %v1780, %v1828
  %v1841 = vmul.f32 %v1781, %v1829
  %v1842 = vmul.f32 %v1782, %v1830
  %v1843 = vmul.f32 %v1783, %v1831
  %v1844 = vsel %vm1832, %v1778, %v1838
  %v1845 = vsel %vm1833, %v1779, %v1839
  %v1846 = vsel %vm1834, %v1780, %v1840
  %v1847 = vsel %vm1835, %v1781, %v1841
  %v1848 = vsel %vm1836, %v1782, %v1842
  %v1849 = vsel %vm1837, %v1783, %v1843
  %v1850 = vpack.c.bf16 %v1847, %v1844
  %v1851 = vpack.c.bf16 %v1848, %v1845
  %v1852 = vpack.c.bf16 %v1849, %v1846
  %v1853 = vld [vmem:[%s41] sm:$0xff]
  %v1854 = vld [vmem:[%s41 + $0x8] sm:$0xff]
  %v1855 = vld [vmem:[%s41 + $0x10] sm:$0xff]
  %v1856 = vld [vmem:[%s41 + $0x18] sm:$0xff]
  %v1857 = vld [vmem:[%s41 + $0x20] sm:$0xff]
  %v1858 = vld [vmem:[%s41 + $0x28] sm:$0xff]
  %v1859 = vld [vmem:[%s41 + $0x30] sm:$0xff]
  %v1860 = vld [vmem:[%s41 + $0x38] sm:$0xff]
  %v1861 = vld [vmem:[%s41 + $0x40] sm:$0xff]
  %v1862 = vld [vmem:[%s41 + $0x48] sm:$0xff]
  %v1863 = vld [vmem:[%s41 + $0x50] sm:$0xff]
  %v1864 = vld [vmem:[%s41 + $0x58] sm:$0xff]
  %v1865 = vld [vmem:[%s41 + $0x60] sm:$0xff]
  %v1866 = vld [vmem:[%s41 + $0x68] sm:$0xff]
  %v1867 = vld [vmem:[%s41 + $0x70] sm:$0xff]
  %v1868 = vld [vmem:[%s41 + $0x78] sm:$0xff]
  %v1869 = vld [vmem:[%s41 + $0x80] sm:$0xff]
  %v1870 = vld [vmem:[%s41 + $0x88] sm:$0xff]
  %v1871 = vld [vmem:[%s41 + $0x90] sm:$0xff]
  %v1872 = vld [vmem:[%s41 + $0x98] sm:$0xff]
  %v1873 = vld [vmem:[%s41 + $0xa0] sm:$0xff]
  %v1874 = vld [vmem:[%s41 + $0xa8] sm:$0xff]
  %v1875 = vld [vmem:[%s41 + $0xb0] sm:$0xff]
  %v1876 = vld [vmem:[%s41 + $0xb8] sm:$0xff]
  %v1877 = vld [vmem:[%s41 + $0xc0] sm:$0xff]
  %v1878 = vld [vmem:[%s41 + $0xc8] sm:$0xff]
  %v1879 = vld [vmem:[%s41 + $0xd0] sm:$0xff]
  %v1880 = vld [vmem:[%s41 + $0xd8] sm:$0xff]
  %v1881 = vld [vmem:[%s41 + $0xe0] sm:$0xff]
  %v1882 = vld [vmem:[%s41 + $0xe8] sm:$0xff]
  %v1883 = vld [vmem:[%s41 + $0xf0] sm:$0xff]
  %v1884 = vld [vmem:[%s41 + $0xf8] sm:$0xff]
  %v1885 = vld [vmem:[%s41 + $0x100] sm:$0xff]
  %v1886 = vld [vmem:[%s41 + $0x108] sm:$0xff]
  %v1887 = vld [vmem:[%s41 + $0x110] sm:$0xff]
  %v1888 = vld [vmem:[%s41 + $0x118] sm:$0xff]
  %v1889 = vld [vmem:[%s41 + $0x120] sm:$0xff]
  %v1890 = vld [vmem:[%s41 + $0x128] sm:$0xff]
  %v1891 = vld [vmem:[%s41 + $0x130] sm:$0xff]
  %v1892 = vld [vmem:[%s41 + $0x138] sm:$0xff]
  %v1893 = vld [vmem:[%s43] sm:$0x3]
  %v1895 = vlaneseq
  %v1896 = vshrl.u32 %v1895, 7
  %v1897 = vsub.s32 0, %v1896
  %v1898 = vrot.slane %v1893, %v1897
  %v1899 = vlaneseq
  %v1900 = vshrl.u32 %v1899, 7
  %v1901 = vsub.s32 1, %v1900
  %v1902 = vrot.slane %v1893, %v1901
  %v1945 = vunpack.c.l.b16 %v1853
  %v1946 = vunpack.c.h.b16 %v1853
  %v1947 = vunpack.c.l.b16 %v1854
  %v1948 = vunpack.c.h.b16 %v1854
  %v1949 = vunpack.c.l.b16 %v1855
  %v1950 = vunpack.c.h.b16 %v1855
  %v1951 = vunpack.c.l.b16 %v1856
  %v1952 = vunpack.c.h.b16 %v1856
  %v1953 = vunpack.c.l.b16 %v1857
  %v1954 = vunpack.c.h.b16 %v1857
  %v1955 = vunpack.c.l.b16 %v1858
  %v1956 = vunpack.c.h.b16 %v1858
  %v1957 = vunpack.c.l.b16 %v1859
  %v1958 = vunpack.c.h.b16 %v1859
  %v1959 = vunpack.c.l.b16 %v1860
  %v1960 = vunpack.c.h.b16 %v1860
  %v1961 = vunpack.c.l.b16 %v1861
  %v1962 = vunpack.c.h.b16 %v1861
  %v1963 = vunpack.c.l.b16 %v1862
  %v1964 = vunpack.c.h.b16 %v1862
  %v1965 = vunpack.c.l.b16 %v1863
  %v1966 = vunpack.c.h.b16 %v1863
  %v1967 = vunpack.c.l.b16 %v1864
  %v1968 = vunpack.c.h.b16 %v1864
  %v1969 = vunpack.c.l.b16 %v1865
  %v1970 = vunpack.c.h.b16 %v1865
  %v1971 = vunpack.c.l.b16 %v1866
  %v1972 = vunpack.c.h.b16 %v1866
  %v1973 = vunpack.c.l.b16 %v1867
  %v1974 = vunpack.c.h.b16 %v1867
  %v1975 = vunpack.c.l.b16 %v1868
  %v1976 = vunpack.c.h.b16 %v1868
  %v1977 = vunpack.c.l.b16 %v1869
  %v1978 = vunpack.c.h.b16 %v1869
  %v1979 = vunpack.c.l.b16 %v1870
  %v1980 = vunpack.c.h.b16 %v1870
  %v1981 = vunpack.c.l.b16 %v1871
  %v1982 = vunpack.c.h.b16 %v1871
  %v1983 = vunpack.c.l.b16 %v1872
  %v1984 = vunpack.c.h.b16 %v1872
  %v1985 = vunpack.c.l.b16 %v1873
  %v1986 = vunpack.c.h.b16 %v1873
  %v1987 = vunpack.c.l.b16 %v1874
  %v1988 = vunpack.c.h.b16 %v1874
  %v1989 = vunpack.c.l.b16 %v1875
  %v1990 = vunpack.c.h.b16 %v1875
  %v1991 = vunpack.c.l.b16 %v1876
  %v1992 = vunpack.c.h.b16 %v1876
  %v1993 = vunpack.c.l.b16 %v1877
  %v1994 = vunpack.c.h.b16 %v1877
  %v1995 = vunpack.c.l.b16 %v1878
  %v1996 = vunpack.c.h.b16 %v1878
  %v1997 = vunpack.c.l.b16 %v1879
  %v1998 = vunpack.c.h.b16 %v1879
  %v1999 = vunpack.c.l.b16 %v1880
  %v2000 = vunpack.c.h.b16 %v1880
  %v2001 = vunpack.c.l.b16 %v1881
  %v2002 = vunpack.c.h.b16 %v1881
  %v2003 = vunpack.c.l.b16 %v1882
  %v2004 = vunpack.c.h.b16 %v1882
  %v2005 = vunpack.c.l.b16 %v1883
  %v2006 = vunpack.c.h.b16 %v1883
  %v2007 = vunpack.c.l.b16 %v1884
  %v2008 = vunpack.c.h.b16 %v1884
  %v2009 = vunpack.c.l.b16 %v1885
  %v2010 = vunpack.c.h.b16 %v1885
  %v2011 = vunpack.c.l.b16 %v1886
  %v2012 = vunpack.c.h.b16 %v1886
  %v2013 = vunpack.c.l.b16 %v1887
  %v2014 = vunpack.c.h.b16 %v1887
  %v2015 = vunpack.c.l.b16 %v1888
  %v2016 = vunpack.c.h.b16 %v1888
  %v2017 = vunpack.c.l.b16 %v1889
  %v2018 = vunpack.c.h.b16 %v1889
  %v2019 = vunpack.c.l.b16 %v1890
  %v2020 = vunpack.c.h.b16 %v1890
  %v2021 = vunpack.c.l.b16 %v1891
  %v2022 = vunpack.c.h.b16 %v1891
  %v2023 = vunpack.c.l.b16 %v1892
  %v2024 = vunpack.c.h.b16 %v1892
  %v2025 = vpack.c.b16 %v1947, %v1945
  %v2026 = vpack.c.b16 %v1948, %v1946
  %v2027 = vpack.c.b16 %v1951, %v1949
  %v2028 = vpack.c.b16 %v1952, %v1950
  %v2029 = vpack.c.b16 %v1955, %v1953
  %v2030 = vpack.c.b16 %v1956, %v1954
  %v2031 = vpack.c.b16 %v1959, %v1957
  %v2032 = vpack.c.b16 %v1960, %v1958
  %v2033 = vpack.c.b16 %v1963, %v1961
  %v2034 = vpack.c.b16 %v1964, %v1962
  %v2035 = vpack.c.b16 %v1967, %v1965
  %v2036 = vpack.c.b16 %v1968, %v1966
  %v2037 = vpack.c.b16 %v1971, %v1969
  %v2038 = vpack.c.b16 %v1972, %v1970
  %v2039 = vpack.c.b16 %v1975, %v1973
  %v2040 = vpack.c.b16 %v1976, %v1974
  %v2041 = vpack.c.b16 %v1979, %v1977
  %v2042 = vpack.c.b16 %v1980, %v1978
  %v2043 = vpack.c.b16 %v1983, %v1981
  %v2044 = vpack.c.b16 %v1984, %v1982
  %v2045 = vpack.c.b16 %v1987, %v1985
  %v2046 = vpack.c.b16 %v1988, %v1986
  %v2047 = vpack.c.b16 %v1991, %v1989
  %v2048 = vpack.c.b16 %v1992, %v1990
  %v2049 = vpack.c.b16 %v1995, %v1993
  %v2050 = vpack.c.b16 %v1996, %v1994
  %v2051 = vpack.c.b16 %v1999, %v1997
  %v2052 = vpack.c.b16 %v2000, %v1998
  %v2053 = vpack.c.b16 %v2003, %v2001
  %v2054 = vpack.c.b16 %v2004, %v2002
  %v2055 = vpack.c.b16 %v2007, %v2005
  %v2056 = vpack.c.b16 %v2008, %v2006
  %v2057 = vpack.c.b16 %v2011, %v2009
  %v2058 = vpack.c.b16 %v2012, %v2010
  %v2059 = vpack.c.b16 %v2015, %v2013
  %v2060 = vpack.c.b16 %v2016, %v2014
  %v2061 = vpack.c.b16 %v2019, %v2017
  %v2062 = vpack.c.b16 %v2020, %v2018
  %v2063 = vpack.c.b16 %v2023, %v2021
  %v2064 = vpack.c.b16 %v2024, %v2022
  %vm2105 = vcmask 523264
  %v2107 = vsel %vm2105, %v1852, 0
  %2109 = vmatprep.subr.bf16.mxu0 %v2026
  %2110 = vmatpush1.bf16.msra.mxu0 %v2025
  %2111 = vmatprep.subr.bf16.mxu0 %v2028
  %2112 = vmatpush1.bf16.msra.mxu0 %v2027
  %2113 = vmatprep.subr.bf16.mxu0 %v2030
  %2114 = vmatpush1.bf16.msra.mxu0 %v2029
  %2115 = vmatprep.subr.bf16.mxu0 %v2032
  %2116 = vmatpush1.bf16.msra.mxu0 %v2031
  %2117 = vmatprep.subr.bf16.mxu0 %v2034
  %2118 = vmatpush1.bf16.msra.mxu0 %v2033
  %2119 = vmatprep.subr.bf16.mxu0 %v2036
  %2120 = vmatpush1.bf16.msra.mxu0 %v2035
  %2121 = vmatprep.subr.bf16.mxu0 %v2038
  %2122 = vmatpush1.bf16.msra.mxu0 %v2037
  %2123 = vmatprep.subr.bf16.mxu0 %v2040
  %2124 = vmatpush1.bf16.msra.mxu0 %v2039
  %2125 = vmatprep.subr.bf16.mxu0 %v2042
  %2126 = vmatpush1.bf16.msra.mxu0 %v2041
  %2127 = vmatprep.subr.bf16.mxu0 %v2044
  %2128 = vmatpush1.bf16.msra.mxu0 %v2043
  %2129 = vmatprep.subr.bf16.mxu0 %v2046
  %2130 = vmatpush1.bf16.msra.mxu0 %v2045
  %2131 = vmatprep.subr.bf16.mxu0 %v2048
  %2132 = vmatpush1.bf16.msra.mxu0 %v2047
  %2133 = vmatprep.subr.bf16.mxu0 %v2050
  %2134 = vmatpush1.bf16.msra.mxu0 %v2049
  %2135 = vmatprep.subr.bf16.mxu0 %v2052
  %2136 = vmatpush1.bf16.msra.mxu0 %v2051
  %2137 = vmatprep.subr.bf16.mxu0 %v2054
  %2138 = vmatpush1.bf16.msra.mxu0 %v2053
  %2139 = vmatprep.subr.bf16.mxu0 %v2056
  %2140 = vmatpush1.bf16.msra.mxu0 %v2055
  %2141 = vmatprep.mubr.bf16.mxu0 %v1851
  %2142 = vmatmul.mubr.bf16.gmra.mrb[0].mxu0 %v1850
  %v2143 = vpop.f32.mrb[0].mxu0
  %v2144 = vadd.f32 %v1898, %v2143
  %v2145 = vpop.f32.mrb[0].mxu0
  %v2146 = vadd.f32 %v1902, %v2145
  %v2147 = vpop.f32.mrb[0].mxu0
  %v2148 = vadd.f32 %v1898, %v2147
  %v2149 = vpop.f32.mrb[0].mxu0
  %v2150 = vadd.f32 %v1902, %v2149
  %2151 = vdwg.mxu0
  %2152 = vmatprep.subr.bf16.mxu0 %v2058
  %2153 = vmatpush1.bf16.msra.mxu0 %v2057
  %2154 = vmatprep.subr.bf16.mxu0 %v2060
  %2155 = vmatpush1.bf16.msra.mxu0 %v2059
  %2156 = vmatprep.subr.bf16.mxu0 %v2062
  %2157 = vmatpush1.bf16.msra.mxu0 %v2061
  %2158 = vmatprep.subr.bf16.mxu0 %v2064
  %2159 = vmatpush1.bf16.msra.mxu0 %v2063
  %2160 = vmatprep.subr.bf16.mxu0 0
  %2161 = vmatpush1.bf16.msra.mxu0 0
  %2162 = vmatprep.subr.bf16.mxu0 0
  %2163 = vmatpush1.bf16.msra.mxu0 0
  %2164 = vmatprep.subr.bf16.mxu0 0
  %2165 = vmatpush1.bf16.msra.mxu0 0
  %2166 = vmatprep.subr.bf16.mxu0 0
  %2167 = vmatpush1.bf16.msra.mxu0 0
  %2168 = vmatprep.subr.bf16.mxu0 0
  %2169 = vmatpush1.bf16.msra.mxu0 0
  %2170 = vmatprep.subr.bf16.mxu0 0
  %2171 = vmatpush1.bf16.msra.mxu0 0
  %2172 = vmatprep.subr.bf16.mxu0 0
  %2173 = vmatpush1.bf16.msra.mxu0 0
  %2174 = vmatprep.subr.bf16.mxu0 0
  %2175 = vmatpush1.bf16.msra.mxu0 0
  %2176 = vmatprep.subr.bf16.mxu0 0
  %2177 = vmatpush1.bf16.msra.mxu0 0
  %2178 = vmatprep.subr.bf16.mxu0 0
  %2179 = vmatpush1.bf16.msra.mxu0 0
  %2180 = vmatprep.subr.bf16.mxu0 0
  %2181 = vmatpush1.bf16.msra.mxu0 0
  %2182 = vmatprep.subr.bf16.mxu0 0
  %2183 = vmatpush1.bf16.msra.mxu0 0
  %2184 = vmatprep.mubr.bf16.mxu0 0
  %2185 = vmatmul.mubr.bf16.gmra.mrb[0].mxu0 %v2107
  %v2186 = vpop.f32.mrb[0].mxu0
  %v2187 = vadd.f32 %v2144, %v2186
  %v2188 = vpop.f32.mrb[0].mxu0
  %v2189 = vadd.f32 %v2146, %v2188
  %v2190 = vpop.f32.mrb[0].mxu0
  %v2191 = vadd.f32 %v2148, %v2190
  %v2192 = vpop.f32.mrb[0].mxu0
  %v2193 = vadd.f32 %v2150, %v2192
  %2194 = vdwg.mxu0
  %v2195 = vmin.f32 %v2187, 20.0
  %v2196 = vmin.f32 %v2189, 20.0
  %v2197 = vmin.f32 %v2191, 20.0
  %v2198 = vmin.f32 %v2193, 20.0
  %v2199 = vmul.f32 %v2195, 1.442695
  %v2200 = vpow.pop %v2199
  %v2201 = vmul.f32 %v2196, 1.442695
  %v2202 = vpow.pop %v2201
  %v2203 = vmul.f32 %v2197, 1.442695
  %v2204 = vpow.pop %v2203
  %v2205 = vmul.f32 %v2198, 1.442695
  %v2206 = vpow.pop %v2205
  %v2207 = vadd.f32 %v2200, 2.0
  %v2208 = vadd.f32 %v2202, 2.0
  %v2209 = vadd.f32 %v2204, 2.0
  %v2210 = vadd.f32 %v2206, 2.0
  %v2211 = vmul.f32 %v2200, %v2207
  %v2212 = vmul.f32 %v2202, %v2208
  %v2213 = vmul.f32 %v2204, %v2209
  %v2214 = vmul.f32 %v2206, %v2210
  %v2215 = vadd.f32 %v2211, 2.0
  %v2216 = vadd.f32 %v2212, 2.0
  %v2217 = vadd.f32 %v2213, 2.0
  %v2218 = vadd.f32 %v2214, 2.0
  %v2219 = vrcp.pop %v2215
  %v2220 = vrcp.pop %v2216
  %v2221 = vrcp.pop %v2217
  %v2222 = vrcp.pop %v2218
  %v2223 = vmul.f32 %v2211, %v2219
  %v2224 = vmul.f32 %v2212, %v2220
  %v2225 = vmul.f32 %v2213, %v2221
  %v2226 = vmul.f32 %v2214, %v2222
  %vm2227 = vcmp.gt.f32.partialorder %v2187, 20.0
  %vm2228 = vcmp.gt.f32.partialorder %v2189, 20.0
  %vm2229 = vcmp.gt.f32.partialorder %v2191, 20.0
  %vm2230 = vcmp.gt.f32.partialorder %v2193, 20.0
  %v2231 = vmul.f32 %v2187, %v2223
  %v2232 = vmul.f32 %v2189, %v2224
  %v2233 = vmul.f32 %v2191, %v2225
  %v2234 = vmul.f32 %v2193, %v2226
  %v2235 = vsel %vm2227, %v2187, %v2231
  %v2236 = vsel %vm2228, %v2189, %v2232
  %v2237 = vsel %vm2229, %v2191, %v2233
  %v2238 = vsel %vm2230, %v2193, %v2234
  %v2239 = vpack.c.bf16 %v2237, %v2235
  %v2240 = vpack.c.bf16 %v2238, %v2236
  %v2241 = vld [vmem:[%s45] sm:$0xf]
  %v2242 = vld [vmem:[%s45 + $0x4] sm:$0xf]
  %v2243 = vld [vmem:[%s45 + $0x8] sm:$0xf]
  %v2244 = vld [vmem:[%s45 + $0xc] sm:$0xf]
  %v2245 = vld [vmem:[%s45 + $0x10] sm:$0xf]
  %v2246 = vld [vmem:[%s45 + $0x14] sm:$0xf]
  %v2247 = vld [vmem:[%s45 + $0x18] sm:$0xf]
  %v2248 = vld [vmem:[%s45 + $0x1c] sm:$0xf]
  %v2249 = vld [vmem:[%s45 + $0x20] sm:$0xf]
  %v2250 = vld [vmem:[%s45 + $0x24] sm:$0xf]
  %v2251 = vld [vmem:[%s45 + $0x28] sm:$0xf]
  %v2252 = vld [vmem:[%s45 + $0x2c] sm:$0xf]
  %v2253 = vld [vmem:[%s45 + $0x30] sm:$0xf]
  %v2254 = vld [vmem:[%s45 + $0x34] sm:$0xf]
  %v2255 = vld [vmem:[%s45 + $0x38] sm:$0xf]
  %v2256 = vld [vmem:[%s45 + $0x3c] sm:$0xf]
  %v2257 = vld [vmem:[%s45 + $0x40] sm:$0xf]
  %v2258 = vld [vmem:[%s45 + $0x44] sm:$0xf]
  %v2259 = vld [vmem:[%s45 + $0x48] sm:$0xf]
  %v2260 = vld [vmem:[%s45 + $0x4c] sm:$0xf]
  %v2261 = vld [vmem:[%s45 + $0x50] sm:$0xf]
  %v2262 = vld [vmem:[%s45 + $0x54] sm:$0xf]
  %v2263 = vld [vmem:[%s45 + $0x58] sm:$0xf]
  %v2264 = vld [vmem:[%s45 + $0x5c] sm:$0xf]
  %v2265 = vld [vmem:[%s47] sm:$0x1]
  %v2267 = vlaneseq
  %v2268 = vshrl.u32 %v2267, 7
  %v2269 = vsub.s32 0, %v2268
  %v2270 = vrot.slane %v2265, %v2269
  %v2296 = vunpack.c.l.b16 %v2241
  %v2297 = vunpack.c.l.b16 %v2242
  %v2298 = vunpack.c.l.b16 %v2243
  %v2299 = vunpack.c.l.b16 %v2244
  %v2300 = vunpack.c.l.b16 %v2245
  %v2301 = vunpack.c.l.b16 %v2246
  %v2302 = vunpack.c.l.b16 %v2247
  %v2303 = vunpack.c.l.b16 %v2248
  %v2304 = vunpack.c.l.b16 %v2249
  %v2305 = vunpack.c.l.b16 %v2250
  %v2306 = vunpack.c.l.b16 %v2251
  %v2307 = vunpack.c.l.b16 %v2252
  %v2308 = vunpack.c.l.b16 %v2253
  %v2309 = vunpack.c.l.b16 %v2254
  %v2310 = vunpack.c.l.b16 %v2255
  %v2311 = vunpack.c.l.b16 %v2256
  %v2312 = vunpack.c.l.b16 %v2257
  %v2313 = vunpack.c.l.b16 %v2258
  %v2314 = vunpack.c.l.b16 %v2259
  %v2315 = vunpack.c.l.b16 %v2260
  %v2316 = vunpack.c.l.b16 %v2261
  %v2317 = vunpack.c.l.b16 %v2262
  %v2318 = vunpack.c.l.b16 %v2263
  %v2319 = vunpack.c.l.b16 %v2264
  %v2320 = vpack.c.b16 %v2297, %v2296
  %v2321 = vpack.c.b16 %v2299, %v2298
  %v2322 = vpack.c.b16 %v2301, %v2300
  %v2323 = vpack.c.b16 %v2303, %v2302
  %v2324 = vpack.c.b16 %v2305, %v2304
  %v2325 = vpack.c.b16 %v2307, %v2306
  %v2326 = vpack.c.b16 %v2309, %v2308
  %v2327 = vpack.c.b16 %v2311, %v2310
  %v2328 = vpack.c.b16 %v2313, %v2312
  %v2329 = vpack.c.b16 %v2315, %v2314
  %v2330 = vpack.c.b16 %v2317, %v2316
  %v2331 = vpack.c.b16 %v2319, %v2318
  %v2345 = vsel %vm2105, %v2240, 0
  %2347 = vmatprep.subr.bf16.mxu0 0
  %2348 = vmatpush1.bf16.msra.mxu0 %v2320
  %2349 = vmatprep.subr.bf16.mxu0 0
  %2350 = vmatpush1.bf16.msra.mxu0 %v2321
  %2351 = vmatprep.subr.bf16.mxu0 0
  %2352 = vmatpush1.bf16.msra.mxu0 %v2322
  %2353 = vmatprep.subr.bf16.mxu0 0
  %2354 = vmatpush1.bf16.msra.mxu0 %v2323
  %2355 = vmatprep.subr.bf16.mxu0 0
  %2356 = vmatpush1.bf16.msra.mxu0 %v2324
  %2357 = vmatprep.subr.bf16.mxu0 0
  %2358 = vmatpush1.bf16.msra.mxu0 %v2325
  %2359 = vmatprep.subr.bf16.mxu0 0
  %2360 = vmatpush1.bf16.msra.mxu0 %v2326
  %2361 = vmatprep.subr.bf16.mxu0 0
  %2362 = vmatpush1.bf16.msra.mxu0 %v2327
  %2363 = vmatprep.subr.bf16.mxu0 0
  %2364 = vmatpush1.bf16.msra.mxu0 %v2328
  %2365 = vmatprep.subr.bf16.mxu0 0
  %2366 = vmatpush1.bf16.msra.mxu0 %v2329
  %2367 = vmatprep.subr.bf16.mxu0 0
  %2368 = vmatpush1.bf16.msra.mxu0 %v2330
  %2369 = vmatprep.subr.bf16.mxu0 0
  %2370 = vmatpush1.bf16.msra.mxu0 %v2331
  %2371 = vmatprep.subr.bf16.mxu0 0
  %2372 = vmatpush1.bf16.msra.mxu0 0
  %2373 = vmatprep.subr.bf16.mxu0 0
  %2374 = vmatpush1.bf16.msra.mxu0 0
  %2375 = vmatprep.subr.bf16.mxu0 0
  %2376 = vmatpush1.bf16.msra.mxu0 0
  %2377 = vmatprep.subr.bf16.mxu0 0
  %2378 = vmatpush1.bf16.msra.mxu0 0
  %2379 = vmatprep.mubr.bf16.mxu0 %v2345
  %2380 = vmatmul.mubr.bf16.gmra.mrb[0].mxu0 %v2239
  %v2381 = vpop.f32.mrb[0].mxu0
  %v2382 = vadd.f32 %v2270, %v2381
  %v2383 = vpop.f32.mrb[0].mxu0
  %v2384 = vpop.f32.mrb[0].mxu0
  %v2385 = vadd.f32 %v2270, %v2384
  %v2386 = vpop.f32.mrb[0].mxu0
  %2387 = vdwg.mxu0
  %v2388 = vmin.f32 %v2382, 20.0
  %v2389 = vmin.f32 %v2385, 20.0
  %v2390 = vmul.f32 %v2388, 1.442695
  %v2391 = vpow.pop %v2390
  %v2392 = vmul.f32 %v2389, 1.442695
  %v2393 = vpow.pop %v2392
  %v2394 = vadd.f32 %v2391, 2.0
  %v2395 = vadd.f32 %v2393, 2.0
  %v2396 = vmul.f32 %v2391, %v2394
  %v2397 = vmul.f32 %v2393, %v2395
  %v2398 = vadd.f32 %v2396, 2.0
  %v2399 = vadd.f32 %v2397, 2.0
  %v2400 = vrcp.pop %v2398
  %v2401 = vrcp.pop %v2399
  %v2402 = vmul.f32 %v2396, %v2400
  %v2403 = vmul.f32 %v2397, %v2401
  %vm2404 = vcmp.gt.f32.partialorder %v2382, 20.0
  %vm2405 = vcmp.gt.f32.partialorder %v2385, 20.0
  %v2406 = vmul.f32 %v2382, %v2402
  %v2407 = vmul.f32 %v2385, %v2403
  %v2408 = vsel %vm2404, %v2382, %v2406
  %v2409 = vsel %vm2405, %v2385, %v2407
  %v2410 = vpack.c.bf16 %v2409, %v2408
  %v2411 = vld [vmem:[%s49] sm:$0xf]
  %v2412 = vld [vmem:[%s49 + $0x4] sm:$0xf]
  %v2413 = vld [vmem:[%s49 + $0x8] sm:$0xf]
  %v2414 = vld [vmem:[%s49 + $0xc] sm:$0xf]
  %v2415 = vld [vmem:[%s49 + $0x10] sm:$0xf]
  %v2416 = vld [vmem:[%s49 + $0x14] sm:$0xf]
  %v2417 = vld [vmem:[%s49 + $0x18] sm:$0xf]
  %v2418 = vld [vmem:[%s49 + $0x1c] sm:$0xf]
  %v2419 = vld [vmem:[%s49 + $0x20] sm:$0xf]
  %v2420 = vld [vmem:[%s49 + $0x24] sm:$0xf]
  %v2421 = vld [vmem:[%s49 + $0x28] sm:$0xf]
  %v2422 = vld [vmem:[%s49 + $0x2c] sm:$0xf]
  %v2423 = vld [vmem:[%s51] sm:$0x1]
  %v2425 = vlaneseq
  %v2426 = vshrl.u32 %v2425, 7
  %v2427 = vsub.s32 0, %v2426
  %v2428 = vrot.slane %v2423, %v2427
  %v2442 = vunpack.c.l.b16 %v2411
  %v2443 = vunpack.c.l.b16 %v2412
  %v2444 = vunpack.c.l.b16 %v2413
  %v2445 = vunpack.c.l.b16 %v2414
  %v2446 = vunpack.c.l.b16 %v2415
  %v2447 = vunpack.c.l.b16 %v2416
  %v2448 = vunpack.c.l.b16 %v2417
  %v2449 = vunpack.c.l.b16 %v2418
  %v2450 = vunpack.c.l.b16 %v2419
  %v2451 = vunpack.c.l.b16 %v2420
  %v2452 = vunpack.c.l.b16 %v2421
  %v2453 = vunpack.c.l.b16 %v2422
  %v2454 = vpack.c.b16 %v2443, %v2442
  %v2455 = vpack.c.b16 %v2445, %v2444
  %v2456 = vpack.c.b16 %v2447, %v2446
  %v2457 = vpack.c.b16 %v2449, %v2448
  %v2458 = vpack.c.b16 %v2451, %v2450
  %v2459 = vpack.c.b16 %v2453, %v2452
  %vm2466 = vcmask 785408
  %v2468 = vsel %vm2466, %v2410, 0
  %2470 = vmatprep.subr.bf16.mxu0 0
  %2471 = vmatpush1.bf16.msra.mxu0 %v2454
  %2472 = vmatprep.subr.bf16.mxu0 0
  %2473 = vmatpush1.bf16.msra.mxu0 %v2455
  %2474 = vmatprep.subr.bf16.mxu0 0
  %2475 = vmatpush1.bf16.msra.mxu0 %v2456
  %2476 = vmatprep.subr.bf16.mxu0 0
  %2477 = vmatpush1.bf16.msra.mxu0 %v2457
  %2478 = vmatprep.subr.bf16.mxu0 0
  %2479 = vmatpush1.bf16.msra.mxu0 %v2458
  %2480 = vmatprep.subr.bf16.mxu0 0
  %2481 = vmatpush1.bf16.msra.mxu0 %v2459
  %2482 = vmatprep.subr.bf16.mxu0 0
  %2483 = vmatpush1.bf16.msra.mxu0 0
  %2484 = vmatprep.subr.bf16.mxu0 0
  %2485 = vmatpush1.bf16.msra.mxu0 0
  %2486 = vmatprep.subr.bf16.mxu0 0
  %2487 = vmatpush1.bf16.msra.mxu0 0
  %2488 = vmatprep.subr.bf16.mxu0 0
  %2489 = vmatpush1.bf16.msra.mxu0 0
  %2490 = vmatprep.subr.bf16.mxu0 0
  %2491 = vmatpush1.bf16.msra.mxu0 0
  %2492 = vmatprep.subr.bf16.mxu0 0
  %2493 = vmatpush1.bf16.msra.mxu0 0
  %2494 = vmatprep.subr.bf16.mxu0 0
  %2495 = vmatpush1.bf16.msra.mxu0 0
  %2496 = vmatprep.subr.bf16.mxu0 0
  %2497 = vmatpush1.bf16.msra.mxu0 0
  %2498 = vmatprep.subr.bf16.mxu0 0
  %2499 = vmatpush1.bf16.msra.mxu0 0
  %2500 = vmatprep.subr.bf16.mxu0 0
  %2501 = vmatpush1.bf16.msra.mxu0 0
  %2502 = vmatprep.mubr.bf16.mxu0 0
  %2503 = vmatmul.mubr.bf16.gmra.mrb[0].mxu0 %v2468
  %v2504 = vpop.f32.mrb[0].mxu0
  %v2505 = vadd.f32 %v2428, %v2504
  %v2506 = vpop.f32.mrb[0].mxu0
  %v2507 = vpop.f32.mrb[0].mxu0
  %v2508 = vadd.f32 %v2428, %v2507
  %v2509 = vpop.f32.mrb[0].mxu0
  %2510 = vdwg.mxu0
  %v2511 = vmin.f32 %v2505, 20.0
  %v2512 = vmin.f32 %v2508, 20.0
  %v2513 = vmul.f32 %v2511, 1.442695
  %v2514 = vpow.pop %v2513
  %v2515 = vmul.f32 %v2512, 1.442695
  %v2516 = vpow.pop %v2515
  %v2517 = vadd.f32 %v2514, 2.0
  %v2518 = vadd.f32 %v2516, 2.0
  %v2519 = vmul.f32 %v2514, %v2517
  %v2520 = vmul.f32 %v2516, %v2518
  %v2521 = vadd.f32 %v2519, 2.0
  %v2522 = vadd.f32 %v2520, 2.0
  %v2523 = vrcp.pop %v2521
  %v2524 = vrcp.pop %v2522
  %v2525 = vmul.f32 %v2519, %v2523
  %v2526 = vmul.f32 %v2520, %v2524
  %vm2527 = vcmp.gt.f32.partialorder %v2505, 20.0
  %vm2528 = vcmp.gt.f32.partialorder %v2508, 20.0
  %v2529 = vmul.f32 %v2505, %v2525
  %v2530 = vmul.f32 %v2508, %v2526
  %v2531 = vsel %vm2527, %v2505, %v2529
  %v2532 = vsel %vm2528, %v2508, %v2530
  %v2533 = vld [vmem:[%s7] sm:$0xff]
  %v2534 = vld [vmem:[%s7 + $0x8] sm:$0xff]
  %v2535 = vld [vmem:[%s9] sm:$0xff]
  %v2536 = vld [vmem:[%s9 + $0x8] sm:$0xff]
  %v2537 = vmin.f32 %v1844, 20.0
  %v2538 = vmin.f32 %v1847, 20.0
  %v2539 = vmul.f32 %v2537, 1.442695
  %v2540 = vpow.pop %v2539
  %v2541 = vmul.f32 %v2538, 1.442695
  %v2542 = vpow.pop %v2541
  %v2543 = vadd.f32 %v2540, 2.0
  %v2544 = vadd.f32 %v2542, 2.0
  %v2545 = vmul.f32 %v2540, %v2543
  %v2546 = vmul.f32 %v2542, %v2544
  %v2547 = vadd.f32 %v2545, 2.0
  %v2548 = vadd.f32 %v2546, 2.0
  %v2549 = vrcp.pop %v2547
  %v2550 = vrcp.pop %v2548
  %v2551 = vmul.f32 %v2545, %v2549
  %v2552 = vmul.f32 %v2546, %v2550
  %vm2553 = vcmp.gt.f32.partialorder %v1844, 20.0
  %vm2554 = vcmp.gt.f32.partialorder %v1847, 20.0
  %v2555 = vmul.f32 %v1844, %v2551
  %v2556 = vmul.f32 %v1847, %v2552
  %v2557 = vsel %vm2553, %v1844, %v2555
  %v2558 = vsel %vm2554, %v1847, %v2556
  %2560 = vset.pattern.permute.xlu0 0
  %2561 = vperm.xlu0 %2560, %v2533
  %v2562 = vpop.permute.xlu0 %2561
  %2565 = vset.pattern.permute.xlu0 0
  %2566 = vperm.xlu0 %2565, %v2534
  %v2567 = vpop.permute.xlu0 %2566
  %v2569 = vmul.f32 %v2562, %v2557
  %v2570 = vmul.f32 %v2567, %v2558
  %2572 = vset.pattern.permute.xlu0 0
  %2573 = vperm.xlu0 %2572, %v2535
  %v2574 = vpop.permute.xlu0 %2573
  %2577 = vset.pattern.permute.xlu0 0
  %2578 = vperm.xlu0 %2577, %v2536
  %v2579 = vpop.permute.xlu0 %2578
  %v2581 = vadd.f32 %v2569, %v2574
  %v2582 = vadd.f32 %v2570, %v2579
  %v2583 = vpack.c.bf16 %v2582, %v2581
  %v2584 = vmin.f32 %v2235, 20.0
  %v2585 = vmin.f32 %v2237, 20.0
  %v2586 = vmul.f32 %v2584, 1.442695
  %v2587 = vpow.pop %v2586
  %v2588 = vmul.f32 %v2585, 1.442695
  %v2589 = vpow.pop %v2588
  %v2590 = vadd.f32 %v2587, 2.0
  %v2591 = vadd.f32 %v2589, 2.0
  %v2592 = vmul.f32 %v2587, %v2590
  %v2593 = vmul.f32 %v2589, %v2591
  %v2594 = vadd.f32 %v2592, 2.0
  %v2595 = vadd.f32 %v2593, 2.0
  %v2596 = vrcp.pop %v2594
  %v2597 = vrcp.pop %v2595
  %v2598 = vmul.f32 %v2592, %v2596
  %v2599 = vmul.f32 %v2593, %v2597
  %vm2600 = vcmp.gt.f32.partialorder %v2235, 20.0
  %vm2601 = vcmp.gt.f32.partialorder %v2237, 20.0
  %v2602 = vmul.f32 %v2235, %v2598
  %v2603 = vmul.f32 %v2237, %v2599
  %v2604 = vsel %vm2600, %v2235, %v2602
  %v2605 = vsel %vm2601, %v2237, %v2603
  %v2606 = vmul.f32 %v2562, %v2604
  %v2607 = vmul.f32 %v2567, %v2605
  %v2608 = vadd.f32 %v2606, %v2574
  %v2609 = vadd.f32 %v2607, %v2579
  %v2610 = vpack.c.bf16 %v2609, %v2608
  %v2611 = vmin.f32 %v2408, 20.0
  %v2612 = vmin.f32 %v2409, 20.0
  %v2613 = vmul.f32 %v2611, 1.442695
  %v2614 = vpow.pop %v2613
  %v2615 = vmul.f32 %v2612, 1.442695
  %v2616 = vpow.pop %v2615
  %v2617 = vadd.f32 %v2614, 2.0
  %v2618 = vadd.f32 %v2616, 2.0
  %v2619 = vmul.f32 %v2614, %v2617
  %v2620 = vmul.f32 %v2616, %v2618
  %v2621 = vadd.f32 %v2619, 2.0
  %v2622 = vadd.f32 %v2620, 2.0
  %v2623 = vrcp.pop %v2621
  %v2624 = vrcp.pop %v2622
  %v2625 = vmul.f32 %v2619, %v2623
  %v2626 = vmul.f32 %v2620, %v2624
  %vm2627 = vcmp.gt.f32.partialorder %v2408, 20.0
  %vm2628 = vcmp.gt.f32.partialorder %v2409, 20.0
  %v2629 = vmul.f32 %v2408, %v2625
  %v2630 = vmul.f32 %v2409, %v2626
  %v2631 = vsel %vm2627, %v2408, %v2629
  %v2632 = vsel %vm2628, %v2409, %v2630
  %v2633 = vmul.f32 %v2562, %v2631
  %v2634 = vmul.f32 %v2567, %v2632
  %v2635 = vadd.f32 %v2633, %v2574
  %v2636 = vadd.f32 %v2634, %v2579
  %v2637 = vpack.c.bf16 %v2636, %v2635
  %v2638 = vmin.f32 %v2531, 20.0
  %v2639 = vmin.f32 %v2532, 20.0
  %v2640 = vmul.f32 %v2638, 1.442695
  %v2641 = vpow.pop %v2640
  %v2642 = vmul.f32 %v2639, 1.442695
  %v2643 = vpow.pop %v2642
  %v2644 = vadd.f32 %v2641, 2.0
  %v2645 = vadd.f32 %v2643, 2.0
  %v2646 = vmul.f32 %v2641, %v2644
  %v2647 = vmul.f32 %v2643, %v2645
  %v2648 = vadd.f32 %v2646, 2.0
  %v2649 = vadd.f32 %v2647, 2.0
  %v2650 = vrcp.pop %v2648
  %v2651 = vrcp.pop %v2649
  %v2652 = vmul.f32 %v2646, %v2650
  %v2653 = vmul.f32 %v2647, %v2651
  %vm2654 = vcmp.gt.f32.partialorder %v2531, 20.0
  %vm2655 = vcmp.gt.f32.partialorder %v2532, 20.0
  %v2656 = vmul.f32 %v2531, %v2652
  %v2657 = vmul.f32 %v2532, %v2653
  %v2658 = vsel %vm2654, %v2531, %v2656
  %v2659 = vsel %vm2655, %v2532, %v2657
  %v2660 = vmul.f32 %v2562, %v2658
  %v2661 = vmul.f32 %v2567, %v2659
  %v2662 = vadd.f32 %v2660, %v2574
  %v2663 = vadd.f32 %v2661, %v2579
  %v2664 = vpack.c.bf16 %v2663, %v2662
  %v2665 = vld [vmem:[%s53] sm:$0xff]
  %v2666 = vld [vmem:[%s53 + $0x8] sm:$0xff]
  %v2667 = vld [vmem:[%s53 + $0x10] sm:$0xff]
  %v2668 = vld [vmem:[%s53 + $0x18] sm:$0xff]
  %v2669 = vld [vmem:[%s53 + $0x20] sm:$0xff]
  %v2670 = vld [vmem:[%s53 + $0x28] sm:$0xff]
  %v2671 = vld [vmem:[%s53 + $0x30] sm:$0xff]
  %v2672 = vld [vmem:[%s53 + $0x38] sm:$0xff]
  %v2673 = vld [vmem:[%s53 + $0x40] sm:$0xff]
  %v2674 = vld [vmem:[%s53 + $0x48] sm:$0xff]
  %v2675 = vld [vmem:[%s53 + $0x50] sm:$0xff]
  %v2676 = vld [vmem:[%s53 + $0x58] sm:$0xff]
  %v2677 = vld [vmem:[%s53 + $0x60] sm:$0xff]
  %v2678 = vld [vmem:[%s53 + $0x68] sm:$0xff]
  %v2679 = vld [vmem:[%s53 + $0x70] sm:$0xff]
  %v2680 = vld [vmem:[%s53 + $0x78] sm:$0xff]
  %v2681 = vld [vmem:[%s55] sm:$0xff]
  %v2682 = vld [vmem:[%s55 + $0x8] sm:$0xff]
  %v2683 = vld [vmem:[%s55 + $0x10] sm:$0xff]
  %v2684 = vld [vmem:[%s55 + $0x18] sm:$0xff]
  %v2685 = vld [vmem:[%s55 + $0x20] sm:$0xff]
  %v2686 = vld [vmem:[%s55 + $0x28] sm:$0xff]
  %v2687 = vld [vmem:[%s55 + $0x30] sm:$0xff]
  %v2688 = vld [vmem:[%s55 + $0x38] sm:$0xff]
  %v2689 = vld [vmem:[%s55 + $0x40] sm:$0xff]
  %v2690 = vld [vmem:[%s55 + $0x48] sm:$0xff]
  %v2691 = vld [vmem:[%s55 + $0x50] sm:$0xff]
  %v2692 = vld [vmem:[%s55 + $0x58] sm:$0xff]
  %v2705 = vunpack.c.l.b16 %v2681
  %v2706 = vunpack.c.h.b16 %v2681
  %v2707 = vunpack.c.l.b16 %v2682
  %v2708 = vunpack.c.h.b16 %v2682
  %v2709 = vunpack.c.l.b16 %v2683
  %v2710 = vunpack.c.h.b16 %v2683
  %v2711 = vunpack.c.l.b16 %v2684
  %v2712 = vunpack.c.h.b16 %v2684
  %v2713 = vunpack.c.l.b16 %v2685
  %v2714 = vunpack.c.h.b16 %v2685
  %v2715 = vunpack.c.l.b16 %v2686
  %v2716 = vunpack.c.h.b16 %v2686
  %v2717 = vunpack.c.l.b16 %v2687
  %v2718 = vunpack.c.h.b16 %v2687
  %v2719 = vunpack.c.l.b16 %v2688
  %v2720 = vunpack.c.h.b16 %v2688
  %v2721 = vunpack.c.l.b16 %v2689
  %v2722 = vunpack.c.h.b16 %v2689
  %v2723 = vunpack.c.l.b16 %v2690
  %v2724 = vunpack.c.h.b16 %v2690
  %v2725 = vunpack.c.l.b16 %v2691
  %v2726 = vunpack.c.h.b16 %v2691
  %v2727 = vunpack.c.l.b16 %v2692
  %v2728 = vunpack.c.h.b16 %v2692
  %v2729 = vpack.c.b16 %v2707, %v2705
  %v2730 = vpack.c.b16 %v2708, %v2706
  %v2731 = vpack.c.b16 %v2711, %v2709
  %v2732 = vpack.c.b16 %v2712, %v2710
  %v2733 = vpack.c.b16 %v2715, %v2713
  %v2734 = vpack.c.b16 %v2716, %v2714
  %v2735 = vpack.c.b16 %v2719, %v2717
  %v2736 = vpack.c.b16 %v2720, %v2718
  %v2737 = vpack.c.b16 %v2723, %v2721
  %v2738 = vpack.c.b16 %v2724, %v2722
  %v2739 = vpack.c.b16 %v2727, %v2725
  %v2740 = vpack.c.b16 %v2728, %v2726
  %v2754 = vsel %vm2466, %v2610, 0
  %2756 = vmatprep.subr.bf16.mxu0 %v2730
  %2757 = vmatpush1.bf16.msra.mxu0 %v2729
  %2758 = vmatprep.subr.bf16.mxu0 %v2732
  %2759 = vmatpush1.bf16.msra.mxu0 %v2731
  %2760 = vmatprep.subr.bf16.mxu0 %v2734
  %2761 = vmatpush1.bf16.msra.mxu0 %v2733
  %2762 = vmatprep.subr.bf16.mxu0 %v2736
  %2763 = vmatpush1.bf16.msra.mxu0 %v2735
  %2764 = vmatprep.subr.bf16.mxu0 %v2738
  %2765 = vmatpush1.bf16.msra.mxu0 %v2737
  %2766 = vmatprep.subr.bf16.mxu0 %v2740
  %2767 = vmatpush1.bf16.msra.mxu0 %v2739
  %2768 = vmatprep.subr.bf16.mxu0 0
  %2769 = vmatpush1.bf16.msra.mxu0 0
  %2770 = vmatprep.subr.bf16.mxu0 0
  %2771 = vmatpush1.bf16.msra.mxu0 0
  %2772 = vmatprep.subr.bf16.mxu0 0
  %2773 = vmatpush1.bf16.msra.mxu0 0
  %2774 = vmatprep.subr.bf16.mxu0 0
  %2775 = vmatpush1.bf16.msra.mxu0 0
  %2776 = vmatprep.subr.bf16.mxu0 0
  %2777 = vmatpush1.bf16.msra.mxu0 0
  %2778 = vmatprep.subr.bf16.mxu0 0
  %2779 = vmatpush1.bf16.msra.mxu0 0
  %2780 = vmatprep.subr.bf16.mxu0 0
  %2781 = vmatpush1.bf16.msra.mxu0 0
  %2782 = vmatprep.subr.bf16.mxu0 0
  %2783 = vmatpush1.bf16.msra.mxu0 0
  %2784 = vmatprep.subr.bf16.mxu0 0
  %2785 = vmatpush1.bf16.msra.mxu0 0
  %2786 = vmatprep.subr.bf16.mxu0 0
  %2787 = vmatpush1.bf16.msra.mxu0 0
  %2788 = vmatprep.mubr.bf16.mxu0 0
  %2789 = vmatmul.mubr.bf16.gmra.mrb[0].mxu0 %v2754
  %v2790 = vpop.f32.mrb[0].mxu0
  %v2791 = vadd.f32 0.0, %v2790
  %v2792 = vpop.f32.mrb[0].mxu0
  %v2793 = vadd.f32 0.0, %v2792
  %v2794 = vpop.f32.mrb[0].mxu0
  %v2795 = vadd.f32 0.0, %v2794
  %v2796 = vpop.f32.mrb[0].mxu0
  %v2797 = vadd.f32 0.0, %v2796
  %2798 = vdwg.mxu0
  %v2815 = vunpack.c.l.b16 %v2665
  %v2816 = vunpack.c.h.b16 %v2665
  %v2817 = vunpack.c.l.b16 %v2666
  %v2818 = vunpack.c.h.b16 %v2666
  %v2819 = vunpack.c.l.b16 %v2667
  %v2820 = vunpack.c.h.b16 %v2667
  %v2821 = vunpack.c.l.b16 %v2668
  %v2822 = vunpack.c.h.b16 %v2668
  %v2823 = vunpack.c.l.b16 %v2669
  %v2824 = vunpack.c.h.b16 %v2669
  %v2825 = vunpack.c.l.b16 %v2670
  %v2826 = vunpack.c.h.b16 %v2670
  %v2827 = vunpack.c.l.b16 %v2671
  %v2828 = vunpack.c.h.b16 %v2671
  %v2829 = vunpack.c.l.b16 %v2672
  %v2830 = vunpack.c.h.b16 %v2672
  %v2831 = vunpack.c.l.b16 %v2673
  %v2832 = vunpack.c.h.b16 %v2673
  %v2833 = vunpack.c.l.b16 %v2674
  %v2834 = vunpack.c.h.b16 %v2674
  %v2835 = vunpack.c.l.b16 %v2675
  %v2836 = vunpack.c.h.b16 %v2675
  %v2837 = vunpack.c.l.b16 %v2676
  %v2838 = vunpack.c.h.b16 %v2676
  %v2839 = vunpack.c.l.b16 %v2677
  %v2840 = vunpack.c.h.b16 %v2677
  %v2841 = vunpack.c.l.b16 %v2678
  %v2842 = vunpack.c.h.b16 %v2678
  %v2843 = vunpack.c.l.b16 %v2679
  %v2844 = vunpack.c.h.b16 %v2679
  %v2845 = vunpack.c.l.b16 %v2680
  %v2846 = vunpack.c.h.b16 %v2680
  %v2847 = vpack.c.b16 %v2817, %v2815
  %v2848 = vpack.c.b16 %v2818, %v2816
  %v2849 = vpack.c.b16 %v2821, %v2819
  %v2850 = vpack.c.b16 %v2822, %v2820
  %v2851 = vpack.c.b16 %v2825, %v2823
  %v2852 = vpack.c.b16 %v2826, %v2824
  %v2853 = vpack.c.b16 %v2829, %v2827
  %v2854 = vpack.c.b16 %v2830, %v2828
  %v2855 = vpack.c.b16 %v2833, %v2831
  %v2856 = vpack.c.b16 %v2834, %v2832
  %v2857 = vpack.c.b16 %v2837, %v2835
  %v2858 = vpack.c.b16 %v2838, %v2836
  %v2859 = vpack.c.b16 %v2841, %v2839
  %v2860 = vpack.c.b16 %v2842, %v2840
  %v2861 = vpack.c.b16 %v2845, %v2843
  %v2862 = vpack.c.b16 %v2846, %v2844
  %2879 = vmatprep.subr.bf16.mxu0 %v2848
  %2880 = vmatpush1.bf16.msra.mxu0 %v2847
  %2881 = vmatprep.subr.bf16.mxu0 %v2850
  %2882 = vmatpush1.bf16.msra.mxu0 %v2849
  %2883 = vmatprep.subr.bf16.mxu0 %v2852
  %2884 = vmatpush1.bf16.msra.mxu0 %v2851
  %2885 = vmatprep.subr.bf16.mxu0 %v2854
  %2886 = vmatpush1.bf16.msra.mxu0 %v2853
  %2887 = vmatprep.subr.bf16.mxu0 %v2856
  %2888 = vmatpush1.bf16.msra.mxu0 %v2855
  %2889 = vmatprep.subr.bf16.mxu0 %v2858
  %2890 = vmatpush1.bf16.msra.mxu0 %v2857
  %2891 = vmatprep.subr.bf16.mxu0 %v2860
  %2892 = vmatpush1.bf16.msra.mxu0 %v2859
  %2893 = vmatprep.subr.bf16.mxu0 %v2862
  %2894 = vmatpush1.bf16.msra.mxu0 %v2861
  %2895 = vmatprep.subr.bf16.mxu0 0
  %2896 = vmatpush1.bf16.msra.mxu0 0
  %2897 = vmatprep.subr.bf16.mxu0 0
  %2898 = vmatpush1.bf16.msra.mxu0 0
  %2899 = vmatprep.subr.bf16.mxu0 0
  %2900 = vmatpush1.bf16.msra.mxu0 0
  %2901 = vmatprep.subr.bf16.mxu0 0
  %2902 = vmatpush1.bf16.msra.mxu0 0
  %2903 = vmatprep.subr.bf16.mxu0 0
  %2904 = vmatpush1.bf16.msra.mxu0 0
  %2905 = vmatprep.subr.bf16.mxu0 0
  %2906 = vmatpush1.bf16.msra.mxu0 0
  %2907 = vmatprep.subr.bf16.mxu0 0
  %2908 = vmatpush1.bf16.msra.mxu0 0
  %2909 = vmatprep.subr.bf16.mxu0 0
  %2910 = vmatpush1.bf16.msra.mxu0 0
  %2911 = vmatprep.mubr.bf16.mxu0 0
  %2912 = vmatmul.mubr.bf16.gmra.mrb[0].mxu0 %v2583
  %v2913 = vpop.f32.mrb[0].mxu0
  %v2914 = vadd.f32 %v2791, %v2913
  %v2915 = vpop.f32.mrb[0].mxu0
  %v2916 = vadd.f32 %v2793, %v2915
  %v2917 = vpop.f32.mrb[0].mxu0
  %v2918 = vadd.f32 %v2795, %v2917
  %v2919 = vpop.f32.mrb[0].mxu0
  %v2920 = vadd.f32 %v2797, %v2919
  %2921 = vdwg.mxu0
  %v2922 = vld [vmem:[%s57] sm:$0xff]
  %v2923 = vld [vmem:[%s57 + $0x8] sm:$0xff]
  %v2924 = vld [vmem:[%s57 + $0x10] sm:$0xff]
  %v2925 = vld [vmem:[%s57 + $0x18] sm:$0xff]
  %v2926 = vld [vmem:[%s57 + $0x20] sm:$0xff]
  %v2927 = vld [vmem:[%s57 + $0x28] sm:$0xff]
  %v2928 = vld [vmem:[%s57 + $0x30] sm:$0xff]
  %v2929 = vld [vmem:[%s57 + $0x38] sm:$0xff]
  %v2938 = vunpack.c.l.b16 %v2922
  %v2939 = vunpack.c.h.b16 %v2922
  %v2940 = vunpack.c.l.b16 %v2923
  %v2941 = vunpack.c.h.b16 %v2923
  %v2942 = vunpack.c.l.b16 %v2924
  %v2943 = vunpack.c.h.b16 %v2924
  %v2944 = vunpack.c.l.b16 %v2925
  %v2945 = vunpack.c.h.b16 %v2925
  %v2946 = vunpack.c.l.b16 %v2926
  %v2947 = vunpack.c.h.b16 %v2926
  %v2948 = vunpack.c.l.b16 %v2927
  %v2949 = vunpack.c.h.b16 %v2927
  %v2950 = vunpack.c.l.b16 %v2928
  %v2951 = vunpack.c.h.b16 %v2928
  %v2952 = vunpack.c.l.b16 %v2929
  %v2953 = vunpack.c.h.b16 %v2929
  %v2954 = vpack.c.b16 %v2940, %v2938
  %v2955 = vpack.c.b16 %v2941, %v2939
  %v2956 = vpack.c.b16 %v2944, %v2942
  %v2957 = vpack.c.b16 %v2945, %v2943
  %v2958 = vpack.c.b16 %v2948, %v2946
  %v2959 = vpack.c.b16 %v2949, %v2947
  %v2960 = vpack.c.b16 %v2952, %v2950
  %v2961 = vpack.c.b16 %v2953, %v2951
  %v2971 = vsel %vm2105, %v2637, 0
  %2973 = vmatprep.subr.bf16.mxu0 %v2955
  %2974 = vmatpush1.bf16.msra.mxu0 %v2954
  %2975 = vmatprep.subr.bf16.mxu0 %v2957
  %2976 = vmatpush1.bf16.msra.mxu0 %v2956
  %2977 = vmatprep.subr.bf16.mxu0 %v2959
  %2978 = vmatpush1.bf16.msra.mxu0 %v2958
  %2979 = vmatprep.subr.bf16.mxu0 %v2961
  %2980 = vmatpush1.bf16.msra.mxu0 %v2960
  %2981 = vmatprep.subr.bf16.mxu0 0
  %2982 = vmatpush1.bf16.msra.mxu0 0
  %2983 = vmatprep.subr.bf16.mxu0 0
  %2984 = vmatpush1.bf16.msra.mxu0 0
  %2985 = vmatprep.subr.bf16.mxu0 0
  %2986 = vmatpush1.bf16.msra.mxu0 0
  %2987 = vmatprep.subr.bf16.mxu0 0
  %2988 = vmatpush1.bf16.msra.mxu0 0
  %2989 = vmatprep.subr.bf16.mxu0 0
  %2990 = vmatpush1.bf16.msra.mxu0 0
  %2991 = vmatprep.subr.bf16.mxu0 0
  %2992 = vmatpush1.bf16.msra.mxu0 0
  %2993 = vmatprep.subr.bf16.mxu0 0
  %2994 = vmatpush1.bf16.msra.mxu0 0
  %2995 = vmatprep.subr.bf16.mxu0 0
  %2996 = vmatpush1.bf16.msra.mxu0 0
  %2997 = vmatprep.subr.bf16.mxu0 0
  %2998 = vmatpush1.bf16.msra.mxu0 0
  %2999 = vmatprep.subr.bf16.mxu0 0
  %3000 = vmatpush1.bf16.msra.mxu0 0
  %3001 = vmatprep.subr.bf16.mxu0 0
  %3002 = vmatpush1.bf16.msra.mxu0 0
  %3003 = vmatprep.subr.bf16.mxu0 0
  %3004 = vmatpush1.bf16.msra.mxu0 0
  %3005 = vmatprep.mubr.bf16.mxu0 0
  %3006 = vmatmul.mubr.bf16.gmra.mrb[0].mxu0 %v2971
  %v3007 = vpop.f32.mrb[0].mxu0
  %v3008 = vadd.f32 0.0, %v3007
  %v3009 = vpop.f32.mrb[0].mxu0
  %v3010 = vadd.f32 0.0, %v3009
  %v3011 = vpop.f32.mrb[0].mxu0
  %v3012 = vadd.f32 0.0, %v3011
  %v3013 = vpop.f32.mrb[0].mxu0
  %v3014 = vadd.f32 0.0, %v3013
  %3015 = vdwg.mxu0
  %v3016 = vadd.f32 %v2914, %v3008
  %v3017 = vadd.f32 %v2916, %v3010
  %v3018 = vadd.f32 %v2918, %v3012
  %v3019 = vadd.f32 %v2920, %v3014
  %v3020 = vld [vmem:[%s59] sm:$0xff]
  %v3021 = vld [vmem:[%s59 + $0x8] sm:$0xff]
  %v3022 = vld [vmem:[%s59 + $0x10] sm:$0xff]
  %v3023 = vld [vmem:[%s59 + $0x18] sm:$0xff]
  %v3028 = vunpack.c.l.b16 %v3020
  %v3029 = vunpack.c.h.b16 %v3020
  %v3030 = vunpack.c.l.b16 %v3021
  %v3031 = vunpack.c.h.b16 %v3021
  %v3032 = vunpack.c.l.b16 %v3022
  %v3033 = vunpack.c.h.b16 %v3022
  %v3034 = vunpack.c.l.b16 %v3023
  %v3035 = vunpack.c.h.b16 %v3023
  %v3036 = vpack.c.b16 %v3030, %v3028
  %v3037 = vpack.c.b16 %v3031, %v3029
  %v3038 = vpack.c.b16 %v3034, %v3032
  %v3039 = vpack.c.b16 %v3035, %v3033
  %v3045 = vsel %vm218, %v2664, 0
  %3047 = vmatprep.subr.bf16.mxu0 %v3037
  %3048 = vmatpush1.bf16.msra.mxu0 %v3036
  %3049 = vmatprep.subr.bf16.mxu0 %v3039
  %3050 = vmatpush1.bf16.msra.mxu0 %v3038
  %3051 = vmatprep.subr.bf16.mxu0 0
  %3052 = vmatpush1.bf16.msra.mxu0 0
  %3053 = vmatprep.subr.bf16.mxu0 0
  %3054 = vmatpush1.bf16.msra.mxu0 0
  %3055 = vmatprep.subr.bf16.mxu0 0
  %3056 = vmatpush1.bf16.msra.mxu0 0
  %3057 = vmatprep.subr.bf16.mxu0 0
  %3058 = vmatpush1.bf16.msra.mxu0 0
  %3059 = vmatprep.subr.bf16.mxu0 0
  %3060 = vmatpush1.bf16.msra.mxu0 0
  %3061 = vmatprep.subr.bf16.mxu0 0
  %3062 = vmatpush1.bf16.msra.mxu0 0
  %3063 = vmatprep.subr.bf16.mxu0 0
  %3064 = vmatpush1.bf16.msra.mxu0 0
  %3065 = vmatprep.subr.bf16.mxu0 0
  %3066 = vmatpush1.bf16.msra.mxu0 0
  %3067 = vmatprep.subr.bf16.mxu0 0
  %3068 = vmatpush1.bf16.msra.mxu0 0
  %3069 = vmatprep.subr.bf16.mxu0 0
  %3070 = vmatpush1.bf16.msra.mxu0 0
  %3071 = vmatprep.subr.bf16.mxu0 0
  %3072 = vmatpush1.bf16.msra.mxu0 0
  %3073 = vmatprep.subr.bf16.mxu0 0
  %3074 = vmatpush1.bf16.msra.mxu0 0
  %3075 = vmatprep.subr.bf16.mxu0 0
  %3076 = vmatpush1.bf16.msra.mxu0 0
  %3077 = vmatprep.subr.bf16.mxu0 0
  %3078 = vmatpush1.bf16.msra.mxu0 0
  %3079 = vmatprep.mubr.bf16.mxu0 0
  %3080 = vmatmul.mubr.bf16.gmra.mrb[0].mxu0 %v3045
  %v3081 = vpop.f32.mrb[0].mxu0
  %v3082 = vadd.f32 0.0, %v3081
  %v3083 = vpop.f32.mrb[0].mxu0
  %v3084 = vadd.f32 0.0, %v3083
  %v3085 = vpop.f32.mrb[0].mxu0
  %v3086 = vadd.f32 0.0, %v3085
  %v3087 = vpop.f32.mrb[0].mxu0
  %v3088 = vadd.f32 0.0, %v3087
  %3089 = vdwg.mxu0
  %v3090 = vadd.f32 %v3016, %v3082
  %v3091 = vadd.f32 %v3017, %v3084
  %v3092 = vadd.f32 %v3018, %v3086
  %v3093 = vadd.f32 %v3019, %v3088
  %v3094 = vld [vmem:[%s61] sm:$0x3]
  %v3096 = vlaneseq
  %v3097 = vshrl.u32 %v3096, 7
  %v3098 = vsub.s32 0, %v3097
  %v3099 = vrot.slane %v3094, %v3098
  %v3100 = vlaneseq
  %v3101 = vshrl.u32 %v3100, 7
  %v3102 = vsub.s32 1, %v3101
  %v3103 = vrot.slane %v3094, %v3102
  %v3106 = vadd.f32 %v3090, %v3099
  %v3107 = vadd.f32 %v3091, %v3103
  %v3108 = vadd.f32 %v3092, %v3099
  %v3109 = vadd.f32 %v3093, %v3103
  %v3110 = vmin.f32 %v3106, 20.0
  %v3111 = vmin.f32 %v3107, 20.0
  %v3112 = vmin.f32 %v3108, 20.0
  %v3113 = vmin.f32 %v3109, 20.0
  %v3114 = vmul.f32 %v3110, 1.442695
  %v3115 = vpow.pop %v3114
  %v3116 = vmul.f32 %v3111, 1.442695
  %v3117 = vpow.pop %v3116
  %v3118 = vmul.f32 %v3112, 1.442695
  %v3119 = vpow.pop %v3118
  %v3120 = vmul.f32 %v3113, 1.442695
  %v3121 = vpow.pop %v3120
  %v3122 = vadd.f32 %v3115, 2.0
  %v3123 = vadd.f32 %v3117, 2.0
  %v3124 = vadd.f32 %v3119, 2.0
  %v3125 = vadd.f32 %v3121, 2.0
  %v3126 = vmul.f32 %v3115, %v3122
  %v3127 = vmul.f32 %v3117, %v3123
  %v3128 = vmul.f32 %v3119, %v3124
  %v3129 = vmul.f32 %v3121, %v3125
  %v3130 = vadd.f32 %v3126, 2.0
  %v3131 = vadd.f32 %v3127, 2.0
  %v3132 = vadd.f32 %v3128, 2.0
  %v3133 = vadd.f32 %v3129, 2.0
  %v3134 = vrcp.pop %v3130
  %v3135 = vrcp.pop %v3131
  %v3136 = vrcp.pop %v3132
  %v3137 = vrcp.pop %v3133
  %v3138 = vmul.f32 %v3126, %v3134
  %v3139 = vmul.f32 %v3127, %v3135
  %v3140 = vmul.f32 %v3128, %v3136
  %v3141 = vmul.f32 %v3129, %v3137
  %vm3142 = vcmp.gt.f32.partialorder %v3106, 20.0
  %vm3143 = vcmp.gt.f32.partialorder %v3107, 20.0
  %vm3144 = vcmp.gt.f32.partialorder %v3108, 20.0
  %vm3145 = vcmp.gt.f32.partialorder %v3109, 20.0
  %v3146 = vmul.f32 %v3106, %v3138
  %v3147 = vmul.f32 %v3107, %v3139
  %v3148 = vmul.f32 %v3108, %v3140
  %v3149 = vmul.f32 %v3109, %v3141
  %v3150 = vsel %vm3142, %v3106, %v3146
  %v3151 = vsel %vm3143, %v3107, %v3147
  %v3152 = vsel %vm3144, %v3108, %v3148
  %v3153 = vsel %vm3145, %v3109, %v3149
  %v3154 = vpack.c.bf16 %v3152, %v3150
  %v3155 = vpack.c.bf16 %v3153, %v3151
  %v3156 = vld [vmem:[%s63] sm:$0xff]
  %v3157 = vld [vmem:[%s63 + $0x8] sm:$0xff]
  %v3158 = vld [vmem:[%s63 + $0x10] sm:$0xff]
  %v3159 = vld [vmem:[%s63 + $0x18] sm:$0xff]
  %v3160 = vld [vmem:[%s63 + $0x20] sm:$0xff]
  %v3161 = vld [vmem:[%s63 + $0x28] sm:$0xff]
  %v3162 = vld [vmem:[%s63 + $0x30] sm:$0xff]
  %v3163 = vld [vmem:[%s63 + $0x38] sm:$0xff]
  %v3164 = vld [vmem:[%s63 + $0x40] sm:$0xff]
  %v3165 = vld [vmem:[%s63 + $0x48] sm:$0xff]
  %v3166 = vld [vmem:[%s63 + $0x50] sm:$0xff]
  %v3167 = vld [vmem:[%s63 + $0x58] sm:$0xff]
  %v3168 = vld [vmem:[%s63 + $0x60] sm:$0xff]
  %v3169 = vld [vmem:[%s63 + $0x68] sm:$0xff]
  %v3170 = vld [vmem:[%s63 + $0x70] sm:$0xff]
  %v3171 = vld [vmem:[%s63 + $0x78] sm:$0xff]
  %v3172 = vld [vmem:[%s63 + $0x80] sm:$0xff]
  %v3173 = vld [vmem:[%s63 + $0x88] sm:$0xff]
  %v3174 = vld [vmem:[%s63 + $0x90] sm:$0xff]
  %v3175 = vld [vmem:[%s63 + $0x98] sm:$0xff]
  %v3176 = vld [vmem:[%s63 + $0xa0] sm:$0xff]
  %v3177 = vld [vmem:[%s63 + $0xa8] sm:$0xff]
  %v3178 = vld [vmem:[%s63 + $0xb0] sm:$0xff]
  %v3179 = vld [vmem:[%s63 + $0xb8] sm:$0xff]
  %v3180 = vld [vmem:[%s63 + $0xc0] sm:$0xff]
  %v3181 = vld [vmem:[%s63 + $0xc8] sm:$0xff]
  %v3182 = vld [vmem:[%s63 + $0xd0] sm:$0xff]
  %v3183 = vld [vmem:[%s63 + $0xd8] sm:$0xff]
  %v3184 = vld [vmem:[%s63 + $0xe0] sm:$0xff]
  %v3185 = vld [vmem:[%s63 + $0xe8] sm:$0xff]
  %v3186 = vld [vmem:[%s63 + $0xf0] sm:$0x33]
  %v3187 = vld [vmem:[%s65] sm:$0x3]
  %v3189 = vlaneseq
  %v3190 = vshrl.u32 %v3189, 7
  %v3191 = vsub.s32 0, %v3190
  %v3192 = vrot.slane %v3187, %v3191
  %v3193 = vlaneseq
  %v3194 = vshrl.u32 %v3193, 7
  %v3195 = vsub.s32 1, %v3194
  %v3196 = vrot.slane %v3187, %v3195
  %v3230 = vunpack.c.l.b16 %v3156
  %v3231 = vunpack.c.h.b16 %v3156
  %v3232 = vunpack.c.l.b16 %v3157
  %v3233 = vunpack.c.h.b16 %v3157
  %v3234 = vunpack.c.l.b16 %v3158
  %v3235 = vunpack.c.h.b16 %v3158
  %v3236 = vunpack.c.l.b16 %v3159
  %v3237 = vunpack.c.h.b16 %v3159
  %v3238 = vunpack.c.l.b16 %v3160
  %v3239 = vunpack.c.h.b16 %v3160
  %v3240 = vunpack.c.l.b16 %v3161
  %v3241 = vunpack.c.h.b16 %v3161
  %v3242 = vunpack.c.l.b16 %v3162
  %v3243 = vunpack.c.h.b16 %v3162
  %v3244 = vunpack.c.l.b16 %v3163
  %v3245 = vunpack.c.h.b16 %v3163
  %v3246 = vunpack.c.l.b16 %v3164
  %v3247 = vunpack.c.h.b16 %v3164
  %v3248 = vunpack.c.l.b16 %v3165
  %v3249 = vunpack.c.h.b16 %v3165
  %v3250 = vunpack.c.l.b16 %v3166
  %v3251 = vunpack.c.h.b16 %v3166
  %v3252 = vunpack.c.l.b16 %v3167
  %v3253 = vunpack.c.h.b16 %v3167
  %v3254 = vunpack.c.l.b16 %v3168
  %v3255 = vunpack.c.h.b16 %v3168
  %v3256 = vunpack.c.l.b16 %v3169
  %v3257 = vunpack.c.h.b16 %v3169
  %v3258 = vunpack.c.l.b16 %v3170
  %v3259 = vunpack.c.h.b16 %v3170
  %v3260 = vunpack.c.l.b16 %v3171
  %v3261 = vunpack.c.h.b16 %v3171
  %v3262 = vunpack.c.l.b16 %v3172
  %v3263 = vunpack.c.h.b16 %v3172
  %v3264 = vunpack.c.l.b16 %v3173
  %v3265 = vunpack.c.h.b16 %v3173
  %v3266 = vunpack.c.l.b16 %v3174
  %v3267 = vunpack.c.h.b16 %v3174
  %v3268 = vunpack.c.l.b16 %v3175
  %v3269 = vunpack.c.h.b16 %v3175
  %v3270 = vunpack.c.l.b16 %v3176
  %v3271 = vunpack.c.h.b16 %v3176
  %v3272 = vunpack.c.l.b16 %v3177
  %v3273 = vunpack.c.h.b16 %v3177
  %v3274 = vunpack.c.l.b16 %v3178
  %v3275 = vunpack.c.h.b16 %v3178
  %v3276 = vunpack.c.l.b16 %v3179
  %v3277 = vunpack.c.h.b16 %v3179
  %v3278 = vunpack.c.l.b16 %v3180
  %v3279 = vunpack.c.h.b16 %v3180
  %v3280 = vunpack.c.l.b16 %v3181
  %v3281 = vunpack.c.h.b16 %v3181
  %v3282 = vunpack.c.l.b16 %v3182
  %v3283 = vunpack.c.h.b16 %v3182
  %v3284 = vunpack.c.l.b16 %v3183
  %v3285 = vunpack.c.h.b16 %v3183
  %v3286 = vunpack.c.l.b16 %v3184
  %v3287 = vunpack.c.h.b16 %v3184
  %v3288 = vunpack.c.l.b16 %v3185
  %v3289 = vunpack.c.h.b16 %v3185
  %v3290 = vunpack.c.l.b16 %v3186
  %v3291 = vunpack.c.h.b16 %v3186
  %v3292 = vpack.c.b16 %v3232, %v3230
  %v3293 = vpack.c.b16 %v3233, %v3231
  %v3294 = vpack.c.b16 %v3236, %v3234
  %v3295 = vpack.c.b16 %v3237, %v3235
  %v3296 = vpack.c.b16 %v3240, %v3238
  %v3297 = vpack.c.b16 %v3241, %v3239
  %v3298 = vpack.c.b16 %v3244, %v3242
  %v3299 = vpack.c.b16 %v3245, %v3243
  %v3300 = vpack.c.b16 %v3248, %v3246
  %v3301 = vpack.c.b16 %v3249, %v3247
  %v3302 = vpack.c.b16 %v3252, %v3250
  %v3303 = vpack.c.b16 %v3253, %v3251
  %v3304 = vpack.c.b16 %v3256, %v3254
  %v3305 = vpack.c.b16 %v3257, %v3255
  %v3306 = vpack.c.b16 %v3260, %v3258
  %v3307 = vpack.c.b16 %v3261, %v3259
  %v3308 = vpack.c.b16 %v3264, %v3262
  %v3309 = vpack.c.b16 %v3265, %v3263
  %v3310 = vpack.c.b16 %v3268, %v3266
  %v3311 = vpack.c.b16 %v3269, %v3267
  %v3312 = vpack.c.b16 %v3272, %v3270
  %v3313 = vpack.c.b16 %v3273, %v3271
  %v3314 = vpack.c.b16 %v3276, %v3274
  %v3315 = vpack.c.b16 %v3277, %v3275
  %v3316 = vpack.c.b16 %v3280, %v3278
  %v3317 = vpack.c.b16 %v3281, %v3279
  %v3318 = vpack.c.b16 %v3284, %v3282
  %v3319 = vpack.c.b16 %v3285, %v3283
  %v3320 = vpack.c.b16 %v3288, %v3286
  %v3321 = vpack.c.b16 %v3289, %v3287
  %v3322 = vpack.c.b16 %v3290, %v3290
  %v3323 = vpack.c.b16 %v3291, %v3291
  %vm3354 = vcmask 941056
  %v3356 = vsel %vm3354, %v3155, 0
  %v3359 = vand.u32 %v3322, %v1518
  %v3362 = vand.u32 %v3323, %v1518
  %3364 = vmatprep.subr.bf16.mxu0 %v3293
  %3365 = vmatpush1.bf16.msra.mxu0 %v3292
  %3366 = vmatprep.subr.bf16.mxu0 %v3295
  %3367 = vmatpush1.bf16.msra.mxu0 %v3294
  %3368 = vmatprep.subr.bf16.mxu0 %v3297
  %3369 = vmatpush1.bf16.msra.mxu0 %v3296
  %3370 = vmatprep.subr.bf16.mxu0 %v3299
  %3371 = vmatpush1.bf16.msra.mxu0 %v3298
  %3372 = vmatprep.subr.bf16.mxu0 %v3301
  %3373 = vmatpush1.bf16.msra.mxu0 %v3300
  %3374 = vmatprep.subr.bf16.mxu0 %v3303
  %3375 = vmatpush1.bf16.msra.mxu0 %v3302
  %3376 = vmatprep.subr.bf16.mxu0 %v3305
  %3377 = vmatpush1.bf16.msra.mxu0 %v3304
  %3378 = vmatprep.subr.bf16.mxu0 %v3307
  %3379 = vmatpush1.bf16.msra.mxu0 %v3306
  %3380 = vmatprep.subr.bf16.mxu0 %v3309
  %3381 = vmatpush1.bf16.msra.mxu0 %v3308
  %3382 = vmatprep.subr.bf16.mxu0 %v3311
  %3383 = vmatpush1.bf16.msra.mxu0 %v3310
  %3384 = vmatprep.subr.bf16.mxu0 %v3313
  %3385 = vmatpush1.bf16.msra.mxu0 %v3312
  %3386 = vmatprep.subr.bf16.mxu0 %v3315
  %3387 = vmatpush1.bf16.msra.mxu0 %v3314
  %3388 = vmatprep.subr.bf16.mxu0 %v3317
  %3389 = vmatpush1.bf16.msra.mxu0 %v3316
  %3390 = vmatprep.subr.bf16.mxu0 %v3319
  %3391 = vmatpush1.bf16.msra.mxu0 %v3318
  %3392 = vmatprep.subr.bf16.mxu0 %v3321
  %3393 = vmatpush1.bf16.msra.mxu0 %v3320
  %3394 = vmatprep.subr.bf16.mxu0 %v3362
  %3395 = vmatpush1.bf16.msra.mxu0 %v3359
  %3396 = vmatprep.mubr.bf16.mxu0 %v3356
  %3397 = vmatmul.mubr.bf16.gmra.mrb[0].mxu0 %v3154
  %v3398 = vpop.f32.mrb[0].mxu0
  %v3399 = vadd.f32 %v3192, %v3398
  %v3400 = vpop.f32.mrb[0].mxu0
  %v3401 = vadd.f32 %v3196, %v3400
  %v3402 = vpop.f32.mrb[0].mxu0
  %v3403 = vadd.f32 %v3192, %v3402
  %v3404 = vpop.f32.mrb[0].mxu0
  %v3405 = vadd.f32 %v3196, %v3404
  %3406 = vdwg.mxu0
  %v3407 = vmin.f32 %v3399, 20.0
  %v3408 = vmin.f32 %v3401, 20.0
  %v3409 = vmin.f32 %v3403, 20.0
  %v3410 = vmin.f32 %v3405, 20.0
  %v3411 = vmul.f32 %v3407, 1.442695
  %v3412 = vpow.pop %v3411
  %v3413 = vmul.f32 %v3408, 1.442695
  %v3414 = vpow.pop %v3413
  %v3415 = vmul.f32 %v3409, 1.442695
  %v3416 = vpow.pop %v3415
  %v3417 = vmul.f32 %v3410, 1.442695
  %v3418 = vpow.pop %v3417
  %v3419 = vadd.f32 %v3412, 2.0
  %v3420 = vadd.f32 %v3414, 2.0
  %v3421 = vadd.f32 %v3416, 2.0
  %v3422 = vadd.f32 %v3418, 2.0
  %v3423 = vmul.f32 %v3412, %v3419
  %v3424 = vmul.f32 %v3414, %v3420
  %v3425 = vmul.f32 %v3416, %v3421
  %v3426 = vmul.f32 %v3418, %v3422
  %v3427 = vadd.f32 %v3423, 2.0
  %v3428 = vadd.f32 %v3424, 2.0
  %v3429 = vadd.f32 %v3425, 2.0
  %v3430 = vadd.f32 %v3426, 2.0
  %v3431 = vrcp.pop %v3427
  %v3432 = vrcp.pop %v3428
  %v3433 = vrcp.pop %v3429
  %v3434 = vrcp.pop %v3430
  %v3435 = vmul.f32 %v3423, %v3431
  %v3436 = vmul.f32 %v3424, %v3432
  %v3437 = vmul.f32 %v3425, %v3433
  %v3438 = vmul.f32 %v3426, %v3434
  %vm3439 = vcmp.gt.f32.partialorder %v3399, 20.0
  %vm3440 = vcmp.gt.f32.partialorder %v3401, 20.0
  %vm3441 = vcmp.gt.f32.partialorder %v3403, 20.0
  %vm3442 = vcmp.gt.f32.partialorder %v3405, 20.0
  %v3443 = vmul.f32 %v3399, %v3435
  %v3444 = vmul.f32 %v3401, %v3436
  %v3445 = vmul.f32 %v3403, %v3437
  %v3446 = vmul.f32 %v3405, %v3438
  %v3447 = vsel %vm3439, %v3399, %v3443
  %v3448 = vsel %vm3440, %v3401, %v3444
  %v3449 = vsel %vm3441, %v3403, %v3445
  %v3450 = vsel %vm3442, %v3405, %v3446
  %v3451 = vpack.c.bf16 %v3449, %v3447
  %v3452 = vpack.c.bf16 %v3450, %v3448
  %v3453 = vld [vmem:[%s67] sm:$0xf]
  %v3454 = vld [vmem:[%s67 + $0x4] sm:$0xf]
  %v3455 = vld [vmem:[%s67 + $0x8] sm:$0xf]
  %v3456 = vld [vmem:[%s67 + $0xc] sm:$0xf]
  %v3457 = vld [vmem:[%s67 + $0x10] sm:$0xf]
  %v3458 = vld [vmem:[%s67 + $0x14] sm:$0xf]
  %v3459 = vld [vmem:[%s67 + $0x18] sm:$0xf]
  %v3460 = vld [vmem:[%s67 + $0x1c] sm:$0xf]
  %v3461 = vld [vmem:[%s67 + $0x20] sm:$0xf]
  %v3462 = vld [vmem:[%s67 + $0x24] sm:$0xf]
  %v3463 = vld [vmem:[%s67 + $0x28] sm:$0xf]
  %v3464 = vld [vmem:[%s67 + $0x2c] sm:$0xf]
  %v3465 = vld [vmem:[%s67 + $0x30] sm:$0xf]
  %v3466 = vld [vmem:[%s67 + $0x34] sm:$0xf]
  %v3467 = vld [vmem:[%s67 + $0x38] sm:$0xf]
  %v3468 = vld [vmem:[%s67 + $0x3c] sm:$0xf]
  %v3469 = vld [vmem:[%s67 + $0x40] sm:$0x7]
  %v3470 = vld [vmem:[%s69] sm:$0x1]
  %v3472 = vlaneseq
  %v3473 = vshrl.u32 %v3472, 7
  %v3474 = vsub.s32 0, %v3473
  %v3475 = vrot.slane %v3470, %v3474
  %v3494 = vunpack.c.l.b16 %v3453
  %v3495 = vunpack.c.l.b16 %v3454
  %v3496 = vunpack.c.l.b16 %v3455
  %v3497 = vunpack.c.l.b16 %v3456
  %v3498 = vunpack.c.l.b16 %v3457
  %v3499 = vunpack.c.l.b16 %v3458
  %v3500 = vunpack.c.l.b16 %v3459
  %v3501 = vunpack.c.l.b16 %v3460
  %v3502 = vunpack.c.l.b16 %v3461
  %v3503 = vunpack.c.l.b16 %v3462
  %v3504 = vunpack.c.l.b16 %v3463
  %v3505 = vunpack.c.l.b16 %v3464
  %v3506 = vunpack.c.l.b16 %v3465
  %v3507 = vunpack.c.l.b16 %v3466
  %v3508 = vunpack.c.l.b16 %v3467
  %v3509 = vunpack.c.l.b16 %v3468
  %v3510 = vunpack.c.l.b16 %v3469
  %v3511 = vpack.c.b16 %v3495, %v3494
  %v3512 = vpack.c.b16 %v3497, %v3496
  %v3513 = vpack.c.b16 %v3499, %v3498
  %v3514 = vpack.c.b16 %v3501, %v3500
  %v3515 = vpack.c.b16 %v3503, %v3502
  %v3516 = vpack.c.b16 %v3505, %v3504
  %v3517 = vpack.c.b16 %v3507, %v3506
  %v3518 = vpack.c.b16 %v3509, %v3508
  %v3519 = vpack.c.b16 %v3510, %v3510
  %vm3528 = vcmask 48128
  %v3530 = vsel %vm3528, %v3452, 0
  %v3533 = vsel %vm1347, %v3519, 0
  %3535 = vmatprep.subr.bf16.mxu0 0
  %3536 = vmatpush1.bf16.msra.mxu0 %v3511
  %3537 = vmatprep.subr.bf16.mxu0 0
  %3538 = vmatpush1.bf16.msra.mxu0 %v3512
  %3539 = vmatprep.subr.bf16.mxu0 0
  %3540 = vmatpush1.bf16.msra.mxu0 %v3513
  %3541 = vmatprep.subr.bf16.mxu0 0
  %3542 = vmatpush1.bf16.msra.mxu0 %v3514
  %3543 = vmatprep.subr.bf16.mxu0 0
  %3544 = vmatpush1.bf16.msra.mxu0 %v3515
  %3545 = vmatprep.subr.bf16.mxu0 0
  %3546 = vmatpush1.bf16.msra.mxu0 %v3516
  %3547 = vmatprep.subr.bf16.mxu0 0
  %3548 = vmatpush1.bf16.msra.mxu0 %v3517
  %3549 = vmatprep.subr.bf16.mxu0 0
  %3550 = vmatpush1.bf16.msra.mxu0 %v3518
  %3551 = vmatprep.subr.bf16.mxu0 0
  %3552 = vmatpush1.bf16.msra.mxu0 %v3533
  %3553 = vmatprep.subr.bf16.mxu0 0
  %3554 = vmatpush1.bf16.msra.mxu0 0
  %3555 = vmatprep.subr.bf16.mxu0 0
  %3556 = vmatpush1.bf16.msra.mxu0 0
  %3557 = vmatprep.subr.bf16.mxu0 0
  %3558 = vmatpush1.bf16.msra.mxu0 0
  %3559 = vmatprep.subr.bf16.mxu0 0
  %3560 = vmatpush1.bf16.msra.mxu0 0
  %3561 = vmatprep.subr.bf16.mxu0 0
  %3562 = vmatpush1.bf16.msra.mxu0 0
  %3563 = vmatprep.subr.bf16.mxu0 0
  %3564 = vmatpush1.bf16.msra.mxu0 0
  %3565 = vmatprep.subr.bf16.mxu0 0
  %3566 = vmatpush1.bf16.msra.mxu0 0
  %3567 = vmatprep.mubr.bf16.mxu0 %v3530
  %3568 = vmatmul.mubr.bf16.gmra.mrb[0].mxu0 %v3451
  %v3569 = vpop.f32.mrb[0].mxu0
  %v3570 = vadd.f32 %v3475, %v3569
  %v3571 = vpop.f32.mrb[0].mxu0
  %v3572 = vpop.f32.mrb[0].mxu0
  %v3573 = vadd.f32 %v3475, %v3572
  %v3574 = vpop.f32.mrb[0].mxu0
  %3575 = vdwg.mxu0
  %v3576 = vmin.f32 %v3570, 20.0
  %v3577 = vmin.f32 %v3573, 20.0
  %v3578 = vmul.f32 %v3576, 1.442695
  %v3579 = vpow.pop %v3578
  %v3580 = vmul.f32 %v3577, 1.442695
  %v3581 = vpow.pop %v3580
  %v3582 = vadd.f32 %v3579, 2.0
  %v3583 = vadd.f32 %v3581, 2.0
  %v3584 = vmul.f32 %v3579, %v3582
  %v3585 = vmul.f32 %v3581, %v3583
  %v3586 = vadd.f32 %v3584, 2.0
  %v3587 = vadd.f32 %v3585, 2.0
  %v3588 = vrcp.pop %v3586
  %v3589 = vrcp.pop %v3587
  %v3590 = vmul.f32 %v3584, %v3588
  %v3591 = vmul.f32 %v3585, %v3589
  %vm3592 = vcmp.gt.f32.partialorder %v3570, 20.0
  %vm3593 = vcmp.gt.f32.partialorder %v3573, 20.0
  %v3594 = vmul.f32 %v3570, %v3590
  %v3595 = vmul.f32 %v3573, %v3591
  %v3596 = vsel %vm3592, %v3570, %v3594
  %v3597 = vsel %vm3593, %v3573, %v3595
  %v3598 = vpack.c.bf16 %v3597, %v3596
  %v3599 = vld [vmem:[%s71] sm:$0xf]
  %v3600 = vld [vmem:[%s71 + $0x4] sm:$0xf]
  %v3601 = vld [vmem:[%s71 + $0x8] sm:$0xf]
  %v3602 = vld [vmem:[%s71 + $0xc] sm:$0xf]
  %v3603 = vld [vmem:[%s71 + $0x10] sm:$0xf]
  %v3604 = vld [vmem:[%s71 + $0x14] sm:$0xf]
  %v3605 = vld [vmem:[%s71 + $0x18] sm:$0xf]
  %v3606 = vld [vmem:[%s71 + $0x1c] sm:$0x1]
  %v3607 = vld [vmem:[%s73] sm:$0x1]
  %v3609 = vlaneseq
  %v3610 = vshrl.u32 %v3609, 7
  %v3611 = vsub.s32 0, %v3610
  %v3612 = vrot.slane %v3607, %v3611
  %v3622 = vunpack.c.l.b16 %v3599
  %v3623 = vunpack.c.l.b16 %v3600
  %v3624 = vunpack.c.l.b16 %v3601
  %v3625 = vunpack.c.l.b16 %v3602
  %v3626 = vunpack.c.l.b16 %v3603
  %v3627 = vunpack.c.l.b16 %v3604
  %v3628 = vunpack.c.l.b16 %v3605
  %v3629 = vunpack.c.l.b16 %v3606
  %v3630 = vpack.c.b16 %v3623, %v3622
  %v3631 = vpack.c.b16 %v3625, %v3624
  %v3632 = vpack.c.b16 %v3627, %v3626
  %v3633 = vpack.c.b16 %v3629, %v3628
  %vm3637 = vcmask 465920
  %v3639 = vsel %vm3637, %v3598, 0
  %v3641 = vsel %vm703, 4294967295, 65535
  %v3642 = vsel %vm1659, %v3641, 0
  %v3644 = vand.u32 %v3633, %v3642
  %3646 = vmatprep.subr.bf16.mxu0 0
  %3647 = vmatpush1.bf16.msra.mxu0 %v3630
  %3648 = vmatprep.subr.bf16.mxu0 0
  %3649 = vmatpush1.bf16.msra.mxu0 %v3631
  %3650 = vmatprep.subr.bf16.mxu0 0
  %3651 = vmatpush1.bf16.msra.mxu0 %v3632
  %3652 = vmatprep.subr.bf16.mxu0 0
  %3653 = vmatpush1.bf16.msra.mxu0 %v3644
  %3654 = vmatprep.subr.bf16.mxu0 0
  %3655 = vmatpush1.bf16.msra.mxu0 0
  %3656 = vmatprep.subr.bf16.mxu0 0
  %3657 = vmatpush1.bf16.msra.mxu0 0
  %3658 = vmatprep.subr.bf16.mxu0 0
  %3659 = vmatpush1.bf16.msra.mxu0 0
  %3660 = vmatprep.subr.bf16.mxu0 0
  %3661 = vmatpush1.bf16.msra.mxu0 0
  %3662 = vmatprep.subr.bf16.mxu0 0
  %3663 = vmatpush1.bf16.msra.mxu0 0
  %3664 = vmatprep.subr.bf16.mxu0 0
  %3665 = vmatpush1.bf16.msra.mxu0 0
  %3666 = vmatprep.subr.bf16.mxu0 0
  %3667 = vmatpush1.bf16.msra.mxu0 0
  %3668 = vmatprep.subr.bf16.mxu0 0
  %3669 = vmatpush1.bf16.msra.mxu0 0
  %3670 = vmatprep.subr.bf16.mxu0 0
  %3671 = vmatpush1.bf16.msra.mxu0 0
  %3672 = vmatprep.subr.bf16.mxu0 0
  %3673 = vmatpush1.bf16.msra.mxu0 0
  %3674 = vmatprep.subr.bf16.mxu0 0
  %3675 = vmatpush1.bf16.msra.mxu0 0
  %3676 = vmatprep.subr.bf16.mxu0 0
  %3677 = vmatpush1.bf16.msra.mxu0 0
  %3678 = vmatprep.mubr.bf16.mxu0 0
  %3679 = vmatmul.mubr.bf16.gmra.mrb[0].mxu0 %v3639
  %v3680 = vpop.f32.mrb[0].mxu0
  %v3681 = vadd.f32 %v3612, %v3680
  %v3682 = vpop.f32.mrb[0].mxu0
  %v3683 = vpop.f32.mrb[0].mxu0
  %v3684 = vadd.f32 %v3612, %v3683
  %v3685 = vpop.f32.mrb[0].mxu0
  %3686 = vdwg.mxu0
  %v3687 = vmin.f32 %v3681, 20.0
  %v3688 = vmin.f32 %v3684, 20.0
  %v3689 = vmul.f32 %v3687, 1.442695
  %v3690 = vpow.pop %v3689
  %v3691 = vmul.f32 %v3688, 1.442695
  %v3692 = vpow.pop %v3691
  %v3693 = vadd.f32 %v3690, 2.0
  %v3694 = vadd.f32 %v3692, 2.0
  %v3695 = vmul.f32 %v3690, %v3693
  %v3696 = vmul.f32 %v3692, %v3694
  %v3697 = vadd.f32 %v3695, 2.0
  %v3698 = vadd.f32 %v3696, 2.0
  %v3699 = vrcp.pop %v3697
  %v3700 = vrcp.pop %v3698
  %v3701 = vmul.f32 %v3695, %v3699
  %v3702 = vmul.f32 %v3696, %v3700
  %vm3703 = vcmp.gt.f32.partialorder %v3681, 20.0
  %vm3704 = vcmp.gt.f32.partialorder %v3684, 20.0
  %v3705 = vmul.f32 %v3681, %v3701
  %v3706 = vmul.f32 %v3684, %v3702
  %v3707 = vsel %vm3703, %v3681, %v3705
  %v3708 = vsel %vm3704, %v3684, %v3706
  %v3709 = vld [vmem:[%s11] sm:$0xff]
  %v3710 = vld [vmem:[%s11 + $0x8] sm:$0xff]
  %v3711 = vld [vmem:[%s13] sm:$0xff]
  %v3712 = vld [vmem:[%s13 + $0x8] sm:$0xff]
  %v3713 = vmin.f32 %v3150, 20.0
  %v3714 = vmin.f32 %v3152, 20.0
  %v3715 = vmul.f32 %v3713, 1.442695
  %v3716 = vpow.pop %v3715
  %v3717 = vmul.f32 %v3714, 1.442695
  %v3718 = vpow.pop %v3717
  %v3719 = vadd.f32 %v3716, 2.0
  %v3720 = vadd.f32 %v3718, 2.0
  %v3721 = vmul.f32 %v3716, %v3719
  %v3722 = vmul.f32 %v3718, %v3720
  %v3723 = vadd.f32 %v3721, 2.0
  %v3724 = vadd.f32 %v3722, 2.0
  %v3725 = vrcp.pop %v3723
  %v3726 = vrcp.pop %v3724
  %v3727 = vmul.f32 %v3721, %v3725
  %v3728 = vmul.f32 %v3722, %v3726
  %vm3729 = vcmp.gt.f32.partialorder %v3150, 20.0
  %vm3730 = vcmp.gt.f32.partialorder %v3152, 20.0
  %v3731 = vmul.f32 %v3150, %v3727
  %v3732 = vmul.f32 %v3152, %v3728
  %v3733 = vsel %vm3729, %v3150, %v3731
  %v3734 = vsel %vm3730, %v3152, %v3732
  %3736 = vset.pattern.permute.xlu0 0
  %3737 = vperm.xlu0 %3736, %v3709
  %v3738 = vpop.permute.xlu0 %3737
  %3741 = vset.pattern.permute.xlu0 0
  %3742 = vperm.xlu0 %3741, %v3710
  %v3743 = vpop.permute.xlu0 %3742
  %v3745 = vmul.f32 %v3738, %v3733
  %v3746 = vmul.f32 %v3743, %v3734
  %3748 = vset.pattern.permute.xlu0 0
  %3749 = vperm.xlu0 %3748, %v3711
  %v3750 = vpop.permute.xlu0 %3749
  %3753 = vset.pattern.permute.xlu0 0
  %3754 = vperm.xlu0 %3753, %v3712
  %v3755 = vpop.permute.xlu0 %3754
  %v3757 = vadd.f32 %v3745, %v3750
  %v3758 = vadd.f32 %v3746, %v3755
  %v3759 = vpack.c.bf16 %v3758, %v3757
  %v3760 = vmin.f32 %v3447, 20.0
  %v3761 = vmin.f32 %v3449, 20.0
  %v3762 = vmul.f32 %v3760, 1.442695
  %v3763 = vpow.pop %v3762
  %v3764 = vmul.f32 %v3761, 1.442695
  %v3765 = vpow.pop %v3764
  %v3766 = vadd.f32 %v3763, 2.0
  %v3767 = vadd.f32 %v3765, 2.0
  %v3768 = vmul.f32 %v3763, %v3766
  %v3769 = vmul.f32 %v3765, %v3767
  %v3770 = vadd.f32 %v3768, 2.0
  %v3771 = vadd.f32 %v3769, 2.0
  %v3772 = vrcp.pop %v3770
  %v3773 = vrcp.pop %v3771
  %v3774 = vmul.f32 %v3768, %v3772
  %v3775 = vmul.f32 %v3769, %v3773
  %vm3776 = vcmp.gt.f32.partialorder %v3447, 20.0
  %vm3777 = vcmp.gt.f32.partialorder %v3449, 20.0
  %v3778 = vmul.f32 %v3447, %v3774
  %v3779 = vmul.f32 %v3449, %v3775
  %v3780 = vsel %vm3776, %v3447, %v3778
  %v3781 = vsel %vm3777, %v3449, %v3779
  %v3782 = vmul.f32 %v3738, %v3780
  %v3783 = vmul.f32 %v3743, %v3781
  %v3784 = vadd.f32 %v3782, %v3750
  %v3785 = vadd.f32 %v3783, %v3755
  %v3786 = vpack.c.bf16 %v3785, %v3784
  %v3787 = vmin.f32 %v3596, 20.0
  %v3788 = vmin.f32 %v3597, 20.0
  %v3789 = vmul.f32 %v3787, 1.442695
  %v3790 = vpow.pop %v3789
  %v3791 = vmul.f32 %v3788, 1.442695
  %v3792 = vpow.pop %v3791
  %v3793 = vadd.f32 %v3790, 2.0
  %v3794 = vadd.f32 %v3792, 2.0
  %v3795 = vmul.f32 %v3790, %v3793
  %v3796 = vmul.f32 %v3792, %v3794
  %v3797 = vadd.f32 %v3795, 2.0
  %v3798 = vadd.f32 %v3796, 2.0
  %v3799 = vrcp.pop %v3797
  %v3800 = vrcp.pop %v3798
  %v3801 = vmul.f32 %v3795, %v3799
  %v3802 = vmul.f32 %v3796, %v3800
  %vm3803 = vcmp.gt.f32.partialorder %v3596, 20.0
  %vm3804 = vcmp.gt.f32.partialorder %v3597, 20.0
  %v3805 = vmul.f32 %v3596, %v3801
  %v3806 = vmul.f32 %v3597, %v3802
  %v3807 = vsel %vm3803, %v3596, %v3805
  %v3808 = vsel %vm3804, %v3597, %v3806
  %v3809 = vmul.f32 %v3738, %v3807
  %v3810 = vmul.f32 %v3743, %v3808
  %v3811 = vadd.f32 %v3809, %v3750
  %v3812 = vadd.f32 %v3810, %v3755
  %v3813 = vpack.c.bf16 %v3812, %v3811
  %v3814 = vmin.f32 %v3707, 20.0
  %v3815 = vmin.f32 %v3708, 20.0
  %v3816 = vmul.f32 %v3814, 1.442695
  %v3817 = vpow.pop %v3816
  %v3818 = vmul.f32 %v3815, 1.442695
  %v3819 = vpow.pop %v3818
  %v3820 = vadd.f32 %v3817, 2.0
  %v3821 = vadd.f32 %v3819, 2.0
  %v3822 = vmul.f32 %v3817, %v3820
  %v3823 = vmul.f32 %v3819, %v3821
  %v3824 = vadd.f32 %v3822, 2.0
  %v3825 = vadd.f32 %v3823, 2.0
  %v3826 = vrcp.pop %v3824
  %v3827 = vrcp.pop %v3825
  %v3828 = vmul.f32 %v3822, %v3826
  %v3829 = vmul.f32 %v3823, %v3827
  %vm3830 = vcmp.gt.f32.partialorder %v3707, 20.0
  %vm3831 = vcmp.gt.f32.partialorder %v3708, 20.0
  %v3832 = vmul.f32 %v3707, %v3828
  %v3833 = vmul.f32 %v3708, %v3829
  %v3834 = vsel %vm3830, %v3707, %v3832
  %v3835 = vsel %vm3831, %v3708, %v3833
  %v3836 = vmul.f32 %v3738, %v3834
  %v3837 = vmul.f32 %v3743, %v3835
  %v3838 = vadd.f32 %v3836, %v3750
  %v3839 = vadd.f32 %v3837, %v3755
  %v3840 = vpack.c.bf16 %v3839, %v3838
  %v3841 = vld [vmem:[%s75] sm:$0xf]
  %v3842 = vld [vmem:[%s75 + $0x4] sm:$0xf]
  %v3843 = vld [vmem:[%s75 + $0x8] sm:$0xf]
  %v3844 = vld [vmem:[%s75 + $0xc] sm:$0xf]
  %v3845 = vld [vmem:[%s75 + $0x10] sm:$0xf]
  %v3846 = vld [vmem:[%s75 + $0x14] sm:$0xf]
  %v3847 = vld [vmem:[%s75 + $0x18] sm:$0x3]
  %v3848 = vld [vmem:[%s77] sm:$0xf]
  %v3849 = vld [vmem:[%s77 + $0x4] sm:$0xf]
  %v3850 = vld [vmem:[%s77 + $0x8] sm:$0xf]
  %v3851 = vld [vmem:[%s77 + $0xc] sm:$0xf]
  %v3852 = vld [vmem:[%s77 + $0x10] sm:$0x7]
  %v3858 = vunpack.c.l.b16 %v3848
  %v3859 = vunpack.c.l.b16 %v3849
  %v3860 = vunpack.c.l.b16 %v3850
  %v3861 = vunpack.c.l.b16 %v3851
  %v3862 = vunpack.c.l.b16 %v3852
  %v3863 = vpack.c.b16 %v3859, %v3858
  %v3864 = vpack.c.b16 %v3861, %v3860
  %v3865 = vpack.c.b16 %v3862, %v3862
  %vm3868 = vcmask 310272
  %v3870 = vsel %vm3868, %v3786, 0
  %v3873 = vsel %vm1347, %v3865, 0
  %3875 = vmatprep.subr.bf16.mxu0 0
  %3876 = vmatpush1.bf16.msra.mxu0 %v3863
  %3877 = vmatprep.subr.bf16.mxu0 0
  %3878 = vmatpush1.bf16.msra.mxu0 %v3864
  %3879 = vmatprep.subr.bf16.mxu0 0
  %3880 = vmatpush1.bf16.msra.mxu0 %v3873
  %3881 = vmatprep.subr.bf16.mxu0 0
  %3882 = vmatpush1.bf16.msra.mxu0 0
  %3883 = vmatprep.subr.bf16.mxu0 0
  %3884 = vmatpush1.bf16.msra.mxu0 0
  %3885 = vmatprep.subr.bf16.mxu0 0
  %3886 = vmatpush1.bf16.msra.mxu0 0
  %3887 = vmatprep.subr.bf16.mxu0 0
  %3888 = vmatpush1.bf16.msra.mxu0 0
  %3889 = vmatprep.subr.bf16.mxu0 0
  %3890 = vmatpush1.bf16.msra.mxu0 0
  %3891 = vmatprep.subr.bf16.mxu0 0
  %3892 = vmatpush1.bf16.msra.mxu0 0
  %3893 = vmatprep.subr.bf16.mxu0 0
  %3894 = vmatpush1.bf16.msra.mxu0 0
  %3895 = vmatprep.subr.bf16.mxu0 0
  %3896 = vmatpush1.bf16.msra.mxu0 0
  %3897 = vmatprep.subr.bf16.mxu0 0
  %3898 = vmatpush1.bf16.msra.mxu0 0
  %3899 = vmatprep.subr.bf16.mxu0 0
  %3900 = vmatpush1.bf16.msra.mxu0 0
  %3901 = vmatprep.subr.bf16.mxu0 0
  %3902 = vmatpush1.bf16.msra.mxu0 0
  %3903 = vmatprep.subr.bf16.mxu0 0
  %3904 = vmatpush1.bf16.msra.mxu0 0
  %3905 = vmatprep.subr.bf16.mxu0 0
  %3906 = vmatpush1.bf16.msra.mxu0 0
  %3907 = vmatprep.mubr.bf16.mxu0 0
  %3908 = vmatmul.mubr.bf16.gmra.mrb[0].mxu0 %v3870
  %v3909 = vpop.f32.mrb[0].mxu0
  %v3910 = vadd.f32 0.0, %v3909
  %v3911 = vpop.f32.mrb[0].mxu0
  %v3912 = vpop.f32.mrb[0].mxu0
  %v3913 = vadd.f32 0.0, %v3912
  %v3914 = vpop.f32.mrb[0].mxu0
  %3915 = vdwg.mxu0
  %v3923 = vunpack.c.l.b16 %v3841
  %v3924 = vunpack.c.l.b16 %v3842
  %v3925 = vunpack.c.l.b16 %v3843
  %v3926 = vunpack.c.l.b16 %v3844
  %v3927 = vunpack.c.l.b16 %v3845
  %v3928 = vunpack.c.l.b16 %v3846
  %v3929 = vunpack.c.l.b16 %v3847
  %v3930 = vpack.c.b16 %v3924, %v3923
  %v3931 = vpack.c.b16 %v3926, %v3925
  %v3932 = vpack.c.b16 %v3928, %v3927
  %v3933 = vpack.c.b16 %v3929, %v3929
  %v3938 = vsel %vm1511, %v3759, 0
  %v3941 = vand.u32 %v3933, %v1518
  %3943 = vmatprep.subr.bf16.mxu0 0
  %3944 = vmatpush1.bf16.msra.mxu0 %v3930
  %3945 = vmatprep.subr.bf16.mxu0 0
  %3946 = vmatpush1.bf16.msra.mxu0 %v3931
  %3947 = vmatprep.subr.bf16.mxu0 0
  %3948 = vmatpush1.bf16.msra.mxu0 %v3932
  %3949 = vmatprep.subr.bf16.mxu0 0
  %3950 = vmatpush1.bf16.msra.mxu0 %v3941
  %3951 = vmatprep.subr.bf16.mxu0 0
  %3952 = vmatpush1.bf16.msra.mxu0 0
  %3953 = vmatprep.subr.bf16.mxu0 0
  %3954 = vmatpush1.bf16.msra.mxu0 0
  %3955 = vmatprep.subr.bf16.mxu0 0
  %3956 = vmatpush1.bf16.msra.mxu0 0
  %3957 = vmatprep.subr.bf16.mxu0 0
  %3958 = vmatpush1.bf16.msra.mxu0 0
  %3959 = vmatprep.subr.bf16.mxu0 0
  %3960 = vmatpush1.bf16.msra.mxu0 0
  %3961 = vmatprep.subr.bf16.mxu0 0
  %3962 = vmatpush1.bf16.msra.mxu0 0
  %3963 = vmatprep.subr.bf16.mxu0 0
  %3964 = vmatpush1.bf16.msra.mxu0 0
  %3965 = vmatprep.subr.bf16.mxu0 0
  %3966 = vmatpush1.bf16.msra.mxu0 0
  %3967 = vmatprep.subr.bf16.mxu0 0
  %3968 = vmatpush1.bf16.msra.mxu0 0
  %3969 = vmatprep.subr.bf16.mxu0 0
  %3970 = vmatpush1.bf16.msra.mxu0 0
  %3971 = vmatprep.subr.bf16.mxu0 0
  %3972 = vmatpush1.bf16.msra.mxu0 0
  %3973 = vmatprep.subr.bf16.mxu0 0
  %3974 = vmatpush1.bf16.msra.mxu0 0
  %3975 = vmatprep.mubr.bf16.mxu0 0
  %3976 = vmatmul.mubr.bf16.gmra.mrb[0].mxu0 %v3938
  %v3977 = vpop.f32.mrb[0].mxu0
  %v3978 = vadd.f32 %v3910, %v3977
  %v3979 = vpop.f32.mrb[0].mxu0
  %v3980 = vpop.f32.mrb[0].mxu0
  %v3981 = vadd.f32 %v3913, %v3980
  %v3982 = vpop.f32.mrb[0].mxu0
  %3983 = vdwg.mxu0
  %v3984 = vld [vmem:[%s79] sm:$0xf]
  %v3985 = vld [vmem:[%s79 + $0x4] sm:$0xf]
  %v3986 = vld [vmem:[%s79 + $0x8] sm:$0xf]
  %v3987 = vld [vmem:[%s79 + $0xc] sm:$0x1]
  %v3992 = vunpack.c.l.b16 %v3984
  %v3993 = vunpack.c.l.b16 %v3985
  %v3994 = vunpack.c.l.b16 %v3986
  %v3995 = vunpack.c.l.b16 %v3987
  %v3996 = vpack.c.b16 %v3993, %v3992
  %v3997 = vpack.c.b16 %v3995, %v3994
  %vm3999 = vcmask 203776
  %v4001 = vsel %vm3999, %v3813, 0
  %v4004 = vand.u32 %v3997, %v3642
  %4006 = vmatprep.subr.bf16.mxu0 0
  %4007 = vmatpush1.bf16.msra.mxu0 %v3996
  %4008 = vmatprep.subr.bf16.mxu0 0
  %4009 = vmatpush1.bf16.msra.mxu0 %v4004
  %4010 = vmatprep.subr.bf16.mxu0 0
  %4011 = vmatpush1.bf16.msra.mxu0 0
  %4012 = vmatprep.subr.bf16.mxu0 0
  %4013 = vmatpush1.bf16.msra.mxu0 0
  %4014 = vmatprep.subr.bf16.mxu0 0
  %4015 = vmatpush1.bf16.msra.mxu0 0
  %4016 = vmatprep.subr.bf16.mxu0 0
  %4017 = vmatpush1.bf16.msra.mxu0 0
  %4018 = vmatprep.subr.bf16.mxu0 0
  %4019 = vmatpush1.bf16.msra.mxu0 0
  %4020 = vmatprep.subr.bf16.mxu0 0
  %4021 = vmatpush1.bf16.msra.mxu0 0
  %4022 = vmatprep.subr.bf16.mxu0 0
  %4023 = vmatpush1.bf16.msra.mxu0 0
  %4024 = vmatprep.subr.bf16.mxu0 0
  %4025 = vmatpush1.bf16.msra.mxu0 0
  %4026 = vmatprep.subr.bf16.mxu0 0
  %4027 = vmatpush1.bf16.msra.mxu0 0
  %4028 = vmatprep.subr.bf16.mxu0 0
  %4029 = vmatpush1.bf16.msra.mxu0 0
  %4030 = vmatprep.subr.bf16.mxu0 0
  %4031 = vmatpush1.bf16.msra.mxu0 0
  %4032 = vmatprep.subr.bf16.mxu0 0
  %4033 = vmatpush1.bf16.msra.mxu0 0
  %4034 = vmatprep.subr.bf16.mxu0 0
  %4035 = vmatpush1.bf16.msra.mxu0 0
  %4036 = vmatprep.subr.bf16.mxu0 0
  %4037 = vmatpush1.bf16.msra.mxu0 0
  %4038 = vmatprep.mubr.bf16.mxu0 0
  %4039 = vmatmul.mubr.bf16.gmra.mrb[0].mxu0 %v4001
  %v4040 = vpop.f32.mrb[0].mxu0
  %v4041 = vadd.f32 0.0, %v4040
  %v4042 = vpop.f32.mrb[0].mxu0
  %v4043 = vpop.f32.mrb[0].mxu0
  %v4044 = vadd.f32 0.0, %v4043
  %v4045 = vpop.f32.mrb[0].mxu0
  %4046 = vdwg.mxu0
  %v4047 = vadd.f32 %v3978, %v4041
  %v4048 = vadd.f32 %v3981, %v4044
  %v4049 = vld [vmem:[%s81] sm:$0xf]
  %v4050 = vld [vmem:[%s81 + $0x4] sm:$0x7]
  %v4053 = vunpack.c.l.b16 %v4049
  %v4054 = vunpack.c.l.b16 %v4050
  %v4055 = vpack.c.b16 %v4054, %v4053
  %vm4056 = vcmask 113664
  %v4058 = vsel %vm4056, %v3840, 0
  %v4061 = vsel %vm517, %v4055, 0
  %4063 = vmatprep.subr.bf16.mxu0 0
  %4064 = vmatpush1.bf16.msra.mxu0 %v4061
  %4065 = vmatprep.subr.bf16.mxu0 0
  %4066 = vmatpush1.bf16.msra.mxu0 0
  %4067 = vmatprep.subr.bf16.mxu0 0
  %4068 = vmatpush1.bf16.msra.mxu0 0
  %4069 = vmatprep.subr.bf16.mxu0 0
  %4070 = vmatpush1.bf16.msra.mxu0 0
  %4071 = vmatprep.subr.bf16.mxu0 0
  %4072 = vmatpush1.bf16.msra.mxu0 0
  %4073 = vmatprep.subr.bf16.mxu0 0
  %4074 = vmatpush1.bf16.msra.mxu0 0
  %4075 = vmatprep.subr.bf16.mxu0 0
  %4076 = vmatpush1.bf16.msra.mxu0 0
  %4077 = vmatprep.subr.bf16.mxu0 0
  %4078 = vmatpush1.bf16.msra.mxu0 0
  %4079 = vmatprep.subr.bf16.mxu0 0
  %4080 = vmatpush1.bf16.msra.mxu0 0
  %4081 = vmatprep.subr.bf16.mxu0 0
  %4082 = vmatpush1.bf16.msra.mxu0 0
  %4083 = vmatprep.subr.bf16.mxu0 0
  %4084 = vmatpush1.bf16.msra.mxu0 0
  %4085 = vmatprep.subr.bf16.mxu0 0
  %4086 = vmatpush1.bf16.msra.mxu0 0
  %4087 = vmatprep.subr.bf16.mxu0 0
  %4088 = vmatpush1.bf16.msra.mxu0 0
  %4089 = vmatprep.subr.bf16.mxu0 0
  %4090 = vmatpush1.bf16.msra.mxu0 0
  %4091 = vmatprep.subr.bf16.mxu0 0
  %4092 = vmatpush1.bf16.msra.mxu0 0
  %4093 = vmatprep.subr.bf16.mxu0 0
  %4094 = vmatpush1.bf16.msra.mxu0 0
  %4095 = vmatprep.mubr.bf16.mxu0 0
  %4096 = vmatmul.mubr.bf16.gmra.mrb[0].mxu0 %v4058
  %v4097 = vpop.f32.mrb[0].mxu0
  %v4098 = vadd.f32 0.0, %v4097
  %v4099 = vpop.f32.mrb[0].mxu0
  %v4100 = vpop.f32.mrb[0].mxu0
  %v4101 = vadd.f32 0.0, %v4100
  %v4102 = vpop.f32.mrb[0].mxu0
  %4103 = vdwg.mxu0
  %v4104 = vadd.f32 %v4047, %v4098
  %v4105 = vadd.f32 %v4048, %v4101
  %v4106 = vld [vmem:[%s83] sm:$0x1]
  %v4108 = vlaneseq
  %v4109 = vshrl.u32 %v4108, 7
  %v4110 = vsub.s32 0, %v4109
  %v4111 = vrot.slane %v4106, %v4110
  %v4113 = vadd.f32 %v4104, %v4111
  %v4114 = vadd.f32 %v4105, %v4111
  %v4115 = vsub.f32 0.0, %v4113
  %v4116 = vsub.f32 0.0, %v4114
  %v4117 = vmin.f32 %v4115, 30.0
  %v4118 = vmin.f32 %v4116, 30.0
  %v4119 = vmul.f32 %v4117, 1.442695
  %v4120 = vpow.pop %v4119
  %v4121 = vmul.f32 %v4118, 1.442695
  %v4122 = vpow.pop %v4121
  %v4123 = vadd.f32 %v4120, 1.0
  %v4124 = vadd.f32 %v4122, 1.0
  %v4125 = vrcp.pop %v4123
  %v4126 = vrcp.pop %v4124
  %vm4127 = vcmask 31744
  %4128 = vst.msk [vmem:[%s85] sm:$0xff] %vm4127, %v4125
  %4129 = vst.msk [vmem:[%s85 + $0x8] sm:$0xff] %vm4127, %v4126
  // Predicated region
  $region170: #{tpu_custom_call.1} parent=0 // pred_check
    _
  $region171: #{tpu_custom_call.1} parent=0 // pred_check_branch
    %4131 = sbr.rel (0) target = $region173
  $region172: #{tpu_custom_call.1} parent=0 // pred_region
    _
  $region173: #{tpu_custom_call.1} parent=0 // pred_fallthru
    _
  // Predicated region
  $region174: #{tpu_custom_call.1} parent=0 // pred_check
    _
  $region175: #{tpu_custom_call.1} parent=0 // pred_check_branch
    %4133 = sbr.rel (0) target = $region177
  $region176: #{tpu_custom_call.1} parent=0 // pred_region
    _
  $region177: #{tpu_custom_call.1} parent=0 // pred_fallthru
    _

</llo_original>
